<compile_context>
chip_gen: v5e
topology: v5e:2x2
jax: 0.10.0
libtpu: 0.0.40
codegen_flags: <defaults>
</compile_context>

<pallas_src>
import functools

import numpy as np

import jax
import jax.numpy as jnp
from jax.experimental import pallas as pl
from jax.experimental.pallas import tpu as pltpu

fBase = 32
IMG_CHANS = 3          # dataSize = [3, 32, 32]
CPAD = 128             # trunk channel padding (lane width) == fBase * 4
TM_MAX = 256           # M-tile for the conv GEMMs


def _round_up(x, m):
    return (x + m - 1) // m * m


# ---------------------------------------------------------------------------
# Pallas kernels
# ---------------------------------------------------------------------------
def _gemm_bias_relu_kernel(x_ref, w_ref, b_ref, o_ref, *, relu):
    acc = jnp.dot(x_ref[...], w_ref[...], preferred_element_type=jnp.float32)
    acc = acc + b_ref[...]                       # f32 epilogue
    if relu:
        acc = jnp.maximum(acc, 0.0)
    o_ref[...] = acc.astype(o_ref.dtype)


def _head_kernel(x_ref, w1_ref, w2_ref, b1_ref, b2_ref, mu_ref, sm_ref, *,
                 scale, eta):
    # Fused c1 + c2 + softmax epilogue; x tile is loaded once and shared.
    x = x_ref[...]
    mu = jnp.dot(x, w1_ref[...], preferred_element_type=jnp.float32) + b1_ref[...]
    lv = jnp.dot(x, w2_ref[...], preferred_element_type=jnp.float32) + b2_ref[...]
    m = jnp.max(lv, axis=-1, keepdims=True)
    e = jnp.exp(lv - m)                          # EUP
    s = jnp.sum(e, axis=-1, keepdims=True)
    mu_ref[...] = mu
    sm_ref[...] = e * (scale / s) + eta


# ---------------------------------------------------------------------------
# One-time parameter preparation (hoisted out of the hot path)
# ---------------------------------------------------------------------------
def _prep_conv_weight(w, cin_pad, cout_pad):
    """torch (Cout, Cin, kh, kw) -> (kh*kw*cin_pad, cout_pad) bf16 GEMM matrix.

    Row ordering is (kh, kw, cin) to match NHWC im2col columns. Padded
    rows/cols are zero, so padded channels propagate exact zeros.
    """
    cout, cin, kh, kw = w.shape
    wm = jnp.transpose(w, (2, 3, 1, 0))                           # (kh, kw, Cin, Cout)
    wm = jnp.pad(wm, ((0, 0), (0, 0), (0, cin_pad - cin), (0, cout_pad - cout)))
    return wm.reshape(kh * kw * cin_pad, cout_pad).astype(jnp.bfloat16)


def _prep_bias(b, cout_pad):
    return jnp.pad(b, (0, cout_pad - b.shape[0])).reshape(1, cout_pad).astype(jnp.float32)


def prepare_params(raw):
    """Reshape / pad / cast all weights ONCE (not per forward call)."""
    latent_dim = raw["wc1"].shape[0]
    return {
        "w1": _prep_conv_weight(raw["w1"], IMG_CHANS, CPAD),      # (48, 128)
        "b1": _prep_bias(raw["b1"], CPAD),
        "w2": _prep_conv_weight(raw["w2"], CPAD, CPAD),           # (2048, 128)
        "b2": _prep_bias(raw["b2"], CPAD),
        "w3": _prep_conv_weight(raw["w3"], CPAD, CPAD),           # (2048, 128)
        "b3": _prep_bias(raw["b3"], CPAD),
        "wc1": _prep_conv_weight(raw["wc1"], CPAD, latent_dim),   # (2048, L)
        "bc1": _prep_bias(raw["bc1"], latent_dim),
        "wc2": _prep_conv_weight(raw["wc2"], CPAD, latent_dim),   # (2048, L)
        "bc2": _prep_bias(raw["bc2"], latent_dim),
    }


# ---------------------------------------------------------------------------
# GEMM wrappers
# ---------------------------------------------------------------------------
def matmul_bias_act(x, w, b, *, relu, out_dtype):
    """x:(M,K) bf16, w:(K,N) bf16, b:(1,N) f32 -> (M,N) out_dtype, fused bias/ReLU."""
    M, K = x.shape
    N = w.shape[1]
    tm = min(TM_MAX, _round_up(M, 8))
    mp = _round_up(M, tm)
    if mp != M:
        x = jnp.pad(x, ((0, mp - M), (0, 0)))
    cost = pl.CostEstimate(
        flops=2 * mp * K * N,
        transcendentals=0,
        bytes_accessed=(mp * K * x.dtype.itemsize + K * N * w.dtype.itemsize
                        + N * 4 + mp * N * np.dtype(out_dtype).itemsize),
    )
    out = pl.pallas_call(
        functools.partial(_gemm_bias_relu_kernel, relu=relu),
        out_shape=jax.ShapeDtypeStruct((mp, N), out_dtype),
        grid=(mp // tm,),
        in_specs=[
            pl.BlockSpec((tm, K), lambda i: (i, 0)),   # M-tiled patches
            pl.BlockSpec((K, N), lambda i: (0, 0)),    # weights stay resident
            pl.BlockSpec((1, N), lambda i: (0, 0)),    # bias stays resident
        ],
        out_specs=pl.BlockSpec((tm, N), lambda i: (i, 0)),
        compiler_params=pltpu.CompilerParams(
            dimension_semantics=("parallel",),         # shard M across TCs (v7x)
            vmem_limit_bytes=32 * 1024 * 1024,
        ),
        cost_estimate=cost,
    )(x, w, b)
    if mp != M:
        out = out[:M]
    return out


def head_gemm_softmax(x, w1, w2, b1, b2, *, latent_dim, eta):
    """Fused c1 + c2 GEMMs with softmax(lv)*L + eta epilogue in one pallas_call."""
    B, K = x.shape
    cost = pl.CostEstimate(
        flops=2 * B * K * 2 * latent_dim,
        transcendentals=B * latent_dim,
        bytes_accessed=(B * K * x.dtype.itemsize
                        + 2 * K * latent_dim * w1.dtype.itemsize
                        + 2 * latent_dim * 4 + 2 * B * latent_dim * 4),
    )
    mu, sm = pl.pallas_call(
        functools.partial(_head_kernel, scale=float(latent_dim), eta=float(eta)),
        out_shape=(jax.ShapeDtypeStruct((B, latent_dim), jnp.float32),
                   jax.ShapeDtypeStruct((B, latent_dim), jnp.float32)),
        grid=(1,),
        in_specs=[
            pl.BlockSpec((B, K), lambda i: (0, 0)),
            pl.BlockSpec((K, latent_dim), lambda i: (0, 0)),
            pl.BlockSpec((K, latent_dim), lambda i: (0, 0)),
            pl.BlockSpec((1, latent_dim), lambda i: (0, 0)),
            pl.BlockSpec((1, latent_dim), lambda i: (0, 0)),
        ],
        out_specs=(pl.BlockSpec((B, latent_dim), lambda i: (0, 0)),
                   pl.BlockSpec((B, latent_dim), lambda i: (0, 0))),
        compiler_params=pltpu.CompilerParams(
            dimension_semantics=("arbitrary",),
            vmem_limit_bytes=32 * 1024 * 1024,
        ),
        cost_estimate=cost,
    )(x, w1, w2, b1, b2)
    return mu, sm


# ---------------------------------------------------------------------------
# Conv2d via NHWC im2col + Pallas GEMM
# ---------------------------------------------------------------------------
def _im2col_nhwc(x, kh, kw, stride, pad):
    # TODO(synk): for large batch, fuse patch extraction into the GEMM kernel
    # (K-grid over kh*kw selecting shifted windows, accumulate in VMEM scratch)
    # to avoid materializing the ~(kh*kw)x-inflated patch matrix in HBM.
    B, H, W, C = x.shape
    if pad:
        x = jnp.pad(x, ((0, 0), (pad, pad), (pad, pad), (0, 0)))
    ho = (H + 2 * pad - kh) // stride + 1
    wo = (W + 2 * pad - kw) // stride + 1
    cols = []
    for i in range(kh):
        for j in range(kw):
            cols.append(x[:, i:i + stride * ho:stride, j:j + stride * wo:stride, :])
    patches = jnp.concatenate(cols, axis=-1)          # column = (i*kw + j)*C + c
    return patches.reshape(B * ho * wo, kh * kw * C), ho, wo


def conv_gemm(x_nhwc, wm, b, *, stride, pad, relu):
    """NHWC conv (4x4 kernel) as im2col + fused Pallas GEMM. Output NHWC, bf16."""
    B = x_nhwc.shape[0]
    patches, ho, wo = _im2col_nhwc(x_nhwc, 4, 4, stride, pad)
    out = matmul_bias_act(patches, wm, b, relu=relu, out_dtype=jnp.bfloat16)
    return out.reshape(B, ho, wo, wm.shape[1])


# ---------------------------------------------------------------------------
# SVHNEncoder forward
# ---------------------------------------------------------------------------
@functools.partial(jax.jit, static_argnames=("latent_dim", "eta"))
def svhn_encoder_forward(x_nchw, params, *, latent_dim, eta=1e-6):
    # Single layout change at entry: NCHW -> NHWC; GEMM inputs in bf16.
    x = jnp.transpose(x_nchw, (0, 2, 3, 1)).astype(jnp.bfloat16)
    e = conv_gemm(x, params["w1"], params["b1"], stride=2, pad=1, relu=True)  # (B,16,16,128)
    e = conv_gemm(e, params["w2"], params["b2"], stride=2, pad=1, relu=True)  # (B, 8, 8,128)
    e = conv_gemm(e, params["w3"], params["b3"], stride=2, pad=1, relu=True)  # (B, 4, 4,128)
    # Head convs are 4x4 "valid" on the 4x4 map -> flatten IS the im2col row
    # ((h,w,c) ordering matches the prepped head weight rows).
    B = e.shape[0]
    feat = e.reshape(B, 4 * 4 * CPAD)
    # mu == c1(e); sm == softmax(c2(e), -1) * L + eta. Batch dim is kept even
    # when B == 1 (unlike torch .squeeze(), which would drop it).
    return head_gemm_softmax(feat, params["wc1"], params["wc2"],
                             params["bc1"], params["bc2"],
                             latent_dim=latent_dim, eta=eta)


# ---------------------------------------------------------------------------
# Deterministic parameter init + run
# ---------------------------------------------------------------------------
def _init_conv(kw, kb, cout, cin, k):
    fan_in = cin * k * k
    bound = 1.0 / (fan_in ** 0.5)
    w = jax.random.uniform(kw, (cout, cin, k, k), jnp.float32, -bound, bound)
    b = jax.random.uniform(kb, (cout,), jnp.float32, -bound, bound)
    return w, b


if __name__ == "__main__":
    latent_dim = 16
    batch = 2

    key = jax.random.PRNGKey(0)
    keys = jax.random.split(key, 11)
    raw = {}
    raw["w1"], raw["b1"] = _init_conv(keys[0], keys[1], fBase, IMG_CHANS, 4)
    raw["w2"], raw["b2"] = _init_conv(keys[2], keys[3], fBase * 2, fBase, 4)
    raw["w3"], raw["b3"] = _init_conv(keys[4], keys[5], fBase * 4, fBase * 2, 4)
    raw["wc1"], raw["bc1"] = _init_conv(keys[6], keys[7], latent_dim, fBase * 4, 4)
    raw["wc2"], raw["bc2"] = _init_conv(keys[8], keys[9], latent_dim, fBase * 4, 4)

    params = prepare_params(raw)        # one-time weight prep (hoisted)

    # Spatial size 32x32 is required by the architecture (32->16->8->4->1).
    x = jax.random.normal(keys[10], (batch, IMG_CHANS, 32, 32), jnp.float32)

    mu, scaled_sm = svhn_encoder_forward(x, params, latent_dim=latent_dim, eta=1e-6)
    jax.block_until_ready((mu, scaled_sm))
    assert mu.shape == (batch, latent_dim)
    assert scaled_sm.shape == (batch, latent_dim)
    print("KERNEL_OK")
</pallas_src>

<mosaic_0001>
module attributes {stable_mosaic.version = 11 : i64} {
  func.func @_gemm_bias_relu_kernel(%arg0: i32, %arg1: memref<256x48xbf16, #tpu.memory_space<vmem>>, %arg2: memref<48x128xbf16, #tpu.memory_space<vmem>>, %arg3: memref<1x128xf32, #tpu.memory_space<vmem>>, %arg4: memref<256x128xbf16, #tpu.memory_space<vmem>>) attributes {dimension_semantics = [#tpu.dimension_semantics<parallel>], iteration_bounds = array<i64: 2>, scalar_prefetch = 0 : i64, scratch_operands = 0 : i64, tpu.core_type = #tpu.core_type<tc>, window_params = [{transform_indices = @transform_0, window_bounds = array<i64: 256, 48>}, {pipeline_mode = #tpu.pipeline_mode<synchronous>, transform_indices = @transform_1, window_bounds = array<i64: 48, 128>}, {pipeline_mode = #tpu.pipeline_mode<synchronous>, transform_indices = @transform_2, window_bounds = array<i64: 1, 128>}, {transform_indices = @transform_3, window_bounds = array<i64: 256, 128>}]} {
    %c0 = arith.constant 0 : index
    %c0_0 = arith.constant 0 : index
    %0 = vector.load %arg1[%c0, %c0_0] : memref<256x48xbf16, #tpu.memory_space<vmem>>, vector<256x48xbf16>
    %c0_1 = arith.constant 0 : index
    %c0_2 = arith.constant 0 : index
    %1 = vector.load %arg2[%c0_1, %c0_2] : memref<48x128xbf16, #tpu.memory_space<vmem>>, vector<48x128xbf16>
    %cst = arith.constant dense<0.000000e+00> : vector<256x128xf32>
    %2 = tpu.matmul %0, %1, %cst {dimension_numbers = #tpu.dot_dimension_numbers<[1], [0], [0], [1], [0, 0, 1, 1], [], []>} : vector<256x48xbf16>, vector<48x128xbf16>, vector<256x128xf32> -> vector<256x128xf32>
    %c0_3 = arith.constant 0 : index
    %c0_4 = arith.constant 0 : index
    %3 = vector.load %arg3[%c0_3, %c0_4] : memref<1x128xf32, #tpu.memory_space<vmem>>, vector<1x128xf32>
    %4 = vector.broadcast %3 : vector<1x128xf32> to vector<256x128xf32>
    %5 = arith.addf %2, %4 : vector<256x128xf32>
    %cst_5 = arith.constant 0.000000e+00 : f32
    %6 = vector.broadcast %cst_5 : f32 to vector<256x128xf32>
    %7 = arith.maximumf %5, %6 : vector<256x128xf32>
    %8 = arith.truncf %7 : vector<256x128xf32> to vector<256x128xbf16>
    %c0_6 = arith.constant 0 : index
    %c0_7 = arith.constant 0 : index
    %9 = vector.load %arg4[%c0_6, %c0_7] : memref<256x128xbf16, #tpu.memory_space<vmem>>, vector<256x128xbf16>
    tpu.vector_store %arg4[%c0_6, %c0_7], %8 {strides = array<i32>} : memref<256x128xbf16, #tpu.memory_space<vmem>>, vector<256x128xbf16>,
    return
  }
  func.func @transform_0(%arg0: i32) -> (i32, i32) {
    %c0_i32 = arith.constant 0 : i32
    %c0_i32_0 = arith.constant 0 : i32
    return %arg0, %c0_i32 : i32, i32
  }
  func.func @transform_1(%arg0: i32) -> (i32, i32) {
    %c0_i32 = arith.constant 0 : i32
    %c0_i32_0 = arith.constant 0 : i32
    %c0_i32_1 = arith.constant 0 : i32
    return %c0_i32, %c0_i32_0 : i32, i32
  }
  func.func @transform_2(%arg0: i32) -> (i32, i32) {
    %c0_i32 = arith.constant 0 : i32
    %c0_i32_0 = arith.constant 0 : i32
    %c0_i32_1 = arith.constant 0 : i32
    return %c0_i32, %c0_i32_0 : i32, i32
  }
  func.func @transform_3(%arg0: i32) -> (i32, i32) {
    %c0_i32 = arith.constant 0 : i32
    %c0_i32_0 = arith.constant 0 : i32
    return %arg0, %c0_i32 : i32, i32
  }
}

module attributes {stable_mosaic.version = 11 : i64} {
  func.func @_gemm_bias_relu_kernel(%arg0: i32, %arg1: memref<128x2048xbf16, #tpu.memory_space<vmem>>, %arg2: memref<2048x128xbf16, #tpu.memory_space<vmem>>, %arg3: memref<1x128xf32, #tpu.memory_space<vmem>>, %arg4: memref<128x128xbf16, #tpu.memory_space<vmem>>) attributes {dimension_semantics = [#tpu.dimension_semantics<parallel>], iteration_bounds = array<i64: 1>, scalar_prefetch = 0 : i64, scratch_operands = 0 : i64, tpu.core_type = #tpu.core_type<tc>, window_params = [{transform_indices = @transform_0, window_bounds = array<i64: 128, 2048>}, {pipeline_mode = #tpu.pipeline_mode<synchronous>, transform_indices = @transform_1, window_bounds = array<i64: 2048, 128>}, {pipeline_mode = #tpu.pipeline_mode<synchronous>, transform_indices = @transform_2, window_bounds = array<i64: 1, 128>}, {transform_indices = @transform_3, window_bounds = array<i64: 128, 128>}]} {
    %c0 = arith.constant 0 : index
    %c0_0 = arith.constant 0 : index
    %0 = vector.load %arg1[%c0, %c0_0] : memref<128x2048xbf16, #tpu.memory_space<vmem>>, vector<128x2048xbf16>
    %c0_1 = arith.constant 0 : index
    %c0_2 = arith.constant 0 : index
    %1 = vector.load %arg2[%c0_1, %c0_2] : memref<2048x128xbf16, #tpu.memory_space<vmem>>, vector<2048x128xbf16>
    %cst = arith.constant dense<0.000000e+00> : vector<128x128xf32>
    %2 = tpu.matmul %0, %1, %cst {dimension_numbers = #tpu.dot_dimension_numbers<[1], [0], [0], [1], [0, 0, 1, 1], [], []>} : vector<128x2048xbf16>, vector<2048x128xbf16>, vector<128x128xf32> -> vector<128x128xf32>
    %c0_3 = arith.constant 0 : index
    %c0_4 = arith.constant 0 : index
    %3 = vector.load %arg3[%c0_3, %c0_4] : memref<1x128xf32, #tpu.memory_space<vmem>>, vector<1x128xf32>
    %4 = vector.broadcast %3 : vector<1x128xf32> to vector<128x128xf32>
    %5 = arith.addf %2, %4 : vector<128x128xf32>
    %cst_5 = arith.constant 0.000000e+00 : f32
    %6 = vector.broadcast %cst_5 : f32 to vector<128x128xf32>
    %7 = arith.maximumf %5, %6 : vector<128x128xf32>
    %8 = arith.truncf %7 : vector<128x128xf32> to vector<128x128xbf16>
    %c0_6 = arith.constant 0 : index
    %c0_7 = arith.constant 0 : index
    %9 = vector.load %arg4[%c0_6, %c0_7] : memref<128x128xbf16, #tpu.memory_space<vmem>>, vector<128x128xbf16>
    tpu.vector_store %arg4[%c0_6, %c0_7], %8 {strides = array<i32>} : memref<128x128xbf16, #tpu.memory_space<vmem>>, vector<128x128xbf16>,
    return
  }
  func.func @transform_0(%arg0: i32) -> (i32, i32) {
    %c0_i32 = arith.constant 0 : i32
    %c0_i32_0 = arith.constant 0 : i32
    return %arg0, %c0_i32 : i32, i32
  }
  func.func @transform_1(%arg0: i32) -> (i32, i32) {
    %c0_i32 = arith.constant 0 : i32
    %c0_i32_0 = arith.constant 0 : i32
    %c0_i32_1 = arith.constant 0 : i32
    return %c0_i32, %c0_i32_0 : i32, i32
  }
  func.func @transform_2(%arg0: i32) -> (i32, i32) {
    %c0_i32 = arith.constant 0 : i32
    %c0_i32_0 = arith.constant 0 : i32
    %c0_i32_1 = arith.constant 0 : i32
    return %c0_i32, %c0_i32_0 : i32, i32
  }
  func.func @transform_3(%arg0: i32) -> (i32, i32) {
    %c0_i32 = arith.constant 0 : i32
    %c0_i32_0 = arith.constant 0 : i32
    return %arg0, %c0_i32 : i32, i32
  }
}

module attributes {stable_mosaic.version = 11 : i64} {
  func.func @_gemm_bias_relu_kernel(%arg0: i32, %arg1: memref<32x2048xbf16, #tpu.memory_space<vmem>>, %arg2: memref<2048x128xbf16, #tpu.memory_space<vmem>>, %arg3: memref<1x128xf32, #tpu.memory_space<vmem>>, %arg4: memref<32x128xbf16, #tpu.memory_space<vmem>>) attributes {dimension_semantics = [#tpu.dimension_semantics<parallel>], iteration_bounds = array<i64: 1>, scalar_prefetch = 0 : i64, scratch_operands = 0 : i64, tpu.core_type = #tpu.core_type<tc>, window_params = [{transform_indices = @transform_0, window_bounds = array<i64: 32, 2048>}, {pipeline_mode = #tpu.pipeline_mode<synchronous>, transform_indices = @transform_1, window_bounds = array<i64: 2048, 128>}, {pipeline_mode = #tpu.pipeline_mode<synchronous>, transform_indices = @transform_2, window_bounds = array<i64: 1, 128>}, {transform_indices = @transform_3, window_bounds = array<i64: 32, 128>}]} {
    %c0 = arith.constant 0 : index
    %c0_0 = arith.constant 0 : index
    %0 = vector.load %arg1[%c0, %c0_0] : memref<32x2048xbf16, #tpu.memory_space<vmem>>, vector<32x2048xbf16>
    %c0_1 = arith.constant 0 : index
    %c0_2 = arith.constant 0 : index
    %1 = vector.load %arg2[%c0_1, %c0_2] : memref<2048x128xbf16, #tpu.memory_space<vmem>>, vector<2048x128xbf16>
    %cst = arith.constant dense<0.000000e+00> : vector<32x128xf32>
    %2 = tpu.matmul %0, %1, %cst {dimension_numbers = #tpu.dot_dimension_numbers<[1], [0], [0], [1], [0, 0, 1, 1], [], []>} : vector<32x2048xbf16>, vector<2048x128xbf16>, vector<32x128xf32> -> vector<32x128xf32>
    %c0_3 = arith.constant 0 : index
    %c0_4 = arith.constant 0 : index
    %3 = vector.load %arg3[%c0_3, %c0_4] : memref<1x128xf32, #tpu.memory_space<vmem>>, vector<1x128xf32>
    %4 = vector.broadcast %3 : vector<1x128xf32> to vector<32x128xf32>
    %5 = arith.addf %2, %4 : vector<32x128xf32>
    %cst_5 = arith.constant 0.000000e+00 : f32
    %6 = vector.broadcast %cst_5 : f32 to vector<32x128xf32>
    %7 = arith.maximumf %5, %6 : vector<32x128xf32>
    %8 = arith.truncf %7 : vector<32x128xf32> to vector<32x128xbf16>
    %c0_6 = arith.constant 0 : index
    %c0_7 = arith.constant 0 : index
    %9 = vector.load %arg4[%c0_6, %c0_7] : memref<32x128xbf16, #tpu.memory_space<vmem>>, vector<32x128xbf16>
    tpu.vector_store %arg4[%c0_6, %c0_7], %8 {strides = array<i32>} : memref<32x128xbf16, #tpu.memory_space<vmem>>, vector<32x128xbf16>,
    return
  }
  func.func @transform_0(%arg0: i32) -> (i32, i32) {
    %c0_i32 = arith.constant 0 : i32
    %c0_i32_0 = arith.constant 0 : i32
    return %arg0, %c0_i32 : i32, i32
  }
  func.func @transform_1(%arg0: i32) -> (i32, i32) {
    %c0_i32 = arith.constant 0 : i32
    %c0_i32_0 = arith.constant 0 : i32
    %c0_i32_1 = arith.constant 0 : i32
    return %c0_i32, %c0_i32_0 : i32, i32
  }
  func.func @transform_2(%arg0: i32) -> (i32, i32) {
    %c0_i32 = arith.constant 0 : i32
    %c0_i32_0 = arith.constant 0 : i32
    %c0_i32_1 = arith.constant 0 : i32
    return %c0_i32, %c0_i32_0 : i32, i32
  }
  func.func @transform_3(%arg0: i32) -> (i32, i32) {
    %c0_i32 = arith.constant 0 : i32
    %c0_i32_0 = arith.constant 0 : i32
    return %arg0, %c0_i32 : i32, i32
  }
}

module attributes {stable_mosaic.version = 11 : i64} {
  func.func @_head_kernel(%arg0: i32, %arg1: memref<2x2048xbf16, #tpu.memory_space<vmem>>, %arg2: memref<2048x16xbf16, #tpu.memory_space<vmem>>, %arg3: memref<2048x16xbf16, #tpu.memory_space<vmem>>, %arg4: memref<1x16xf32, #tpu.memory_space<vmem>>, %arg5: memref<1x16xf32, #tpu.memory_space<vmem>>, %arg6: memref<2x16xf32, #tpu.memory_space<vmem>>, %arg7: memref<2x16xf32, #tpu.memory_space<vmem>>) attributes {dimension_semantics = [#tpu.dimension_semantics<arbitrary>], iteration_bounds = array<i64: 1>, scalar_prefetch = 0 : i64, scratch_operands = 0 : i64, tpu.core_type = #tpu.core_type<tc>, window_params = [{pipeline_mode = #tpu.pipeline_mode<synchronous>, transform_indices = @transform_0, window_bounds = array<i64: 2, 2048>}, {pipeline_mode = #tpu.pipeline_mode<synchronous>, transform_indices = @transform_1, window_bounds = array<i64: 2048, 16>}, {pipeline_mode = #tpu.pipeline_mode<synchronous>, transform_indices = @transform_2, window_bounds = array<i64: 2048, 16>}, {pipeline_mode = #tpu.pipeline_mode<synchronous>, transform_indices = @transform_3, window_bounds = array<i64: 1, 16>}, {pipeline_mode = #tpu.pipeline_mode<synchronous>, transform_indices = @transform_4, window_bounds = array<i64: 1, 16>}, {pipeline_mode = #tpu.pipeline_mode<synchronous>, transform_indices = @transform_5, window_bounds = array<i64: 2, 16>}, {pipeline_mode = #tpu.pipeline_mode<synchronous>, transform_indices = @transform_6, window_bounds = array<i64: 2, 16>}]} {
    %c0 = arith.constant 0 : index
    %c0_0 = arith.constant 0 : index
    %0 = vector.load %arg1[%c0, %c0_0] : memref<2x2048xbf16, #tpu.memory_space<vmem>>, vector<2x2048xbf16>
    %c0_1 = arith.constant 0 : index
    %c0_2 = arith.constant 0 : index
    %1 = vector.load %arg2[%c0_1, %c0_2] : memref<2048x16xbf16, #tpu.memory_space<vmem>>, vector<2048x16xbf16>
    %cst = arith.constant dense<0.000000e+00> : vector<2x16xf32>
    %2 = tpu.matmul %0, %1, %cst {dimension_numbers = #tpu.dot_dimension_numbers<[1], [0], [0], [1], [0, 0, 1, 1], [], []>} : vector<2x2048xbf16>, vector<2048x16xbf16>, vector<2x16xf32> -> vector<2x16xf32>
    %c0_3 = arith.constant 0 : index
    %c0_4 = arith.constant 0 : index
    %3 = vector.load %arg4[%c0_3, %c0_4] : memref<1x16xf32, #tpu.memory_space<vmem>>, vector<1x16xf32>
    %4 = vector.broadcast %3 : vector<1x16xf32> to vector<2x16xf32>
    %5 = arith.addf %2, %4 : vector<2x16xf32>
    %c0_5 = arith.constant 0 : index
    %c0_6 = arith.constant 0 : index
    %6 = vector.load %arg3[%c0_5, %c0_6] : memref<2048x16xbf16, #tpu.memory_space<vmem>>, vector<2048x16xbf16>
    %cst_7 = arith.constant dense<0.000000e+00> : vector<2x16xf32>
    %7 = tpu.matmul %0, %6, %cst_7 {dimension_numbers = #tpu.dot_dimension_numbers<[1], [0], [0], [1], [0, 0, 1, 1], [], []>} : vector<2x2048xbf16>, vector<2048x16xbf16>, vector<2x16xf32> -> vector<2x16xf32>
    %c0_8 = arith.constant 0 : index
    %c0_9 = arith.constant 0 : index
    %8 = vector.load %arg5[%c0_8, %c0_9] : memref<1x16xf32, #tpu.memory_space<vmem>>, vector<1x16xf32>
    %9 = vector.broadcast %8 : vector<1x16xf32> to vector<2x16xf32>
    %10 = arith.addf %7, %9 : vector<2x16xf32>
    %cst_10 = arith.constant dense<0xFF800000> : vector<2xf32>
    %11 = vector.multi_reduction <maximumf>, %10, %cst_10 [1] : vector<2x16xf32> to vector<2xf32>
    %12 = vector.shape_cast %11 : vector<2xf32> to vector<2x1xf32>
    %13 = vector.broadcast %12 : vector<2x1xf32> to vector<2x16xf32>
    %14 = arith.subf %10, %13 : vector<2x16xf32>
    %15 = math.exp %14 : vector<2x16xf32>
    %cst_11 = arith.constant dense<0.000000e+00> : vector<2xf32>
    %16 = vector.multi_reduction <add>, %15, %cst_11 [1] : vector<2x16xf32> to vector<2xf32>
    %17 = vector.shape_cast %16 : vector<2xf32> to vector<2x1xf32>
    %c0_12 = arith.constant 0 : index
    %c0_13 = arith.constant 0 : index
    %18 = vector.load %arg6[%c0_12, %c0_13] : memref<2x16xf32, #tpu.memory_space<vmem>>, vector<2x16xf32>
    tpu.vector_store %arg6[%c0_12, %c0_13], %5 {strides = array<i32>} : memref<2x16xf32, #tpu.memory_space<vmem>>, vector<2x16xf32>,
    %cst_14 = arith.constant 1.600000e+01 : f32
    %19 = vector.broadcast %cst_14 : f32 to vector<2x1xf32>
    %20 = arith.divf %19, %17 : vector<2x1xf32>
    %21 = vector.broadcast %20 : vector<2x1xf32> to vector<2x16xf32>
    %22 = arith.mulf %15, %21 : vector<2x16xf32>
    %cst_15 = arith.constant 9.99999997E-7 : f32
    %23 = vector.broadcast %cst_15 : f32 to vector<2x16xf32>
    %24 = arith.addf %22, %23 : vector<2x16xf32>
    %c0_16 = arith.constant 0 : index
    %c0_17 = arith.constant 0 : index
    %25 = vector.load %arg7[%c0_16, %c0_17] : memref<2x16xf32, #tpu.memory_space<vmem>>, vector<2x16xf32>
    tpu.vector_store %arg7[%c0_16, %c0_17], %24 {strides = array<i32>} : memref<2x16xf32, #tpu.memory_space<vmem>>, vector<2x16xf32>,
    return
  }
  func.func @transform_0(%arg0: i32) -> (i32, i32) {
    %c0_i32 = arith.constant 0 : i32
    %c0_i32_0 = arith.constant 0 : i32
    %c0_i32_1 = arith.constant 0 : i32
    return %c0_i32, %c0_i32_0 : i32, i32
  }
  func.func @transform_1(%arg0: i32) -> (i32, i32) {
    %c0_i32 = arith.constant 0 : i32
    %c0_i32_0 = arith.constant 0 : i32
    %c0_i32_1 = arith.constant 0 : i32
    return %c0_i32, %c0_i32_0 : i32, i32
  }
  func.func @transform_2(%arg0: i32) -> (i32, i32) {
    %c0_i32 = arith.constant 0 : i32
    %c0_i32_0 = arith.constant 0 : i32
    %c0_i32_1 = arith.constant 0 : i32
    return %c0_i32, %c0_i32_0 : i32, i32
  }
  func.func @transform_3(%arg0: i32) -> (i32, i32) {
    %c0_i32 = arith.constant 0 : i32
    %c0_i32_0 = arith.constant 0 : i32
    %c0_i32_1 = arith.constant 0 : i32
    return %c0_i32, %c0_i32_0 : i32, i32
  }
  func.func @transform_4(%arg0: i32) -> (i32, i32) {
    %c0_i32 = arith.constant 0 : i32
    %c0_i32_0 = arith.constant 0 : i32
    %c0_i32_1 = arith.constant 0 : i32
    return %c0_i32, %c0_i32_0 : i32, i32
  }
  func.func @transform_5(%arg0: i32) -> (i32, i32) {
    %c0_i32 = arith.constant 0 : i32
    %c0_i32_0 = arith.constant 0 : i32
    %c0_i32_1 = arith.constant 0 : i32
    return %c0_i32, %c0_i32_0 : i32, i32
  }
  func.func @transform_6(%arg0: i32) -> (i32, i32) {
    %c0_i32 = arith.constant 0 : i32
    %c0_i32_0 = arith.constant 0 : i32
    %c0_i32_1 = arith.constant 0 : i32
    return %c0_i32, %c0_i32_0 : i32, i32
  }
}

</mosaic_0001>

<llo_original>
// kernel: svhn_encoder_forward.4
$region0: #{svhn_encoder_forward.4}
  #allocation0 [shape = 'u32[]', space=smem, size = 0x4, offset = 0x4, fixed_abs, tag = 'smem constant byte address 0x4 - core index']
  #allocation1 [shape = 'u32[72,128]{1,0:T(1,128)}', space=vmem, size = 0x9000, scoped, tag = 'internal scratch']
  %s0 = inlined_call_operand.vmem [shape: bf16[512,48], index: 0, kind: input, shape index: {}]
  %s1 = inlined_call_operand.vmem [shape: bf16[48,128], index: 1, kind: input, shape index: {}]
  %s2 = inlined_call_operand.vmem [shape: f32[1,128], index: 2, kind: input, shape index: {}]
  %s3 = inlined_call_operand.vmem [shape: bf16[512,128], index: 3, kind: output, shape index: {}]
  %s4 = sld [smem:[#allocation0]]
  $region45: #{svhn_encoder_forward.4} parent=0
    _
  %s6 = ssub.s32 1, %s4
  %s7 = scalar_select 0, %s6, %s4
  loop: start=0, step=1, limit=4
  $region2: #{svhn_encoder_forward.4} parent=0 // loop_pre_header
    _
  $region3: #{svhn_encoder_forward.4} parent=0 // loop_header
    %s9 = sphi 0, %s13
    %p10 = scmp.ge.s32.totalorder %s9, 4
    %s19 = sphi 0, %s21
    %s22 = sphi 0, %s19
    %s23 = sphi 0, %s22
    %s39 = sphi 0, %s23
    %s43 = sphi 0, %s43
    %s45 = sphi 0, %s43
    %s46 = sphi 0, %s45
    %s60 = sphi 0, %s46
    %s64 = sphi 0, %s64
    %s66 = sphi 0, %s64
    %s67 = sphi 0, %s66
    %s81 = sphi 0, %s67
    %s87 = sphi 0, %s89
    %s90 = sphi 0, %s87
    %s91 = sphi 0, %s90
    %s107 = sphi 0, %s91
  $region4: #{svhn_encoder_forward.4} parent=0 // loop_header_branch
    %12 = sbr.rel (%p10) target = $region8
  $region5: #{svhn_encoder_forward.4} parent=0 // loop_body
    %s14 = ssub.s32 %s9, 1
    %s15 = ssub.s32 %s9, 2
    %s16 = sadd.s32 %s9, 1
    %s17 = ssub.s32 %s9, %s16
    %p18 = scmp.eq.s32.totalorder %s17, 0
    %s20 = sadd.s32 %s19, 1
    %s21 = scalar_select %p18, %s19, %s20
    %p24 = pneg %p18
    %p25 = scmp.eq.s32.totalorder %s9, 1
    %p26 = por %p24, %p25
    %p27 = scmp.ne.s32.totalorder %s19, %s22
    %p28 = scmp.eq.s32.totalorder %s9, 0
    %p29 = por %p27, %p28
    %p30 = scmp.ne.s32.totalorder %s19, %s22
    %p31 = scmp.eq.s32.totalorder %s14, 1
    %p32 = por %p30, %p31
    %p33 = scmp.ne.s32.totalorder %s22, %s23
    %p34 = scmp.eq.s32.totalorder %s14, 0
    %p35 = por %p33, %p34
    %p36 = scmp.ne.s32.totalorder %s22, %s23
    %p37 = scmp.eq.s32.totalorder %s15, 1
    %p38 = por %p36, %p37
    %p40 = scmp.ne.s32.totalorder %s23, %s39
    %p41 = scmp.eq.s32.totalorder %s15, 0
    %p42 = por %p40, %p41
    %s44 = sadd.s32 %s43, 1
    %p47 = scmp.eq.s32.totalorder %s9, 1
    %p48 = scmp.ne.s32.totalorder %s43, %s45
    %p49 = scmp.eq.s32.totalorder %s9, 0
    %p50 = por %p48, %p49
    %p51 = scmp.ne.s32.totalorder %s43, %s45
    %p52 = scmp.eq.s32.totalorder %s14, 1
    %p53 = por %p51, %p52
    %p54 = scmp.ne.s32.totalorder %s45, %s46
    %p55 = scmp.eq.s32.totalorder %s14, 0
    %p56 = por %p54, %p55
    %p57 = scmp.ne.s32.totalorder %s45, %s46
    %p58 = scmp.eq.s32.totalorder %s15, 1
    %p59 = por %p57, %p58
    %p61 = scmp.ne.s32.totalorder %s46, %s60
    %p62 = scmp.eq.s32.totalorder %s15, 0
    %p63 = por %p61, %p62
    %s65 = sadd.s32 %s64, 1
    %p68 = scmp.eq.s32.totalorder %s9, 1
    %p69 = scmp.ne.s32.totalorder %s64, %s66
    %p70 = scmp.eq.s32.totalorder %s9, 0
    %p71 = por %p69, %p70
    %p72 = scmp.ne.s32.totalorder %s64, %s66
    %p73 = scmp.eq.s32.totalorder %s14, 1
    %p74 = por %p72, %p73
    %p75 = scmp.ne.s32.totalorder %s66, %s67
    %p76 = scmp.eq.s32.totalorder %s14, 0
    %p77 = por %p75, %p76
    %p78 = scmp.ne.s32.totalorder %s66, %s67
    %p79 = scmp.eq.s32.totalorder %s15, 1
    %p80 = por %p78, %p79
    %p82 = scmp.ne.s32.totalorder %s67, %s81
    %p83 = scmp.eq.s32.totalorder %s15, 0
    %p84 = por %p82, %p83
    %s85 = ssub.s32 %s9, %s16
    %p86 = scmp.eq.s32.totalorder %s85, 0
    %s88 = sadd.s32 %s87, 1
    %s89 = scalar_select %p86, %s87, %s88
    %p92 = pneg %p86
    %p93 = scmp.eq.s32.totalorder %s9, 1
    %p94 = por %p92, %p93
    %p95 = scmp.ne.s32.totalorder %s87, %s90
    %p96 = scmp.eq.s32.totalorder %s9, 0
    %p97 = por %p95, %p96
    %p98 = scmp.ne.s32.totalorder %s87, %s90
    %p99 = scmp.eq.s32.totalorder %s14, 1
    %p100 = por %p98, %p99
    %p101 = scmp.ne.s32.totalorder %s90, %s91
    %p102 = scmp.eq.s32.totalorder %s14, 0
    %p103 = por %p101, %p102
    %p104 = scmp.ne.s32.totalorder %s90, %s91
    %p105 = scmp.eq.s32.totalorder %s15, 1
    %p106 = por %p104, %p105
    %p108 = scmp.ne.s32.totalorder %s91, %s107
    %p109 = scmp.eq.s32.totalorder %s15, 0
    %p110 = por %p108, %p109
    %p111 = scmp.le.s32.totalorder 1, %s9
    %p112 = scmp.lt.s32.totalorder %s9, 3
    %p113 = pnand %p111, %p112
    %p114 = pneg %p113
    // Predicated region
    $region9: #{svhn_encoder_forward.4} parent=5 // pred_check
      _
    $region10: #{svhn_encoder_forward.4} parent=5 // pred_check_branch
      %116 = sbr.rel (%p113) target = $region12
    $region11: #{svhn_encoder_forward.4} parent=5 // pred_region
      %s117 = ssub.s32 %s9, 1
      // Predicated region
      $region13: #{svhn_encoder_forward.4} parent=11 // pred_check
        %p118 = pneg %p56
      $region14: #{svhn_encoder_forward.4} parent=11 // pred_check_branch
        %120 = sbr.rel (%p118) target = $region16
      $region15: #{svhn_encoder_forward.4} parent=11 // pred_region
        _
      $region16: #{svhn_encoder_forward.4} parent=11 // pred_fallthru
        _
      // Predicated region
      $region17: #{svhn_encoder_forward.4} parent=11 // pred_check
        %p121 = pneg %p77
      $region18: #{svhn_encoder_forward.4} parent=11 // pred_check_branch
        %123 = sbr.rel (%p121) target = $region20
      $region19: #{svhn_encoder_forward.4} parent=11 // pred_region
        _
      $region20: #{svhn_encoder_forward.4} parent=11 // pred_fallthru
        _
    $region12: #{svhn_encoder_forward.4} parent=5 // pred_fallthru
      _
    %p124 = scmp.lt.s32.totalorder %s9, 2
    // Predicated region
    $region21: #{svhn_encoder_forward.4} parent=5 // pred_check
      %p125 = pneg %p124
    $region22: #{svhn_encoder_forward.4} parent=5 // pred_check_branch
      %127 = sbr.rel (%p125) target = $region24
    $region23: #{svhn_encoder_forward.4} parent=5 // pred_region
      // Predicated region
      $region25: #{svhn_encoder_forward.4} parent=23 // pred_check
        %p128 = pneg %p29
      $region26: #{svhn_encoder_forward.4} parent=23 // pred_check_branch
        %130 = sbr.rel (%p128) target = $region28
      $region27: #{svhn_encoder_forward.4} parent=23 // pred_region
        %s131 = smul.u32 32, %s9
        %p132 = scmp.lt.s32.totalorder %s131, 63
        %s133 = scalar_select %p132, %s131, 63
        %s134 = smul.addr %s133, 4
        %s135 = scalar_lea.vmem %s0, %s134
        %s136 = smul.u32 32, %s9
      $region28: #{svhn_encoder_forward.4} parent=23 // pred_fallthru
        _
    $region24: #{svhn_encoder_forward.4} parent=5 // pred_fallthru
      _
    %p137 = scmp.le.s32.totalorder 1, %s9
    %p138 = scmp.lt.s32.totalorder %s9, 3
    %p139 = pnand %p137, %p138
    %p140 = pneg %p139
    // Predicated region
    $region29: #{svhn_encoder_forward.4} parent=5 // pred_check
      _
    $region30: #{svhn_encoder_forward.4} parent=5 // pred_check_branch
      %142 = sbr.rel (%p139) target = $region32
    $region31: #{svhn_encoder_forward.4} parent=5 // pred_region
      %s143 = ssub.s32 %s9, 1
      %s144 = smul.u32 32, %s14
      %p145 = scmp.lt.s32.totalorder %s144, 63
      %s146 = scalar_select %p145, %s144, 63
      %s147 = smul.addr %s146, 4
      %s148 = scalar_lea.vmem %s0, %s147
      %p149 = pneg %p35
      %p150 = pneg %p32
      %p151 = pneg %p56
      %p152 = pneg %p53
      %p153 = pneg %p77
      %p154 = pneg %p74
      %p155 = pneg %p103
      %p156 = pneg %p100
      %s157 = smul.u32 32, %s14
      %p158 = scmp.lt.s32.totalorder %s157, 63
      %s159 = scalar_select %p158, %s157, 63
      %s160 = smul.addr %s159, 4
      %s161 = scalar_lea.vmem %s3, %s160
      %s162 = smul.u32 32, %s14
      %p163 = scmp.lt.s32.totalorder %s162, 63
      %s164 = scalar_select %p163, %s162, 63
      %s165 = smul.addr %s164, 4
      %s166 = scalar_lea.vmem %s0, %s165
      %s167 = smul.u32 32, %s14
      %s168 = smul.u32 32, %s14
      %p169 = scmp.lt.s32.totalorder %s168, 63
      %s170 = scalar_select %p169, %s168, 63
      %s171 = smul.addr %s170, 4
      %s172 = scalar_lea.vmem %s3, %s171
      %s173 = smul.u32 32, %s14
      %v175 = vld [vmem:[%s166] sm:$0xf]
      %v176 = vld [vmem:[%s166 + $0x4] sm:$0xf]
      %v177 = vld [vmem:[%s166 + $0x8] sm:$0xf]
      %v178 = vld [vmem:[%s166 + $0xc] sm:$0xf]
      %v179 = vld [vmem:[%s166 + $0x10] sm:$0xf]
      %v180 = vld [vmem:[%s166 + $0x14] sm:$0xf]
      %v181 = vld [vmem:[%s166 + $0x18] sm:$0xf]
      %v182 = vld [vmem:[%s166 + $0x1c] sm:$0xf]
      %v183 = vld [vmem:[%s166 + $0x20] sm:$0xf]
      %v184 = vld [vmem:[%s166 + $0x24] sm:$0xf]
      %v185 = vld [vmem:[%s166 + $0x28] sm:$0xf]
      %v186 = vld [vmem:[%s166 + $0x2c] sm:$0xf]
      %v187 = vld [vmem:[%s166 + $0x30] sm:$0xf]
      %v188 = vld [vmem:[%s166 + $0x34] sm:$0xf]
      %v189 = vld [vmem:[%s166 + $0x38] sm:$0xf]
      %v190 = vld [vmem:[%s166 + $0x3c] sm:$0xf]
      %v191 = vld [vmem:[%s166 + $0x40] sm:$0xf]
      %v192 = vld [vmem:[%s166 + $0x44] sm:$0xf]
      %v193 = vld [vmem:[%s166 + $0x48] sm:$0xf]
      %v194 = vld [vmem:[%s166 + $0x4c] sm:$0xf]
      %v195 = vld [vmem:[%s166 + $0x50] sm:$0xf]
      %v196 = vld [vmem:[%s166 + $0x54] sm:$0xf]
      %v197 = vld [vmem:[%s166 + $0x58] sm:$0xf]
      %v198 = vld [vmem:[%s166 + $0x5c] sm:$0xf]
      %v199 = vld [vmem:[%s166 + $0x60] sm:$0xf]
      %v200 = vld [vmem:[%s166 + $0x64] sm:$0xf]
      %v201 = vld [vmem:[%s166 + $0x68] sm:$0xf]
      %v202 = vld [vmem:[%s166 + $0x6c] sm:$0xf]
      %v203 = vld [vmem:[%s166 + $0x70] sm:$0xf]
      %v204 = vld [vmem:[%s166 + $0x74] sm:$0xf]
      %v205 = vld [vmem:[%s166 + $0x78] sm:$0xf]
      %v206 = vld [vmem:[%s166 + $0x7c] sm:$0xf]
      %v207 = vld [vmem:[%s1] sm:$0xf]
      %v208 = vld [vmem:[%s1 + $0x4] sm:$0xf]
      %v209 = vld [vmem:[%s1 + $0x8] sm:$0xf]
      %v210 = vld [vmem:[%s1 + $0xc] sm:$0xf]
      %v211 = vld [vmem:[%s1 + $0x10] sm:$0xf]
      %v212 = vld [vmem:[%s1 + $0x14] sm:$0xf]
      %v213 = vld [vmem:[%s2] sm:$0x1]
      %v215 = vperm.slane %v213, 0
      %v249 = vunpack.c.l.b16 %v175
      %v250 = vunpack.c.l.b16 %v176
      %v251 = vunpack.c.l.b16 %v177
      %v252 = vunpack.c.l.b16 %v178
      %v253 = vunpack.c.l.b16 %v179
      %v254 = vunpack.c.l.b16 %v180
      %v255 = vunpack.c.l.b16 %v181
      %v256 = vunpack.c.l.b16 %v182
      %v257 = vunpack.c.l.b16 %v183
      %v258 = vunpack.c.l.b16 %v184
      %v259 = vunpack.c.l.b16 %v185
      %v260 = vunpack.c.l.b16 %v186
      %v261 = vunpack.c.l.b16 %v187
      %v262 = vunpack.c.l.b16 %v188
      %v263 = vunpack.c.l.b16 %v189
      %v264 = vunpack.c.l.b16 %v190
      %v265 = vunpack.c.l.b16 %v191
      %v266 = vunpack.c.l.b16 %v192
      %v267 = vunpack.c.l.b16 %v193
      %v268 = vunpack.c.l.b16 %v194
      %v269 = vunpack.c.l.b16 %v195
      %v270 = vunpack.c.l.b16 %v196
      %v271 = vunpack.c.l.b16 %v197
      %v272 = vunpack.c.l.b16 %v198
      %v273 = vunpack.c.l.b16 %v199
      %v274 = vunpack.c.l.b16 %v200
      %v275 = vunpack.c.l.b16 %v201
      %v276 = vunpack.c.l.b16 %v202
      %v277 = vunpack.c.l.b16 %v203
      %v278 = vunpack.c.l.b16 %v204
      %v279 = vunpack.c.l.b16 %v205
      %v280 = vunpack.c.l.b16 %v206
      %v281 = vpack.c.b16 %v250, %v249
      %v282 = vpack.c.b16 %v252, %v251
      %v283 = vpack.c.b16 %v254, %v253
      %v284 = vpack.c.b16 %v256, %v255
      %v285 = vpack.c.b16 %v258, %v257
      %v286 = vpack.c.b16 %v260, %v259
      %v287 = vpack.c.b16 %v262, %v261
      %v288 = vpack.c.b16 %v264, %v263
      %v289 = vpack.c.b16 %v266, %v265
      %v290 = vpack.c.b16 %v268, %v267
      %v291 = vpack.c.b16 %v270, %v269
      %v292 = vpack.c.b16 %v272, %v271
      %v293 = vpack.c.b16 %v274, %v273
      %v294 = vpack.c.b16 %v276, %v275
      %v295 = vpack.c.b16 %v278, %v277
      %v296 = vpack.c.b16 %v280, %v279
      %v303 = vunpack.c.l.b16 %v207
      %v304 = vunpack.c.l.b16 %v208
      %v305 = vunpack.c.l.b16 %v209
      %v306 = vunpack.c.l.b16 %v210
      %v307 = vunpack.c.l.b16 %v211
      %v308 = vunpack.c.l.b16 %v212
      %v309 = vpack.c.b16 %v304, %v303
      %v310 = vpack.c.b16 %v306, %v305
      %v311 = vpack.c.b16 %v308, %v307
      %vm315 = vcmask 392192
      %v317 = vsel %vm315, %v281, 0
      %v320 = vsel %vm315, %v282, 0
      %v323 = vsel %vm315, %v283, 0
      %v326 = vsel %vm315, %v284, 0
      %v329 = vsel %vm315, %v285, 0
      %v332 = vsel %vm315, %v286, 0
      %v335 = vsel %vm315, %v287, 0
      %v338 = vsel %vm315, %v288, 0
      %v341 = vsel %vm315, %v289, 0
      %v344 = vsel %vm315, %v290, 0
      %v347 = vsel %vm315, %v291, 0
      %v350 = vsel %vm315, %v292, 0
      %v353 = vsel %vm315, %v293, 0
      %v356 = vsel %vm315, %v294, 0
      %v359 = vsel %vm315, %v295, 0
      %v362 = vsel %vm315, %v296, 0
      %364 = vmatpush.bf16.msra.mxu0 0
      %365 = vmatpush.bf16.msra.mxu0 0
      %366 = vmatpush.bf16.msra.mxu0 0
      %367 = vmatpush.bf16.msra.mxu0 0
      %368 = vmatpush.bf16.msra.mxu0 0
      %369 = vmatpush.bf16.msra.mxu0 %v311
      %370 = vmatpush.bf16.msra.mxu0 %v310
      %371 = vmatpush.bf16.msra.mxu0 %v309
      %372 = vmatmul.bf16.gmra.mxu0 %v317
      %v373 = vpop.f32.mrf.mxu0
      %v374 = vadd.f32 %v215, %v373
      %v375 = vpop.f32.mrf.mxu0
      %v376 = vadd.f32 %v215, %v375
      %377 = vmatmul.bf16.gmra.mxu0 %v320
      %v378 = vpop.f32.mrf.mxu0
      %v379 = vadd.f32 %v215, %v378
      %v380 = vpop.f32.mrf.mxu0
      %v381 = vadd.f32 %v215, %v380
      %382 = vmatmul.bf16.gmra.mxu0 %v323
      %v383 = vpop.f32.mrf.mxu0
      %v384 = vadd.f32 %v215, %v383
      %v385 = vpop.f32.mrf.mxu0
      %v386 = vadd.f32 %v215, %v385
      %387 = vmatmul.bf16.gmra.mxu0 %v326
      %v388 = vpop.f32.mrf.mxu0
      %v389 = vadd.f32 %v215, %v388
      %v390 = vpop.f32.mrf.mxu0
      %v391 = vadd.f32 %v215, %v390
      %392 = vmatmul.bf16.gmra.mxu0 %v329
      %v393 = vpop.f32.mrf.mxu0
      %v394 = vadd.f32 %v215, %v393
      %v395 = vpop.f32.mrf.mxu0
      %v396 = vadd.f32 %v215, %v395
      %397 = vmatmul.bf16.gmra.mxu0 %v332
      %v398 = vpop.f32.mrf.mxu0
      %v399 = vadd.f32 %v215, %v398
      %v400 = vpop.f32.mrf.mxu0
      %v401 = vadd.f32 %v215, %v400
      %402 = vmatmul.bf16.gmra.mxu0 %v335
      %v403 = vpop.f32.mrf.mxu0
      %v404 = vadd.f32 %v215, %v403
      %v405 = vpop.f32.mrf.mxu0
      %v406 = vadd.f32 %v215, %v405
      %407 = vmatmul.bf16.gmra.mxu0 %v338
      %v408 = vpop.f32.mrf.mxu0
      %v409 = vadd.f32 %v215, %v408
      %v410 = vpop.f32.mrf.mxu0
      %v411 = vadd.f32 %v215, %v410
      %412 = vmatmul.bf16.gmra.mxu0 %v341
      %v413 = vpop.f32.mrf.mxu0
      %v414 = vadd.f32 %v215, %v413
      %v415 = vpop.f32.mrf.mxu0
      %v416 = vadd.f32 %v215, %v415
      %417 = vmatmul.bf16.gmra.mxu0 %v344
      %v418 = vpop.f32.mrf.mxu0
      %v419 = vadd.f32 %v215, %v418
      %v420 = vpop.f32.mrf.mxu0
      %v421 = vadd.f32 %v215, %v420
      %422 = vmatmul.bf16.gmra.mxu0 %v347
      %v423 = vpop.f32.mrf.mxu0
      %v424 = vadd.f32 %v215, %v423
      %v425 = vpop.f32.mrf.mxu0
      %v426 = vadd.f32 %v215, %v425
      %427 = vmatmul.bf16.gmra.mxu0 %v350
      %v428 = vpop.f32.mrf.mxu0
      %v429 = vadd.f32 %v215, %v428
      %v430 = vpop.f32.mrf.mxu0
      %v431 = vadd.f32 %v215, %v430
      %432 = vmatmul.bf16.gmra.mxu0 %v353
      %v433 = vpop.f32.mrf.mxu0
      %v434 = vadd.f32 %v215, %v433
      %v435 = vpop.f32.mrf.mxu0
      %v436 = vadd.f32 %v215, %v435
      %437 = vmatmul.bf16.gmra.mxu0 %v356
      %v438 = vpop.f32.mrf.mxu0
      %v439 = vadd.f32 %v215, %v438
      %v440 = vpop.f32.mrf.mxu0
      %v441 = vadd.f32 %v215, %v440
      %442 = vmatmul.bf16.gmra.mxu0 %v359
      %v443 = vpop.f32.mrf.mxu0
      %v444 = vadd.f32 %v215, %v443
      %v445 = vpop.f32.mrf.mxu0
      %v446 = vadd.f32 %v215, %v445
      %447 = vmatmul.bf16.gmra.mxu0 %v362
      %v448 = vpop.f32.mrf.mxu0
      %v449 = vadd.f32 %v215, %v448
      %v450 = vpop.f32.mrf.mxu0
      %v451 = vadd.f32 %v215, %v450
      %452 = vdwg.mxu0
      %v453 = vmax.f32 %v374, 0.0
      %v454 = vmax.f32 %v376, 0.0
      %v455 = vmax.f32 %v379, 0.0
      %v456 = vmax.f32 %v381, 0.0
      %v457 = vmax.f32 %v384, 0.0
      %v458 = vmax.f32 %v386, 0.0
      %v459 = vmax.f32 %v389, 0.0
      %v460 = vmax.f32 %v391, 0.0
      %v461 = vmax.f32 %v394, 0.0
      %v462 = vmax.f32 %v396, 0.0
      %v463 = vmax.f32 %v399, 0.0
      %v464 = vmax.f32 %v401, 0.0
      %v465 = vmax.f32 %v404, 0.0
      %v466 = vmax.f32 %v406, 0.0
      %v467 = vmax.f32 %v409, 0.0
      %v468 = vmax.f32 %v411, 0.0
      %v469 = vmax.f32 %v414, 0.0
      %v470 = vmax.f32 %v416, 0.0
      %v471 = vmax.f32 %v419, 0.0
      %v472 = vmax.f32 %v421, 0.0
      %v473 = vmax.f32 %v424, 0.0
      %v474 = vmax.f32 %v426, 0.0
      %v475 = vmax.f32 %v429, 0.0
      %v476 = vmax.f32 %v431, 0.0
      %v477 = vmax.f32 %v434, 0.0
      %v478 = vmax.f32 %v436, 0.0
      %v479 = vmax.f32 %v439, 0.0
      %v480 = vmax.f32 %v441, 0.0
      %v481 = vmax.f32 %v444, 0.0
      %v482 = vmax.f32 %v446, 0.0
      %v483 = vmax.f32 %v449, 0.0
      %v484 = vmax.f32 %v451, 0.0
      %v485 = vpack.c.bf16 %v453, %v453
      %v486 = vpack.c.bf16 %v454, %v454
      %v487 = vpack.c.bf16 %v455, %v455
      %v488 = vpack.c.bf16 %v456, %v456
      %v489 = vpack.c.bf16 %v457, %v457
      %v490 = vpack.c.bf16 %v458, %v458
      %v491 = vpack.c.bf16 %v459, %v459
      %v492 = vpack.c.bf16 %v460, %v460
      %v493 = vpack.c.bf16 %v461, %v461
      %v494 = vpack.c.bf16 %v462, %v462
      %v495 = vpack.c.bf16 %v463, %v463
      %v496 = vpack.c.bf16 %v464, %v464
      %v497 = vpack.c.bf16 %v465, %v465
      %v498 = vpack.c.bf16 %v466, %v466
      %v499 = vpack.c.bf16 %v467, %v467
      %v500 = vpack.c.bf16 %v468, %v468
      %v501 = vpack.c.bf16 %v469, %v469
      %v502 = vpack.c.bf16 %v470, %v470
      %v503 = vpack.c.bf16 %v471, %v471
      %v504 = vpack.c.bf16 %v472, %v472
      %v505 = vpack.c.bf16 %v473, %v473
      %v506 = vpack.c.bf16 %v474, %v474
      %v507 = vpack.c.bf16 %v475, %v475
      %v508 = vpack.c.bf16 %v476, %v476
      %v509 = vpack.c.bf16 %v477, %v477
      %v510 = vpack.c.bf16 %v478, %v478
      %v511 = vpack.c.bf16 %v479, %v479
      %v512 = vpack.c.bf16 %v480, %v480
      %v513 = vpack.c.bf16 %v481, %v481
      %v514 = vpack.c.bf16 %v482, %v482
      %v515 = vpack.c.bf16 %v483, %v483
      %v516 = vpack.c.bf16 %v484, %v484
      %517 = vst [vmem:[%s172] sm:$0xf] %v485
      %518 = vst [vmem:[%s172 + $0x4] sm:$0xf] %v486
      %519 = vst [vmem:[%s172 + $0x8] sm:$0xf] %v487
      %520 = vst [vmem:[%s172 + $0xc] sm:$0xf] %v488
      %521 = vst [vmem:[%s172 + $0x10] sm:$0xf] %v489
      %522 = vst [vmem:[%s172 + $0x14] sm:$0xf] %v490
      %523 = vst [vmem:[%s172 + $0x18] sm:$0xf] %v491
      %524 = vst [vmem:[%s172 + $0x1c] sm:$0xf] %v492
      %525 = vst [vmem:[%s172 + $0x20] sm:$0xf] %v493
      %526 = vst [vmem:[%s172 + $0x24] sm:$0xf] %v494
      %527 = vst [vmem:[%s172 + $0x28] sm:$0xf] %v495
      %528 = vst [vmem:[%s172 + $0x2c] sm:$0xf] %v496
      %529 = vst [vmem:[%s172 + $0x30] sm:$0xf] %v497
      %530 = vst [vmem:[%s172 + $0x34] sm:$0xf] %v498
      %531 = vst [vmem:[%s172 + $0x38] sm:$0xf] %v499
      %532 = vst [vmem:[%s172 + $0x3c] sm:$0xf] %v500
      %533 = vst [vmem:[%s172 + $0x40] sm:$0xf] %v501
      %534 = vst [vmem:[%s172 + $0x44] sm:$0xf] %v502
      %535 = vst [vmem:[%s172 + $0x48] sm:$0xf] %v503
      %536 = vst [vmem:[%s172 + $0x4c] sm:$0xf] %v504
      %537 = vst [vmem:[%s172 + $0x50] sm:$0xf] %v505
      %538 = vst [vmem:[%s172 + $0x54] sm:$0xf] %v506
      %539 = vst [vmem:[%s172 + $0x58] sm:$0xf] %v507
      %540 = vst [vmem:[%s172 + $0x5c] sm:$0xf] %v508
      %541 = vst [vmem:[%s172 + $0x60] sm:$0xf] %v509
      %542 = vst [vmem:[%s172 + $0x64] sm:$0xf] %v510
      %543 = vst [vmem:[%s172 + $0x68] sm:$0xf] %v511
      %544 = vst [vmem:[%s172 + $0x6c] sm:$0xf] %v512
      %545 = vst [vmem:[%s172 + $0x70] sm:$0xf] %v513
      %546 = vst [vmem:[%s172 + $0x74] sm:$0xf] %v514
      %547 = vst [vmem:[%s172 + $0x78] sm:$0xf] %v515
      %548 = vst [vmem:[%s172 + $0x7c] sm:$0xf] %v516
      %s549 = smul.u32 32, %s14
      %p550 = scmp.lt.s32.totalorder %s549, 63
      %s551 = scalar_select %p550, %s549, 63
      %s552 = smul.addr %s551, 4
      %s553 = scalar_lea.vmem %s3, %s552
      // Predicated region
      $region33: #{svhn_encoder_forward.4} parent=31 // pred_check
        %p554 = pneg %p100
      $region34: #{svhn_encoder_forward.4} parent=31 // pred_check_branch
        %556 = sbr.rel (%p554) target = $region36
      $region35: #{svhn_encoder_forward.4} parent=31 // pred_region
        %s557 = smul.u32 32, %s14
      $region36: #{svhn_encoder_forward.4} parent=31 // pred_fallthru
        _
    $region32: #{svhn_encoder_forward.4} parent=5 // pred_fallthru
      _
    %p558 = scmp.le.s32.totalorder 2, %s9
    // Predicated region
    $region37: #{svhn_encoder_forward.4} parent=5 // pred_check
      %p559 = pneg %p558
    $region38: #{svhn_encoder_forward.4} parent=5 // pred_check_branch
      %561 = sbr.rel (%p559) target = $region40
    $region39: #{svhn_encoder_forward.4} parent=5 // pred_region
      %s562 = ssub.s32 %s9, 2
      // Predicated region
      $region41: #{svhn_encoder_forward.4} parent=39 // pred_check
        %p563 = pneg %p106
      $region42: #{svhn_encoder_forward.4} parent=39 // pred_check_branch
        %565 = sbr.rel (%p563) target = $region44
      $region43: #{svhn_encoder_forward.4} parent=39 // pred_region
        %s566 = smul.u32 32, %s15
        %p567 = scmp.lt.s32.totalorder %s566, 63
        %s568 = scalar_select %p567, %s566, 63
        %s569 = smul.addr %s568, 4
        %s570 = scalar_lea.vmem %s3, %s569
      $region44: #{svhn_encoder_forward.4} parent=39 // pred_fallthru
        _
    $region40: #{svhn_encoder_forward.4} parent=5 // pred_fallthru
      _
  $region6: #{svhn_encoder_forward.4} parent=0 // loop_footer
    %s13 = sadd.s32 1, %s9
  $region7: #{svhn_encoder_forward.4} parent=0 // loop_footer_branch
    %8 = sbr.rel target = $region3
  $region8: #{svhn_encoder_forward.4} parent=0 // loop_exit
    _

// kernel: svhn_encoder_forward.5
$region0: #{svhn_encoder_forward.5}
  #allocation0 [shape = 'u32[]', space=smem, size = 0x4, offset = 0x4, fixed_abs, tag = 'smem constant byte address 0x4 - core index']
  #allocation1 [shape = 'u32[72,128]{1,0:T(1,128)}', space=vmem, size = 0x9000, scoped, tag = 'internal scratch']
  %s0 = inlined_call_operand.vmem [shape: bf16[128,2048], index: 0, kind: input, shape index: {}]
  %s1 = inlined_call_operand.vmem [shape: bf16[2048,128], index: 1, kind: input, shape index: {}]
  %s2 = inlined_call_operand.vmem [shape: f32[1,128], index: 2, kind: input, shape index: {}]
  %s3 = inlined_call_operand.vmem [shape: bf16[128,128], index: 3, kind: output, shape index: {}]
  %s4 = sld [smem:[#allocation0]]
  $region22: #{svhn_encoder_forward.5} parent=0
    _
  %s6 = ssub.s32 1, %s4
  %s7 = scalar_select 0, %s6, %s4
  // Predicated region
  $region2: #{svhn_encoder_forward.5} parent=0 // pred_check
    _
  $region3: #{svhn_encoder_forward.5} parent=0 // pred_check_branch
    %9 = sbr.rel (0) target = $region5
  $region4: #{svhn_encoder_forward.5} parent=0 // pred_region
    _
  $region5: #{svhn_encoder_forward.5} parent=0 // pred_fallthru
    _
  // Predicated region
  $region6: #{svhn_encoder_forward.5} parent=0 // pred_check
    _
  $region7: #{svhn_encoder_forward.5} parent=0 // pred_check_branch
    %11 = sbr.rel (0) target = $region9
  $region8: #{svhn_encoder_forward.5} parent=0 // pred_region
    _
  $region9: #{svhn_encoder_forward.5} parent=0 // pred_fallthru
    _
  // Predicated region
  $region10: #{svhn_encoder_forward.5} parent=0 // pred_check
    _
  $region11: #{svhn_encoder_forward.5} parent=0 // pred_check_branch
    %13 = sbr.rel (0) target = $region13
  $region12: #{svhn_encoder_forward.5} parent=0 // pred_region
    _
  $region13: #{svhn_encoder_forward.5} parent=0 // pred_fallthru
    _
  %v14 = vld [vmem:[%s0] sm:$0xff]
  %v15 = vld [vmem:[%s0 + $0x8] sm:$0xff]
  %v16 = vld [vmem:[%s0 + $0x10] sm:$0xff]
  %v17 = vld [vmem:[%s0 + $0x18] sm:$0xff]
  %v18 = vld [vmem:[%s0 + $0x20] sm:$0xff]
  %v19 = vld [vmem:[%s0 + $0x28] sm:$0xff]
  %v20 = vld [vmem:[%s0 + $0x30] sm:$0xff]
  %v21 = vld [vmem:[%s0 + $0x38] sm:$0xff]
  %v22 = vld [vmem:[%s0 + $0x40] sm:$0xff]
  %v23 = vld [vmem:[%s0 + $0x48] sm:$0xff]
  %v24 = vld [vmem:[%s0 + $0x50] sm:$0xff]
  %v25 = vld [vmem:[%s0 + $0x58] sm:$0xff]
  %v26 = vld [vmem:[%s0 + $0x60] sm:$0xff]
  %v27 = vld [vmem:[%s0 + $0x68] sm:$0xff]
  %v28 = vld [vmem:[%s0 + $0x70] sm:$0xff]
  %v29 = vld [vmem:[%s0 + $0x78] sm:$0xff]
  %v30 = vld [vmem:[%s0 + $0x80] sm:$0xff]
  %v31 = vld [vmem:[%s0 + $0x88] sm:$0xff]
  %v32 = vld [vmem:[%s0 + $0x90] sm:$0xff]
  %v33 = vld [vmem:[%s0 + $0x98] sm:$0xff]
  %v34 = vld [vmem:[%s0 + $0xa0] sm:$0xff]
  %v35 = vld [vmem:[%s0 + $0xa8] sm:$0xff]
  %v36 = vld [vmem:[%s0 + $0xb0] sm:$0xff]
  %v37 = vld [vmem:[%s0 + $0xb8] sm:$0xff]
  %v38 = vld [vmem:[%s0 + $0xc0] sm:$0xff]
  %v39 = vld [vmem:[%s0 + $0xc8] sm:$0xff]
  %v40 = vld [vmem:[%s0 + $0xd0] sm:$0xff]
  %v41 = vld [vmem:[%s0 + $0xd8] sm:$0xff]
  %v42 = vld [vmem:[%s0 + $0xe0] sm:$0xff]
  %v43 = vld [vmem:[%s0 + $0xe8] sm:$0xff]
  %v44 = vld [vmem:[%s0 + $0xf0] sm:$0xff]
  %v45 = vld [vmem:[%s0 + $0xf8] sm:$0xff]
  %v46 = vld [vmem:[%s0 + $0x100] sm:$0xff]
  %v47 = vld [vmem:[%s0 + $0x108] sm:$0xff]
  %v48 = vld [vmem:[%s0 + $0x110] sm:$0xff]
  %v49 = vld [vmem:[%s0 + $0x118] sm:$0xff]
  %v50 = vld [vmem:[%s0 + $0x120] sm:$0xff]
  %v51 = vld [vmem:[%s0 + $0x128] sm:$0xff]
  %v52 = vld [vmem:[%s0 + $0x130] sm:$0xff]
  %v53 = vld [vmem:[%s0 + $0x138] sm:$0xff]
  %v54 = vld [vmem:[%s0 + $0x140] sm:$0xff]
  %v55 = vld [vmem:[%s0 + $0x148] sm:$0xff]
  %v56 = vld [vmem:[%s0 + $0x150] sm:$0xff]
  %v57 = vld [vmem:[%s0 + $0x158] sm:$0xff]
  %v58 = vld [vmem:[%s0 + $0x160] sm:$0xff]
  %v59 = vld [vmem:[%s0 + $0x168] sm:$0xff]
  %v60 = vld [vmem:[%s0 + $0x170] sm:$0xff]
  %v61 = vld [vmem:[%s0 + $0x178] sm:$0xff]
  %v62 = vld [vmem:[%s0 + $0x180] sm:$0xff]
  %v63 = vld [vmem:[%s0 + $0x188] sm:$0xff]
  %v64 = vld [vmem:[%s0 + $0x190] sm:$0xff]
  %v65 = vld [vmem:[%s0 + $0x198] sm:$0xff]
  %v66 = vld [vmem:[%s0 + $0x1a0] sm:$0xff]
  %v67 = vld [vmem:[%s0 + $0x1a8] sm:$0xff]
  %v68 = vld [vmem:[%s0 + $0x1b0] sm:$0xff]
  %v69 = vld [vmem:[%s0 + $0x1b8] sm:$0xff]
  %v70 = vld [vmem:[%s0 + $0x1c0] sm:$0xff]
  %v71 = vld [vmem:[%s0 + $0x1c8] sm:$0xff]
  %v72 = vld [vmem:[%s0 + $0x1d0] sm:$0xff]
  %v73 = vld [vmem:[%s0 + $0x1d8] sm:$0xff]
  %v74 = vld [vmem:[%s0 + $0x1e0] sm:$0xff]
  %v75 = vld [vmem:[%s0 + $0x1e8] sm:$0xff]
  %v76 = vld [vmem:[%s0 + $0x1f0] sm:$0xff]
  %v77 = vld [vmem:[%s0 + $0x1f8] sm:$0xff]
  %v78 = vld [vmem:[%s0 + $0x200] sm:$0xff]
  %v79 = vld [vmem:[%s0 + $0x208] sm:$0xff]
  %v80 = vld [vmem:[%s0 + $0x210] sm:$0xff]
  %v81 = vld [vmem:[%s0 + $0x218] sm:$0xff]
  %v82 = vld [vmem:[%s0 + $0x220] sm:$0xff]
  %v83 = vld [vmem:[%s0 + $0x228] sm:$0xff]
  %v84 = vld [vmem:[%s0 + $0x230] sm:$0xff]
  %v85 = vld [vmem:[%s0 + $0x238] sm:$0xff]
  %v86 = vld [vmem:[%s0 + $0x240] sm:$0xff]
  %v87 = vld [vmem:[%s0 + $0x248] sm:$0xff]
  %v88 = vld [vmem:[%s0 + $0x250] sm:$0xff]
  %v89 = vld [vmem:[%s0 + $0x258] sm:$0xff]
  %v90 = vld [vmem:[%s0 + $0x260] sm:$0xff]
  %v91 = vld [vmem:[%s0 + $0x268] sm:$0xff]
  %v92 = vld [vmem:[%s0 + $0x270] sm:$0xff]
  %v93 = vld [vmem:[%s0 + $0x278] sm:$0xff]
  %v94 = vld [vmem:[%s0 + $0x280] sm:$0xff]
  %v95 = vld [vmem:[%s0 + $0x288] sm:$0xff]
  %v96 = vld [vmem:[%s0 + $0x290] sm:$0xff]
  %v97 = vld [vmem:[%s0 + $0x298] sm:$0xff]
  %v98 = vld [vmem:[%s0 + $0x2a0] sm:$0xff]
  %v99 = vld [vmem:[%s0 + $0x2a8] sm:$0xff]
  %v100 = vld [vmem:[%s0 + $0x2b0] sm:$0xff]
  %v101 = vld [vmem:[%s0 + $0x2b8] sm:$0xff]
  %v102 = vld [vmem:[%s0 + $0x2c0] sm:$0xff]
  %v103 = vld [vmem:[%s0 + $0x2c8] sm:$0xff]
  %v104 = vld [vmem:[%s0 + $0x2d0] sm:$0xff]
  %v105 = vld [vmem:[%s0 + $0x2d8] sm:$0xff]
  %v106 = vld [vmem:[%s0 + $0x2e0] sm:$0xff]
  %v107 = vld [vmem:[%s0 + $0x2e8] sm:$0xff]
  %v108 = vld [vmem:[%s0 + $0x2f0] sm:$0xff]
  %v109 = vld [vmem:[%s0 + $0x2f8] sm:$0xff]
  %v110 = vld [vmem:[%s0 + $0x300] sm:$0xff]
  %v111 = vld [vmem:[%s0 + $0x308] sm:$0xff]
  %v112 = vld [vmem:[%s0 + $0x310] sm:$0xff]
  %v113 = vld [vmem:[%s0 + $0x318] sm:$0xff]
  %v114 = vld [vmem:[%s0 + $0x320] sm:$0xff]
  %v115 = vld [vmem:[%s0 + $0x328] sm:$0xff]
  %v116 = vld [vmem:[%s0 + $0x330] sm:$0xff]
  %v117 = vld [vmem:[%s0 + $0x338] sm:$0xff]
  %v118 = vld [vmem:[%s0 + $0x340] sm:$0xff]
  %v119 = vld [vmem:[%s0 + $0x348] sm:$0xff]
  %v120 = vld [vmem:[%s0 + $0x350] sm:$0xff]
  %v121 = vld [vmem:[%s0 + $0x358] sm:$0xff]
  %v122 = vld [vmem:[%s0 + $0x360] sm:$0xff]
  %v123 = vld [vmem:[%s0 + $0x368] sm:$0xff]
  %v124 = vld [vmem:[%s0 + $0x370] sm:$0xff]
  %v125 = vld [vmem:[%s0 + $0x378] sm:$0xff]
  %v126 = vld [vmem:[%s0 + $0x380] sm:$0xff]
  %v127 = vld [vmem:[%s0 + $0x388] sm:$0xff]
  %v128 = vld [vmem:[%s0 + $0x390] sm:$0xff]
  %v129 = vld [vmem:[%s0 + $0x398] sm:$0xff]
  %v130 = vld [vmem:[%s0 + $0x3a0] sm:$0xff]
  %v131 = vld [vmem:[%s0 + $0x3a8] sm:$0xff]
  %v132 = vld [vmem:[%s0 + $0x3b0] sm:$0xff]
  %v133 = vld [vmem:[%s0 + $0x3b8] sm:$0xff]
  %v134 = vld [vmem:[%s0 + $0x3c0] sm:$0xff]
  %v135 = vld [vmem:[%s0 + $0x3c8] sm:$0xff]
  %v136 = vld [vmem:[%s0 + $0x3d0] sm:$0xff]
  %v137 = vld [vmem:[%s0 + $0x3d8] sm:$0xff]
  %v138 = vld [vmem:[%s0 + $0x3e0] sm:$0xff]
  %v139 = vld [vmem:[%s0 + $0x3e8] sm:$0xff]
  %v140 = vld [vmem:[%s0 + $0x3f0] sm:$0xff]
  %v141 = vld [vmem:[%s0 + $0x3f8] sm:$0xff]
  %v142 = vld [vmem:[%s1] sm:$0xf]
  %v143 = vld [vmem:[%s1 + $0x4] sm:$0xf]
  %v144 = vld [vmem:[%s1 + $0x8] sm:$0xf]
  %v145 = vld [vmem:[%s1 + $0xc] sm:$0xf]
  %v146 = vld [vmem:[%s1 + $0x10] sm:$0xf]
  %v147 = vld [vmem:[%s1 + $0x14] sm:$0xf]
  %v148 = vld [vmem:[%s1 + $0x18] sm:$0xf]
  %v149 = vld [vmem:[%s1 + $0x1c] sm:$0xf]
  %v150 = vld [vmem:[%s1 + $0x20] sm:$0xf]
  %v151 = vld [vmem:[%s1 + $0x24] sm:$0xf]
  %v152 = vld [vmem:[%s1 + $0x28] sm:$0xf]
  %v153 = vld [vmem:[%s1 + $0x2c] sm:$0xf]
  %v154 = vld [vmem:[%s1 + $0x30] sm:$0xf]
  %v155 = vld [vmem:[%s1 + $0x34] sm:$0xf]
  %v156 = vld [vmem:[%s1 + $0x38] sm:$0xf]
  %v157 = vld [vmem:[%s1 + $0x3c] sm:$0xf]
  %v158 = vld [vmem:[%s1 + $0x40] sm:$0xf]
  %v159 = vld [vmem:[%s1 + $0x44] sm:$0xf]
  %v160 = vld [vmem:[%s1 + $0x48] sm:$0xf]
  %v161 = vld [vmem:[%s1 + $0x4c] sm:$0xf]
  %v162 = vld [vmem:[%s1 + $0x50] sm:$0xf]
  %v163 = vld [vmem:[%s1 + $0x54] sm:$0xf]
  %v164 = vld [vmem:[%s1 + $0x58] sm:$0xf]
  %v165 = vld [vmem:[%s1 + $0x5c] sm:$0xf]
  %v166 = vld [vmem:[%s1 + $0x60] sm:$0xf]
  %v167 = vld [vmem:[%s1 + $0x64] sm:$0xf]
  %v168 = vld [vmem:[%s1 + $0x68] sm:$0xf]
  %v169 = vld [vmem:[%s1 + $0x6c] sm:$0xf]
  %v170 = vld [vmem:[%s1 + $0x70] sm:$0xf]
  %v171 = vld [vmem:[%s1 + $0x74] sm:$0xf]
  %v172 = vld [vmem:[%s1 + $0x78] sm:$0xf]
  %v173 = vld [vmem:[%s1 + $0x7c] sm:$0xf]
  %v174 = vld [vmem:[%s1 + $0x80] sm:$0xf]
  %v175 = vld [vmem:[%s1 + $0x84] sm:$0xf]
  %v176 = vld [vmem:[%s1 + $0x88] sm:$0xf]
  %v177 = vld [vmem:[%s1 + $0x8c] sm:$0xf]
  %v178 = vld [vmem:[%s1 + $0x90] sm:$0xf]
  %v179 = vld [vmem:[%s1 + $0x94] sm:$0xf]
  %v180 = vld [vmem:[%s1 + $0x98] sm:$0xf]
  %v181 = vld [vmem:[%s1 + $0x9c] sm:$0xf]
  %v182 = vld [vmem:[%s1 + $0xa0] sm:$0xf]
  %v183 = vld [vmem:[%s1 + $0xa4] sm:$0xf]
  %v184 = vld [vmem:[%s1 + $0xa8] sm:$0xf]
  %v185 = vld [vmem:[%s1 + $0xac] sm:$0xf]
  %v186 = vld [vmem:[%s1 + $0xb0] sm:$0xf]
  %v187 = vld [vmem:[%s1 + $0xb4] sm:$0xf]
  %v188 = vld [vmem:[%s1 + $0xb8] sm:$0xf]
  %v189 = vld [vmem:[%s1 + $0xbc] sm:$0xf]
  %v190 = vld [vmem:[%s1 + $0xc0] sm:$0xf]
  %v191 = vld [vmem:[%s1 + $0xc4] sm:$0xf]
  %v192 = vld [vmem:[%s1 + $0xc8] sm:$0xf]
  %v193 = vld [vmem:[%s1 + $0xcc] sm:$0xf]
  %v194 = vld [vmem:[%s1 + $0xd0] sm:$0xf]
  %v195 = vld [vmem:[%s1 + $0xd4] sm:$0xf]
  %v196 = vld [vmem:[%s1 + $0xd8] sm:$0xf]
  %v197 = vld [vmem:[%s1 + $0xdc] sm:$0xf]
  %v198 = vld [vmem:[%s1 + $0xe0] sm:$0xf]
  %v199 = vld [vmem:[%s1 + $0xe4] sm:$0xf]
  %v200 = vld [vmem:[%s1 + $0xe8] sm:$0xf]
  %v201 = vld [vmem:[%s1 + $0xec] sm:$0xf]
  %v202 = vld [vmem:[%s1 + $0xf0] sm:$0xf]
  %v203 = vld [vmem:[%s1 + $0xf4] sm:$0xf]
  %v204 = vld [vmem:[%s1 + $0xf8] sm:$0xf]
  %v205 = vld [vmem:[%s1 + $0xfc] sm:$0xf]
  %v206 = vld [vmem:[%s1 + $0x100] sm:$0xf]
  %v207 = vld [vmem:[%s1 + $0x104] sm:$0xf]
  %v208 = vld [vmem:[%s1 + $0x108] sm:$0xf]
  %v209 = vld [vmem:[%s1 + $0x10c] sm:$0xf]
  %v210 = vld [vmem:[%s1 + $0x110] sm:$0xf]
  %v211 = vld [vmem:[%s1 + $0x114] sm:$0xf]
  %v212 = vld [vmem:[%s1 + $0x118] sm:$0xf]
  %v213 = vld [vmem:[%s1 + $0x11c] sm:$0xf]
  %v214 = vld [vmem:[%s1 + $0x120] sm:$0xf]
  %v215 = vld [vmem:[%s1 + $0x124] sm:$0xf]
  %v216 = vld [vmem:[%s1 + $0x128] sm:$0xf]
  %v217 = vld [vmem:[%s1 + $0x12c] sm:$0xf]
  %v218 = vld [vmem:[%s1 + $0x130] sm:$0xf]
  %v219 = vld [vmem:[%s1 + $0x134] sm:$0xf]
  %v220 = vld [vmem:[%s1 + $0x138] sm:$0xf]
  %v221 = vld [vmem:[%s1 + $0x13c] sm:$0xf]
  %v222 = vld [vmem:[%s1 + $0x140] sm:$0xf]
  %v223 = vld [vmem:[%s1 + $0x144] sm:$0xf]
  %v224 = vld [vmem:[%s1 + $0x148] sm:$0xf]
  %v225 = vld [vmem:[%s1 + $0x14c] sm:$0xf]
  %v226 = vld [vmem:[%s1 + $0x150] sm:$0xf]
  %v227 = vld [vmem:[%s1 + $0x154] sm:$0xf]
  %v228 = vld [vmem:[%s1 + $0x158] sm:$0xf]
  %v229 = vld [vmem:[%s1 + $0x15c] sm:$0xf]
  %v230 = vld [vmem:[%s1 + $0x160] sm:$0xf]
  %v231 = vld [vmem:[%s1 + $0x164] sm:$0xf]
  %v232 = vld [vmem:[%s1 + $0x168] sm:$0xf]
  %v233 = vld [vmem:[%s1 + $0x16c] sm:$0xf]
  %v234 = vld [vmem:[%s1 + $0x170] sm:$0xf]
  %v235 = vld [vmem:[%s1 + $0x174] sm:$0xf]
  %v236 = vld [vmem:[%s1 + $0x178] sm:$0xf]
  %v237 = vld [vmem:[%s1 + $0x17c] sm:$0xf]
  %v238 = vld [vmem:[%s1 + $0x180] sm:$0xf]
  %v239 = vld [vmem:[%s1 + $0x184] sm:$0xf]
  %v240 = vld [vmem:[%s1 + $0x188] sm:$0xf]
  %v241 = vld [vmem:[%s1 + $0x18c] sm:$0xf]
  %v242 = vld [vmem:[%s1 + $0x190] sm:$0xf]
  %v243 = vld [vmem:[%s1 + $0x194] sm:$0xf]
  %v244 = vld [vmem:[%s1 + $0x198] sm:$0xf]
  %v245 = vld [vmem:[%s1 + $0x19c] sm:$0xf]
  %v246 = vld [vmem:[%s1 + $0x1a0] sm:$0xf]
  %v247 = vld [vmem:[%s1 + $0x1a4] sm:$0xf]
  %v248 = vld [vmem:[%s1 + $0x1a8] sm:$0xf]
  %v249 = vld [vmem:[%s1 + $0x1ac] sm:$0xf]
  %v250 = vld [vmem:[%s1 + $0x1b0] sm:$0xf]
  %v251 = vld [vmem:[%s1 + $0x1b4] sm:$0xf]
  %v252 = vld [vmem:[%s1 + $0x1b8] sm:$0xf]
  %v253 = vld [vmem:[%s1 + $0x1bc] sm:$0xf]
  %v254 = vld [vmem:[%s1 + $0x1c0] sm:$0xf]
  %v255 = vld [vmem:[%s1 + $0x1c4] sm:$0xf]
  %v256 = vld [vmem:[%s1 + $0x1c8] sm:$0xf]
  %v257 = vld [vmem:[%s1 + $0x1cc] sm:$0xf]
  %v258 = vld [vmem:[%s1 + $0x1d0] sm:$0xf]
  %v259 = vld [vmem:[%s1 + $0x1d4] sm:$0xf]
  %v260 = vld [vmem:[%s1 + $0x1d8] sm:$0xf]
  %v261 = vld [vmem:[%s1 + $0x1dc] sm:$0xf]
  %v262 = vld [vmem:[%s1 + $0x1e0] sm:$0xf]
  %v263 = vld [vmem:[%s1 + $0x1e4] sm:$0xf]
  %v264 = vld [vmem:[%s1 + $0x1e8] sm:$0xf]
  %v265 = vld [vmem:[%s1 + $0x1ec] sm:$0xf]
  %v266 = vld [vmem:[%s1 + $0x1f0] sm:$0xf]
  %v267 = vld [vmem:[%s1 + $0x1f4] sm:$0xf]
  %v268 = vld [vmem:[%s1 + $0x1f8] sm:$0xf]
  %v269 = vld [vmem:[%s1 + $0x1fc] sm:$0xf]
  %v270 = vld [vmem:[%s1 + $0x200] sm:$0xf]
  %v271 = vld [vmem:[%s1 + $0x204] sm:$0xf]
  %v272 = vld [vmem:[%s1 + $0x208] sm:$0xf]
  %v273 = vld [vmem:[%s1 + $0x20c] sm:$0xf]
  %v274 = vld [vmem:[%s1 + $0x210] sm:$0xf]
  %v275 = vld [vmem:[%s1 + $0x214] sm:$0xf]
  %v276 = vld [vmem:[%s1 + $0x218] sm:$0xf]
  %v277 = vld [vmem:[%s1 + $0x21c] sm:$0xf]
  %v278 = vld [vmem:[%s1 + $0x220] sm:$0xf]
  %v279 = vld [vmem:[%s1 + $0x224] sm:$0xf]
  %v280 = vld [vmem:[%s1 + $0x228] sm:$0xf]
  %v281 = vld [vmem:[%s1 + $0x22c] sm:$0xf]
  %v282 = vld [vmem:[%s1 + $0x230] sm:$0xf]
  %v283 = vld [vmem:[%s1 + $0x234] sm:$0xf]
  %v284 = vld [vmem:[%s1 + $0x238] sm:$0xf]
  %v285 = vld [vmem:[%s1 + $0x23c] sm:$0xf]
  %v286 = vld [vmem:[%s1 + $0x240] sm:$0xf]
  %v287 = vld [vmem:[%s1 + $0x244] sm:$0xf]
  %v288 = vld [vmem:[%s1 + $0x248] sm:$0xf]
  %v289 = vld [vmem:[%s1 + $0x24c] sm:$0xf]
  %v290 = vld [vmem:[%s1 + $0x250] sm:$0xf]
  %v291 = vld [vmem:[%s1 + $0x254] sm:$0xf]
  %v292 = vld [vmem:[%s1 + $0x258] sm:$0xf]
  %v293 = vld [vmem:[%s1 + $0x25c] sm:$0xf]
  %v294 = vld [vmem:[%s1 + $0x260] sm:$0xf]
  %v295 = vld [vmem:[%s1 + $0x264] sm:$0xf]
  %v296 = vld [vmem:[%s1 + $0x268] sm:$0xf]
  %v297 = vld [vmem:[%s1 + $0x26c] sm:$0xf]
  %v298 = vld [vmem:[%s1 + $0x270] sm:$0xf]
  %v299 = vld [vmem:[%s1 + $0x274] sm:$0xf]
  %v300 = vld [vmem:[%s1 + $0x278] sm:$0xf]
  %v301 = vld [vmem:[%s1 + $0x27c] sm:$0xf]
  %v302 = vld [vmem:[%s1 + $0x280] sm:$0xf]
  %v303 = vld [vmem:[%s1 + $0x284] sm:$0xf]
  %v304 = vld [vmem:[%s1 + $0x288] sm:$0xf]
  %v305 = vld [vmem:[%s1 + $0x28c] sm:$0xf]
  %v306 = vld [vmem:[%s1 + $0x290] sm:$0xf]
  %v307 = vld [vmem:[%s1 + $0x294] sm:$0xf]
  %v308 = vld [vmem:[%s1 + $0x298] sm:$0xf]
  %v309 = vld [vmem:[%s1 + $0x29c] sm:$0xf]
  %v310 = vld [vmem:[%s1 + $0x2a0] sm:$0xf]
  %v311 = vld [vmem:[%s1 + $0x2a4] sm:$0xf]
  %v312 = vld [vmem:[%s1 + $0x2a8] sm:$0xf]
  %v313 = vld [vmem:[%s1 + $0x2ac] sm:$0xf]
  %v314 = vld [vmem:[%s1 + $0x2b0] sm:$0xf]
  %v315 = vld [vmem:[%s1 + $0x2b4] sm:$0xf]
  %v316 = vld [vmem:[%s1 + $0x2b8] sm:$0xf]
  %v317 = vld [vmem:[%s1 + $0x2bc] sm:$0xf]
  %v318 = vld [vmem:[%s1 + $0x2c0] sm:$0xf]
  %v319 = vld [vmem:[%s1 + $0x2c4] sm:$0xf]
  %v320 = vld [vmem:[%s1 + $0x2c8] sm:$0xf]
  %v321 = vld [vmem:[%s1 + $0x2cc] sm:$0xf]
  %v322 = vld [vmem:[%s1 + $0x2d0] sm:$0xf]
  %v323 = vld [vmem:[%s1 + $0x2d4] sm:$0xf]
  %v324 = vld [vmem:[%s1 + $0x2d8] sm:$0xf]
  %v325 = vld [vmem:[%s1 + $0x2dc] sm:$0xf]
  %v326 = vld [vmem:[%s1 + $0x2e0] sm:$0xf]
  %v327 = vld [vmem:[%s1 + $0x2e4] sm:$0xf]
  %v328 = vld [vmem:[%s1 + $0x2e8] sm:$0xf]
  %v329 = vld [vmem:[%s1 + $0x2ec] sm:$0xf]
  %v330 = vld [vmem:[%s1 + $0x2f0] sm:$0xf]
  %v331 = vld [vmem:[%s1 + $0x2f4] sm:$0xf]
  %v332 = vld [vmem:[%s1 + $0x2f8] sm:$0xf]
  %v333 = vld [vmem:[%s1 + $0x2fc] sm:$0xf]
  %v334 = vld [vmem:[%s1 + $0x300] sm:$0xf]
  %v335 = vld [vmem:[%s1 + $0x304] sm:$0xf]
  %v336 = vld [vmem:[%s1 + $0x308] sm:$0xf]
  %v337 = vld [vmem:[%s1 + $0x30c] sm:$0xf]
  %v338 = vld [vmem:[%s1 + $0x310] sm:$0xf]
  %v339 = vld [vmem:[%s1 + $0x314] sm:$0xf]
  %v340 = vld [vmem:[%s1 + $0x318] sm:$0xf]
  %v341 = vld [vmem:[%s1 + $0x31c] sm:$0xf]
  %v342 = vld [vmem:[%s1 + $0x320] sm:$0xf]
  %v343 = vld [vmem:[%s1 + $0x324] sm:$0xf]
  %v344 = vld [vmem:[%s1 + $0x328] sm:$0xf]
  %v345 = vld [vmem:[%s1 + $0x32c] sm:$0xf]
  %v346 = vld [vmem:[%s1 + $0x330] sm:$0xf]
  %v347 = vld [vmem:[%s1 + $0x334] sm:$0xf]
  %v348 = vld [vmem:[%s1 + $0x338] sm:$0xf]
  %v349 = vld [vmem:[%s1 + $0x33c] sm:$0xf]
  %v350 = vld [vmem:[%s1 + $0x340] sm:$0xf]
  %v351 = vld [vmem:[%s1 + $0x344] sm:$0xf]
  %v352 = vld [vmem:[%s1 + $0x348] sm:$0xf]
  %v353 = vld [vmem:[%s1 + $0x34c] sm:$0xf]
  %v354 = vld [vmem:[%s1 + $0x350] sm:$0xf]
  %v355 = vld [vmem:[%s1 + $0x354] sm:$0xf]
  %v356 = vld [vmem:[%s1 + $0x358] sm:$0xf]
  %v357 = vld [vmem:[%s1 + $0x35c] sm:$0xf]
  %v358 = vld [vmem:[%s1 + $0x360] sm:$0xf]
  %v359 = vld [vmem:[%s1 + $0x364] sm:$0xf]
  %v360 = vld [vmem:[%s1 + $0x368] sm:$0xf]
  %v361 = vld [vmem:[%s1 + $0x36c] sm:$0xf]
  %v362 = vld [vmem:[%s1 + $0x370] sm:$0xf]
  %v363 = vld [vmem:[%s1 + $0x374] sm:$0xf]
  %v364 = vld [vmem:[%s1 + $0x378] sm:$0xf]
  %v365 = vld [vmem:[%s1 + $0x37c] sm:$0xf]
  %v366 = vld [vmem:[%s1 + $0x380] sm:$0xf]
  %v367 = vld [vmem:[%s1 + $0x384] sm:$0xf]
  %v368 = vld [vmem:[%s1 + $0x388] sm:$0xf]
  %v369 = vld [vmem:[%s1 + $0x38c] sm:$0xf]
  %v370 = vld [vmem:[%s1 + $0x390] sm:$0xf]
  %v371 = vld [vmem:[%s1 + $0x394] sm:$0xf]
  %v372 = vld [vmem:[%s1 + $0x398] sm:$0xf]
  %v373 = vld [vmem:[%s1 + $0x39c] sm:$0xf]
  %v374 = vld [vmem:[%s1 + $0x3a0] sm:$0xf]
  %v375 = vld [vmem:[%s1 + $0x3a4] sm:$0xf]
  %v376 = vld [vmem:[%s1 + $0x3a8] sm:$0xf]
  %v377 = vld [vmem:[%s1 + $0x3ac] sm:$0xf]
  %v378 = vld [vmem:[%s1 + $0x3b0] sm:$0xf]
  %v379 = vld [vmem:[%s1 + $0x3b4] sm:$0xf]
  %v380 = vld [vmem:[%s1 + $0x3b8] sm:$0xf]
  %v381 = vld [vmem:[%s1 + $0x3bc] sm:$0xf]
  %v382 = vld [vmem:[%s1 + $0x3c0] sm:$0xf]
  %v383 = vld [vmem:[%s1 + $0x3c4] sm:$0xf]
  %v384 = vld [vmem:[%s1 + $0x3c8] sm:$0xf]
  %v385 = vld [vmem:[%s1 + $0x3cc] sm:$0xf]
  %v386 = vld [vmem:[%s1 + $0x3d0] sm:$0xf]
  %v387 = vld [vmem:[%s1 + $0x3d4] sm:$0xf]
  %v388 = vld [vmem:[%s1 + $0x3d8] sm:$0xf]
  %v389 = vld [vmem:[%s1 + $0x3dc] sm:$0xf]
  %v390 = vld [vmem:[%s1 + $0x3e0] sm:$0xf]
  %v391 = vld [vmem:[%s1 + $0x3e4] sm:$0xf]
  %v392 = vld [vmem:[%s1 + $0x3e8] sm:$0xf]
  %v393 = vld [vmem:[%s1 + $0x3ec] sm:$0xf]
  %v394 = vld [vmem:[%s1 + $0x3f0] sm:$0xf]
  %v395 = vld [vmem:[%s1 + $0x3f4] sm:$0xf]
  %v396 = vld [vmem:[%s1 + $0x3f8] sm:$0xf]
  %v397 = vld [vmem:[%s1 + $0x3fc] sm:$0xf]
  %v398 = vld [vmem:[%s2] sm:$0x1]
  %v400 = vperm.slane %v398, 0
  %v530 = vunpack.c.l.b16 %v14
  %v531 = vunpack.c.h.b16 %v14
  %v532 = vunpack.c.l.b16 %v15
  %v533 = vunpack.c.h.b16 %v15
  %v534 = vunpack.c.l.b16 %v16
  %v535 = vunpack.c.h.b16 %v16
  %v536 = vunpack.c.l.b16 %v17
  %v537 = vunpack.c.h.b16 %v17
  %v538 = vunpack.c.l.b16 %v18
  %v539 = vunpack.c.h.b16 %v18
  %v540 = vunpack.c.l.b16 %v19
  %v541 = vunpack.c.h.b16 %v19
  %v542 = vunpack.c.l.b16 %v20
  %v543 = vunpack.c.h.b16 %v20
  %v544 = vunpack.c.l.b16 %v21
  %v545 = vunpack.c.h.b16 %v21
  %v546 = vunpack.c.l.b16 %v22
  %v547 = vunpack.c.h.b16 %v22
  %v548 = vunpack.c.l.b16 %v23
  %v549 = vunpack.c.h.b16 %v23
  %v550 = vunpack.c.l.b16 %v24
  %v551 = vunpack.c.h.b16 %v24
  %v552 = vunpack.c.l.b16 %v25
  %v553 = vunpack.c.h.b16 %v25
  %v554 = vunpack.c.l.b16 %v26
  %v555 = vunpack.c.h.b16 %v26
  %v556 = vunpack.c.l.b16 %v27
  %v557 = vunpack.c.h.b16 %v27
  %v558 = vunpack.c.l.b16 %v28
  %v559 = vunpack.c.h.b16 %v28
  %v560 = vunpack.c.l.b16 %v29
  %v561 = vunpack.c.h.b16 %v29
  %v562 = vunpack.c.l.b16 %v30
  %v563 = vunpack.c.h.b16 %v30
  %v564 = vunpack.c.l.b16 %v31
  %v565 = vunpack.c.h.b16 %v31
  %v566 = vunpack.c.l.b16 %v32
  %v567 = vunpack.c.h.b16 %v32
  %v568 = vunpack.c.l.b16 %v33
  %v569 = vunpack.c.h.b16 %v33
  %v570 = vunpack.c.l.b16 %v34
  %v571 = vunpack.c.h.b16 %v34
  %v572 = vunpack.c.l.b16 %v35
  %v573 = vunpack.c.h.b16 %v35
  %v574 = vunpack.c.l.b16 %v36
  %v575 = vunpack.c.h.b16 %v36
  %v576 = vunpack.c.l.b16 %v37
  %v577 = vunpack.c.h.b16 %v37
  %v578 = vunpack.c.l.b16 %v38
  %v579 = vunpack.c.h.b16 %v38
  %v580 = vunpack.c.l.b16 %v39
  %v581 = vunpack.c.h.b16 %v39
  %v582 = vunpack.c.l.b16 %v40
  %v583 = vunpack.c.h.b16 %v40
  %v584 = vunpack.c.l.b16 %v41
  %v585 = vunpack.c.h.b16 %v41
  %v586 = vunpack.c.l.b16 %v42
  %v587 = vunpack.c.h.b16 %v42
  %v588 = vunpack.c.l.b16 %v43
  %v589 = vunpack.c.h.b16 %v43
  %v590 = vunpack.c.l.b16 %v44
  %v591 = vunpack.c.h.b16 %v44
  %v592 = vunpack.c.l.b16 %v45
  %v593 = vunpack.c.h.b16 %v45
  %v594 = vunpack.c.l.b16 %v46
  %v595 = vunpack.c.h.b16 %v46
  %v596 = vunpack.c.l.b16 %v47
  %v597 = vunpack.c.h.b16 %v47
  %v598 = vunpack.c.l.b16 %v48
  %v599 = vunpack.c.h.b16 %v48
  %v600 = vunpack.c.l.b16 %v49
  %v601 = vunpack.c.h.b16 %v49
  %v602 = vunpack.c.l.b16 %v50
  %v603 = vunpack.c.h.b16 %v50
  %v604 = vunpack.c.l.b16 %v51
  %v605 = vunpack.c.h.b16 %v51
  %v606 = vunpack.c.l.b16 %v52
  %v607 = vunpack.c.h.b16 %v52
  %v608 = vunpack.c.l.b16 %v53
  %v609 = vunpack.c.h.b16 %v53
  %v610 = vunpack.c.l.b16 %v54
  %v611 = vunpack.c.h.b16 %v54
  %v612 = vunpack.c.l.b16 %v55
  %v613 = vunpack.c.h.b16 %v55
  %v614 = vunpack.c.l.b16 %v56
  %v615 = vunpack.c.h.b16 %v56
  %v616 = vunpack.c.l.b16 %v57
  %v617 = vunpack.c.h.b16 %v57
  %v618 = vunpack.c.l.b16 %v58
  %v619 = vunpack.c.h.b16 %v58
  %v620 = vunpack.c.l.b16 %v59
  %v621 = vunpack.c.h.b16 %v59
  %v622 = vunpack.c.l.b16 %v60
  %v623 = vunpack.c.h.b16 %v60
  %v624 = vunpack.c.l.b16 %v61
  %v625 = vunpack.c.h.b16 %v61
  %v626 = vunpack.c.l.b16 %v62
  %v627 = vunpack.c.h.b16 %v62
  %v628 = vunpack.c.l.b16 %v63
  %v629 = vunpack.c.h.b16 %v63
  %v630 = vunpack.c.l.b16 %v64
  %v631 = vunpack.c.h.b16 %v64
  %v632 = vunpack.c.l.b16 %v65
  %v633 = vunpack.c.h.b16 %v65
  %v634 = vunpack.c.l.b16 %v66
  %v635 = vunpack.c.h.b16 %v66
  %v636 = vunpack.c.l.b16 %v67
  %v637 = vunpack.c.h.b16 %v67
  %v638 = vunpack.c.l.b16 %v68
  %v639 = vunpack.c.h.b16 %v68
  %v640 = vunpack.c.l.b16 %v69
  %v641 = vunpack.c.h.b16 %v69
  %v642 = vunpack.c.l.b16 %v70
  %v643 = vunpack.c.h.b16 %v70
  %v644 = vunpack.c.l.b16 %v71
  %v645 = vunpack.c.h.b16 %v71
  %v646 = vunpack.c.l.b16 %v72
  %v647 = vunpack.c.h.b16 %v72
  %v648 = vunpack.c.l.b16 %v73
  %v649 = vunpack.c.h.b16 %v73
  %v650 = vunpack.c.l.b16 %v74
  %v651 = vunpack.c.h.b16 %v74
  %v652 = vunpack.c.l.b16 %v75
  %v653 = vunpack.c.h.b16 %v75
  %v654 = vunpack.c.l.b16 %v76
  %v655 = vunpack.c.h.b16 %v76
  %v656 = vunpack.c.l.b16 %v77
  %v657 = vunpack.c.h.b16 %v77
  %v658 = vunpack.c.l.b16 %v78
  %v659 = vunpack.c.h.b16 %v78
  %v660 = vunpack.c.l.b16 %v79
  %v661 = vunpack.c.h.b16 %v79
  %v662 = vunpack.c.l.b16 %v80
  %v663 = vunpack.c.h.b16 %v80
  %v664 = vunpack.c.l.b16 %v81
  %v665 = vunpack.c.h.b16 %v81
  %v666 = vunpack.c.l.b16 %v82
  %v667 = vunpack.c.h.b16 %v82
  %v668 = vunpack.c.l.b16 %v83
  %v669 = vunpack.c.h.b16 %v83
  %v670 = vunpack.c.l.b16 %v84
  %v671 = vunpack.c.h.b16 %v84
  %v672 = vunpack.c.l.b16 %v85
  %v673 = vunpack.c.h.b16 %v85
  %v674 = vunpack.c.l.b16 %v86
  %v675 = vunpack.c.h.b16 %v86
  %v676 = vunpack.c.l.b16 %v87
  %v677 = vunpack.c.h.b16 %v87
  %v678 = vunpack.c.l.b16 %v88
  %v679 = vunpack.c.h.b16 %v88
  %v680 = vunpack.c.l.b16 %v89
  %v681 = vunpack.c.h.b16 %v89
  %v682 = vunpack.c.l.b16 %v90
  %v683 = vunpack.c.h.b16 %v90
  %v684 = vunpack.c.l.b16 %v91
  %v685 = vunpack.c.h.b16 %v91
  %v686 = vunpack.c.l.b16 %v92
  %v687 = vunpack.c.h.b16 %v92
  %v688 = vunpack.c.l.b16 %v93
  %v689 = vunpack.c.h.b16 %v93
  %v690 = vunpack.c.l.b16 %v94
  %v691 = vunpack.c.h.b16 %v94
  %v692 = vunpack.c.l.b16 %v95
  %v693 = vunpack.c.h.b16 %v95
  %v694 = vunpack.c.l.b16 %v96
  %v695 = vunpack.c.h.b16 %v96
  %v696 = vunpack.c.l.b16 %v97
  %v697 = vunpack.c.h.b16 %v97
  %v698 = vunpack.c.l.b16 %v98
  %v699 = vunpack.c.h.b16 %v98
  %v700 = vunpack.c.l.b16 %v99
  %v701 = vunpack.c.h.b16 %v99
  %v702 = vunpack.c.l.b16 %v100
  %v703 = vunpack.c.h.b16 %v100
  %v704 = vunpack.c.l.b16 %v101
  %v705 = vunpack.c.h.b16 %v101
  %v706 = vunpack.c.l.b16 %v102
  %v707 = vunpack.c.h.b16 %v102
  %v708 = vunpack.c.l.b16 %v103
  %v709 = vunpack.c.h.b16 %v103
  %v710 = vunpack.c.l.b16 %v104
  %v711 = vunpack.c.h.b16 %v104
  %v712 = vunpack.c.l.b16 %v105
  %v713 = vunpack.c.h.b16 %v105
  %v714 = vunpack.c.l.b16 %v106
  %v715 = vunpack.c.h.b16 %v106
  %v716 = vunpack.c.l.b16 %v107
  %v717 = vunpack.c.h.b16 %v107
  %v718 = vunpack.c.l.b16 %v108
  %v719 = vunpack.c.h.b16 %v108
  %v720 = vunpack.c.l.b16 %v109
  %v721 = vunpack.c.h.b16 %v109
  %v722 = vunpack.c.l.b16 %v110
  %v723 = vunpack.c.h.b16 %v110
  %v724 = vunpack.c.l.b16 %v111
  %v725 = vunpack.c.h.b16 %v111
  %v726 = vunpack.c.l.b16 %v112
  %v727 = vunpack.c.h.b16 %v112
  %v728 = vunpack.c.l.b16 %v113
  %v729 = vunpack.c.h.b16 %v113
  %v730 = vunpack.c.l.b16 %v114
  %v731 = vunpack.c.h.b16 %v114
  %v732 = vunpack.c.l.b16 %v115
  %v733 = vunpack.c.h.b16 %v115
  %v734 = vunpack.c.l.b16 %v116
  %v735 = vunpack.c.h.b16 %v116
  %v736 = vunpack.c.l.b16 %v117
  %v737 = vunpack.c.h.b16 %v117
  %v738 = vunpack.c.l.b16 %v118
  %v739 = vunpack.c.h.b16 %v118
  %v740 = vunpack.c.l.b16 %v119
  %v741 = vunpack.c.h.b16 %v119
  %v742 = vunpack.c.l.b16 %v120
  %v743 = vunpack.c.h.b16 %v120
  %v744 = vunpack.c.l.b16 %v121
  %v745 = vunpack.c.h.b16 %v121
  %v746 = vunpack.c.l.b16 %v122
  %v747 = vunpack.c.h.b16 %v122
  %v748 = vunpack.c.l.b16 %v123
  %v749 = vunpack.c.h.b16 %v123
  %v750 = vunpack.c.l.b16 %v124
  %v751 = vunpack.c.h.b16 %v124
  %v752 = vunpack.c.l.b16 %v125
  %v753 = vunpack.c.h.b16 %v125
  %v754 = vunpack.c.l.b16 %v126
  %v755 = vunpack.c.h.b16 %v126
  %v756 = vunpack.c.l.b16 %v127
  %v757 = vunpack.c.h.b16 %v127
  %v758 = vunpack.c.l.b16 %v128
  %v759 = vunpack.c.h.b16 %v128
  %v760 = vunpack.c.l.b16 %v129
  %v761 = vunpack.c.h.b16 %v129
  %v762 = vunpack.c.l.b16 %v130
  %v763 = vunpack.c.h.b16 %v130
  %v764 = vunpack.c.l.b16 %v131
  %v765 = vunpack.c.h.b16 %v131
  %v766 = vunpack.c.l.b16 %v132
  %v767 = vunpack.c.h.b16 %v132
  %v768 = vunpack.c.l.b16 %v133
  %v769 = vunpack.c.h.b16 %v133
  %v770 = vunpack.c.l.b16 %v134
  %v771 = vunpack.c.h.b16 %v134
  %v772 = vunpack.c.l.b16 %v135
  %v773 = vunpack.c.h.b16 %v135
  %v774 = vunpack.c.l.b16 %v136
  %v775 = vunpack.c.h.b16 %v136
  %v776 = vunpack.c.l.b16 %v137
  %v777 = vunpack.c.h.b16 %v137
  %v778 = vunpack.c.l.b16 %v138
  %v779 = vunpack.c.h.b16 %v138
  %v780 = vunpack.c.l.b16 %v139
  %v781 = vunpack.c.h.b16 %v139
  %v782 = vunpack.c.l.b16 %v140
  %v783 = vunpack.c.h.b16 %v140
  %v784 = vunpack.c.l.b16 %v141
  %v785 = vunpack.c.h.b16 %v141
  %v786 = vpack.c.b16 %v546, %v530
  %v787 = vpack.c.b16 %v547, %v531
  %v788 = vpack.c.b16 %v548, %v532
  %v789 = vpack.c.b16 %v549, %v533
  %v790 = vpack.c.b16 %v550, %v534
  %v791 = vpack.c.b16 %v551, %v535
  %v792 = vpack.c.b16 %v552, %v536
  %v793 = vpack.c.b16 %v553, %v537
  %v794 = vpack.c.b16 %v554, %v538
  %v795 = vpack.c.b16 %v555, %v539
  %v796 = vpack.c.b16 %v556, %v540
  %v797 = vpack.c.b16 %v557, %v541
  %v798 = vpack.c.b16 %v558, %v542
  %v799 = vpack.c.b16 %v559, %v543
  %v800 = vpack.c.b16 %v560, %v544
  %v801 = vpack.c.b16 %v561, %v545
  %v802 = vpack.c.b16 %v578, %v562
  %v803 = vpack.c.b16 %v579, %v563
  %v804 = vpack.c.b16 %v580, %v564
  %v805 = vpack.c.b16 %v581, %v565
  %v806 = vpack.c.b16 %v582, %v566
  %v807 = vpack.c.b16 %v583, %v567
  %v808 = vpack.c.b16 %v584, %v568
  %v809 = vpack.c.b16 %v585, %v569
  %v810 = vpack.c.b16 %v586, %v570
  %v811 = vpack.c.b16 %v587, %v571
  %v812 = vpack.c.b16 %v588, %v572
  %v813 = vpack.c.b16 %v589, %v573
  %v814 = vpack.c.b16 %v590, %v574
  %v815 = vpack.c.b16 %v591, %v575
  %v816 = vpack.c.b16 %v592, %v576
  %v817 = vpack.c.b16 %v593, %v577
  %v818 = vpack.c.b16 %v610, %v594
  %v819 = vpack.c.b16 %v611, %v595
  %v820 = vpack.c.b16 %v612, %v596
  %v821 = vpack.c.b16 %v613, %v597
  %v822 = vpack.c.b16 %v614, %v598
  %v823 = vpack.c.b16 %v615, %v599
  %v824 = vpack.c.b16 %v616, %v600
  %v825 = vpack.c.b16 %v617, %v601
  %v826 = vpack.c.b16 %v618, %v602
  %v827 = vpack.c.b16 %v619, %v603
  %v828 = vpack.c.b16 %v620, %v604
  %v829 = vpack.c.b16 %v621, %v605
  %v830 = vpack.c.b16 %v622, %v606
  %v831 = vpack.c.b16 %v623, %v607
  %v832 = vpack.c.b16 %v624, %v608
  %v833 = vpack.c.b16 %v625, %v609
  %v834 = vpack.c.b16 %v642, %v626
  %v835 = vpack.c.b16 %v643, %v627
  %v836 = vpack.c.b16 %v644, %v628
  %v837 = vpack.c.b16 %v645, %v629
  %v838 = vpack.c.b16 %v646, %v630
  %v839 = vpack.c.b16 %v647, %v631
  %v840 = vpack.c.b16 %v648, %v632
  %v841 = vpack.c.b16 %v649, %v633
  %v842 = vpack.c.b16 %v650, %v634
  %v843 = vpack.c.b16 %v651, %v635
  %v844 = vpack.c.b16 %v652, %v636
  %v845 = vpack.c.b16 %v653, %v637
  %v846 = vpack.c.b16 %v654, %v638
  %v847 = vpack.c.b16 %v655, %v639
  %v848 = vpack.c.b16 %v656, %v640
  %v849 = vpack.c.b16 %v657, %v641
  %v850 = vpack.c.b16 %v674, %v658
  %v851 = vpack.c.b16 %v675, %v659
  %v852 = vpack.c.b16 %v676, %v660
  %v853 = vpack.c.b16 %v677, %v661
  %v854 = vpack.c.b16 %v678, %v662
  %v855 = vpack.c.b16 %v679, %v663
  %v856 = vpack.c.b16 %v680, %v664
  %v857 = vpack.c.b16 %v681, %v665
  %v858 = vpack.c.b16 %v682, %v666
  %v859 = vpack.c.b16 %v683, %v667
  %v860 = vpack.c.b16 %v684, %v668
  %v861 = vpack.c.b16 %v685, %v669
  %v862 = vpack.c.b16 %v686, %v670
  %v863 = vpack.c.b16 %v687, %v671
  %v864 = vpack.c.b16 %v688, %v672
  %v865 = vpack.c.b16 %v689, %v673
  %v866 = vpack.c.b16 %v706, %v690
  %v867 = vpack.c.b16 %v707, %v691
  %v868 = vpack.c.b16 %v708, %v692
  %v869 = vpack.c.b16 %v709, %v693
  %v870 = vpack.c.b16 %v710, %v694
  %v871 = vpack.c.b16 %v711, %v695
  %v872 = vpack.c.b16 %v712, %v696
  %v873 = vpack.c.b16 %v713, %v697
  %v874 = vpack.c.b16 %v714, %v698
  %v875 = vpack.c.b16 %v715, %v699
  %v876 = vpack.c.b16 %v716, %v700
  %v877 = vpack.c.b16 %v717, %v701
  %v878 = vpack.c.b16 %v718, %v702
  %v879 = vpack.c.b16 %v719, %v703
  %v880 = vpack.c.b16 %v720, %v704
  %v881 = vpack.c.b16 %v721, %v705
  %v882 = vpack.c.b16 %v738, %v722
  %v883 = vpack.c.b16 %v739, %v723
  %v884 = vpack.c.b16 %v740, %v724
  %v885 = vpack.c.b16 %v741, %v725
  %v886 = vpack.c.b16 %v742, %v726
  %v887 = vpack.c.b16 %v743, %v727
  %v888 = vpack.c.b16 %v744, %v728
  %v889 = vpack.c.b16 %v745, %v729
  %v890 = vpack.c.b16 %v746, %v730
  %v891 = vpack.c.b16 %v747, %v731
  %v892 = vpack.c.b16 %v748, %v732
  %v893 = vpack.c.b16 %v749, %v733
  %v894 = vpack.c.b16 %v750, %v734
  %v895 = vpack.c.b16 %v751, %v735
  %v896 = vpack.c.b16 %v752, %v736
  %v897 = vpack.c.b16 %v753, %v737
  %v898 = vpack.c.b16 %v770, %v754
  %v899 = vpack.c.b16 %v771, %v755
  %v900 = vpack.c.b16 %v772, %v756
  %v901 = vpack.c.b16 %v773, %v757
  %v902 = vpack.c.b16 %v774, %v758
  %v903 = vpack.c.b16 %v775, %v759
  %v904 = vpack.c.b16 %v776, %v760
  %v905 = vpack.c.b16 %v777, %v761
  %v906 = vpack.c.b16 %v778, %v762
  %v907 = vpack.c.b16 %v779, %v763
  %v908 = vpack.c.b16 %v780, %v764
  %v909 = vpack.c.b16 %v781, %v765
  %v910 = vpack.c.b16 %v782, %v766
  %v911 = vpack.c.b16 %v783, %v767
  %v912 = vpack.c.b16 %v784, %v768
  %v913 = vpack.c.b16 %v785, %v769
  %v1298 = vunpack.c.l.b16 %v142
  %v1299 = vunpack.c.l.b16 %v143
  %v1300 = vunpack.c.l.b16 %v144
  %v1301 = vunpack.c.l.b16 %v145
  %v1302 = vunpack.c.l.b16 %v146
  %v1303 = vunpack.c.l.b16 %v147
  %v1304 = vunpack.c.l.b16 %v148
  %v1305 = vunpack.c.l.b16 %v149
  %v1306 = vunpack.c.l.b16 %v150
  %v1307 = vunpack.c.l.b16 %v151
  %v1308 = vunpack.c.l.b16 %v152
  %v1309 = vunpack.c.l.b16 %v153
  %v1310 = vunpack.c.l.b16 %v154
  %v1311 = vunpack.c.l.b16 %v155
  %v1312 = vunpack.c.l.b16 %v156
  %v1313 = vunpack.c.l.b16 %v157
  %v1314 = vunpack.c.l.b16 %v158
  %v1315 = vunpack.c.l.b16 %v159
  %v1316 = vunpack.c.l.b16 %v160
  %v1317 = vunpack.c.l.b16 %v161
  %v1318 = vunpack.c.l.b16 %v162
  %v1319 = vunpack.c.l.b16 %v163
  %v1320 = vunpack.c.l.b16 %v164
  %v1321 = vunpack.c.l.b16 %v165
  %v1322 = vunpack.c.l.b16 %v166
  %v1323 = vunpack.c.l.b16 %v167
  %v1324 = vunpack.c.l.b16 %v168
  %v1325 = vunpack.c.l.b16 %v169
  %v1326 = vunpack.c.l.b16 %v170
  %v1327 = vunpack.c.l.b16 %v171
  %v1328 = vunpack.c.l.b16 %v172
  %v1329 = vunpack.c.l.b16 %v173
  %v1330 = vunpack.c.l.b16 %v174
  %v1331 = vunpack.c.l.b16 %v175
  %v1332 = vunpack.c.l.b16 %v176
  %v1333 = vunpack.c.l.b16 %v177
  %v1334 = vunpack.c.l.b16 %v178
  %v1335 = vunpack.c.l.b16 %v179
  %v1336 = vunpack.c.l.b16 %v180
  %v1337 = vunpack.c.l.b16 %v181
  %v1338 = vunpack.c.l.b16 %v182
  %v1339 = vunpack.c.l.b16 %v183
  %v1340 = vunpack.c.l.b16 %v184
  %v1341 = vunpack.c.l.b16 %v185
  %v1342 = vunpack.c.l.b16 %v186
  %v1343 = vunpack.c.l.b16 %v187
  %v1344 = vunpack.c.l.b16 %v188
  %v1345 = vunpack.c.l.b16 %v189
  %v1346 = vunpack.c.l.b16 %v190
  %v1347 = vunpack.c.l.b16 %v191
  %v1348 = vunpack.c.l.b16 %v192
  %v1349 = vunpack.c.l.b16 %v193
  %v1350 = vunpack.c.l.b16 %v194
  %v1351 = vunpack.c.l.b16 %v195
  %v1352 = vunpack.c.l.b16 %v196
  %v1353 = vunpack.c.l.b16 %v197
  %v1354 = vunpack.c.l.b16 %v198
  %v1355 = vunpack.c.l.b16 %v199
  %v1356 = vunpack.c.l.b16 %v200
  %v1357 = vunpack.c.l.b16 %v201
  %v1358 = vunpack.c.l.b16 %v202
  %v1359 = vunpack.c.l.b16 %v203
  %v1360 = vunpack.c.l.b16 %v204
  %v1361 = vunpack.c.l.b16 %v205
  %v1362 = vunpack.c.l.b16 %v206
  %v1363 = vunpack.c.l.b16 %v207
  %v1364 = vunpack.c.l.b16 %v208
  %v1365 = vunpack.c.l.b16 %v209
  %v1366 = vunpack.c.l.b16 %v210
  %v1367 = vunpack.c.l.b16 %v211
  %v1368 = vunpack.c.l.b16 %v212
  %v1369 = vunpack.c.l.b16 %v213
  %v1370 = vunpack.c.l.b16 %v214
  %v1371 = vunpack.c.l.b16 %v215
  %v1372 = vunpack.c.l.b16 %v216
  %v1373 = vunpack.c.l.b16 %v217
  %v1374 = vunpack.c.l.b16 %v218
  %v1375 = vunpack.c.l.b16 %v219
  %v1376 = vunpack.c.l.b16 %v220
  %v1377 = vunpack.c.l.b16 %v221
  %v1378 = vunpack.c.l.b16 %v222
  %v1379 = vunpack.c.l.b16 %v223
  %v1380 = vunpack.c.l.b16 %v224
  %v1381 = vunpack.c.l.b16 %v225
  %v1382 = vunpack.c.l.b16 %v226
  %v1383 = vunpack.c.l.b16 %v227
  %v1384 = vunpack.c.l.b16 %v228
  %v1385 = vunpack.c.l.b16 %v229
  %v1386 = vunpack.c.l.b16 %v230
  %v1387 = vunpack.c.l.b16 %v231
  %v1388 = vunpack.c.l.b16 %v232
  %v1389 = vunpack.c.l.b16 %v233
  %v1390 = vunpack.c.l.b16 %v234
  %v1391 = vunpack.c.l.b16 %v235
  %v1392 = vunpack.c.l.b16 %v236
  %v1393 = vunpack.c.l.b16 %v237
  %v1394 = vunpack.c.l.b16 %v238
  %v1395 = vunpack.c.l.b16 %v239
  %v1396 = vunpack.c.l.b16 %v240
  %v1397 = vunpack.c.l.b16 %v241
  %v1398 = vunpack.c.l.b16 %v242
  %v1399 = vunpack.c.l.b16 %v243
  %v1400 = vunpack.c.l.b16 %v244
  %v1401 = vunpack.c.l.b16 %v245
  %v1402 = vunpack.c.l.b16 %v246
  %v1403 = vunpack.c.l.b16 %v247
  %v1404 = vunpack.c.l.b16 %v248
  %v1405 = vunpack.c.l.b16 %v249
  %v1406 = vunpack.c.l.b16 %v250
  %v1407 = vunpack.c.l.b16 %v251
  %v1408 = vunpack.c.l.b16 %v252
  %v1409 = vunpack.c.l.b16 %v253
  %v1410 = vunpack.c.l.b16 %v254
  %v1411 = vunpack.c.l.b16 %v255
  %v1412 = vunpack.c.l.b16 %v256
  %v1413 = vunpack.c.l.b16 %v257
  %v1414 = vunpack.c.l.b16 %v258
  %v1415 = vunpack.c.l.b16 %v259
  %v1416 = vunpack.c.l.b16 %v260
  %v1417 = vunpack.c.l.b16 %v261
  %v1418 = vunpack.c.l.b16 %v262
  %v1419 = vunpack.c.l.b16 %v263
  %v1420 = vunpack.c.l.b16 %v264
  %v1421 = vunpack.c.l.b16 %v265
  %v1422 = vunpack.c.l.b16 %v266
  %v1423 = vunpack.c.l.b16 %v267
  %v1424 = vunpack.c.l.b16 %v268
  %v1425 = vunpack.c.l.b16 %v269
  %v1426 = vunpack.c.l.b16 %v270
  %v1427 = vunpack.c.l.b16 %v271
  %v1428 = vunpack.c.l.b16 %v272
  %v1429 = vunpack.c.l.b16 %v273
  %v1430 = vunpack.c.l.b16 %v274
  %v1431 = vunpack.c.l.b16 %v275
  %v1432 = vunpack.c.l.b16 %v276
  %v1433 = vunpack.c.l.b16 %v277
  %v1434 = vunpack.c.l.b16 %v278
  %v1435 = vunpack.c.l.b16 %v279
  %v1436 = vunpack.c.l.b16 %v280
  %v1437 = vunpack.c.l.b16 %v281
  %v1438 = vunpack.c.l.b16 %v282
  %v1439 = vunpack.c.l.b16 %v283
  %v1440 = vunpack.c.l.b16 %v284
  %v1441 = vunpack.c.l.b16 %v285
  %v1442 = vunpack.c.l.b16 %v286
  %v1443 = vunpack.c.l.b16 %v287
  %v1444 = vunpack.c.l.b16 %v288
  %v1445 = vunpack.c.l.b16 %v289
  %v1446 = vunpack.c.l.b16 %v290
  %v1447 = vunpack.c.l.b16 %v291
  %v1448 = vunpack.c.l.b16 %v292
  %v1449 = vunpack.c.l.b16 %v293
  %v1450 = vunpack.c.l.b16 %v294
  %v1451 = vunpack.c.l.b16 %v295
  %v1452 = vunpack.c.l.b16 %v296
  %v1453 = vunpack.c.l.b16 %v297
  %v1454 = vunpack.c.l.b16 %v298
  %v1455 = vunpack.c.l.b16 %v299
  %v1456 = vunpack.c.l.b16 %v300
  %v1457 = vunpack.c.l.b16 %v301
  %v1458 = vunpack.c.l.b16 %v302
  %v1459 = vunpack.c.l.b16 %v303
  %v1460 = vunpack.c.l.b16 %v304
  %v1461 = vunpack.c.l.b16 %v305
  %v1462 = vunpack.c.l.b16 %v306
  %v1463 = vunpack.c.l.b16 %v307
  %v1464 = vunpack.c.l.b16 %v308
  %v1465 = vunpack.c.l.b16 %v309
  %v1466 = vunpack.c.l.b16 %v310
  %v1467 = vunpack.c.l.b16 %v311
  %v1468 = vunpack.c.l.b16 %v312
  %v1469 = vunpack.c.l.b16 %v313
  %v1470 = vunpack.c.l.b16 %v314
  %v1471 = vunpack.c.l.b16 %v315
  %v1472 = vunpack.c.l.b16 %v316
  %v1473 = vunpack.c.l.b16 %v317
  %v1474 = vunpack.c.l.b16 %v318
  %v1475 = vunpack.c.l.b16 %v319
  %v1476 = vunpack.c.l.b16 %v320
  %v1477 = vunpack.c.l.b16 %v321
  %v1478 = vunpack.c.l.b16 %v322
  %v1479 = vunpack.c.l.b16 %v323
  %v1480 = vunpack.c.l.b16 %v324
  %v1481 = vunpack.c.l.b16 %v325
  %v1482 = vunpack.c.l.b16 %v326
  %v1483 = vunpack.c.l.b16 %v327
  %v1484 = vunpack.c.l.b16 %v328
  %v1485 = vunpack.c.l.b16 %v329
  %v1486 = vunpack.c.l.b16 %v330
  %v1487 = vunpack.c.l.b16 %v331
  %v1488 = vunpack.c.l.b16 %v332
  %v1489 = vunpack.c.l.b16 %v333
  %v1490 = vunpack.c.l.b16 %v334
  %v1491 = vunpack.c.l.b16 %v335
  %v1492 = vunpack.c.l.b16 %v336
  %v1493 = vunpack.c.l.b16 %v337
  %v1494 = vunpack.c.l.b16 %v338
  %v1495 = vunpack.c.l.b16 %v339
  %v1496 = vunpack.c.l.b16 %v340
  %v1497 = vunpack.c.l.b16 %v341
  %v1498 = vunpack.c.l.b16 %v342
  %v1499 = vunpack.c.l.b16 %v343
  %v1500 = vunpack.c.l.b16 %v344
  %v1501 = vunpack.c.l.b16 %v345
  %v1502 = vunpack.c.l.b16 %v346
  %v1503 = vunpack.c.l.b16 %v347
  %v1504 = vunpack.c.l.b16 %v348
  %v1505 = vunpack.c.l.b16 %v349
  %v1506 = vunpack.c.l.b16 %v350
  %v1507 = vunpack.c.l.b16 %v351
  %v1508 = vunpack.c.l.b16 %v352
  %v1509 = vunpack.c.l.b16 %v353
  %v1510 = vunpack.c.l.b16 %v354
  %v1511 = vunpack.c.l.b16 %v355
  %v1512 = vunpack.c.l.b16 %v356
  %v1513 = vunpack.c.l.b16 %v357
  %v1514 = vunpack.c.l.b16 %v358
  %v1515 = vunpack.c.l.b16 %v359
  %v1516 = vunpack.c.l.b16 %v360
  %v1517 = vunpack.c.l.b16 %v361
  %v1518 = vunpack.c.l.b16 %v362
  %v1519 = vunpack.c.l.b16 %v363
  %v1520 = vunpack.c.l.b16 %v364
  %v1521 = vunpack.c.l.b16 %v365
  %v1522 = vunpack.c.l.b16 %v366
  %v1523 = vunpack.c.l.b16 %v367
  %v1524 = vunpack.c.l.b16 %v368
  %v1525 = vunpack.c.l.b16 %v369
  %v1526 = vunpack.c.l.b16 %v370
  %v1527 = vunpack.c.l.b16 %v371
  %v1528 = vunpack.c.l.b16 %v372
  %v1529 = vunpack.c.l.b16 %v373
  %v1530 = vunpack.c.l.b16 %v374
  %v1531 = vunpack.c.l.b16 %v375
  %v1532 = vunpack.c.l.b16 %v376
  %v1533 = vunpack.c.l.b16 %v377
  %v1534 = vunpack.c.l.b16 %v378
  %v1535 = vunpack.c.l.b16 %v379
  %v1536 = vunpack.c.l.b16 %v380
  %v1537 = vunpack.c.l.b16 %v381
  %v1538 = vunpack.c.l.b16 %v382
  %v1539 = vunpack.c.l.b16 %v383
  %v1540 = vunpack.c.l.b16 %v384
  %v1541 = vunpack.c.l.b16 %v385
  %v1542 = vunpack.c.l.b16 %v386
  %v1543 = vunpack.c.l.b16 %v387
  %v1544 = vunpack.c.l.b16 %v388
  %v1545 = vunpack.c.l.b16 %v389
  %v1546 = vunpack.c.l.b16 %v390
  %v1547 = vunpack.c.l.b16 %v391
  %v1548 = vunpack.c.l.b16 %v392
  %v1549 = vunpack.c.l.b16 %v393
  %v1550 = vunpack.c.l.b16 %v394
  %v1551 = vunpack.c.l.b16 %v395
  %v1552 = vunpack.c.l.b16 %v396
  %v1553 = vunpack.c.l.b16 %v397
  %v1554 = vpack.c.b16 %v1299, %v1298
  %v1555 = vpack.c.b16 %v1301, %v1300
  %v1556 = vpack.c.b16 %v1303, %v1302
  %v1557 = vpack.c.b16 %v1305, %v1304
  %v1558 = vpack.c.b16 %v1307, %v1306
  %v1559 = vpack.c.b16 %v1309, %v1308
  %v1560 = vpack.c.b16 %v1311, %v1310
  %v1561 = vpack.c.b16 %v1313, %v1312
  %v1562 = vpack.c.b16 %v1315, %v1314
  %v1563 = vpack.c.b16 %v1317, %v1316
  %v1564 = vpack.c.b16 %v1319, %v1318
  %v1565 = vpack.c.b16 %v1321, %v1320
  %v1566 = vpack.c.b16 %v1323, %v1322
  %v1567 = vpack.c.b16 %v1325, %v1324
  %v1568 = vpack.c.b16 %v1327, %v1326
  %v1569 = vpack.c.b16 %v1329, %v1328
  %v1570 = vpack.c.b16 %v1331, %v1330
  %v1571 = vpack.c.b16 %v1333, %v1332
  %v1572 = vpack.c.b16 %v1335, %v1334
  %v1573 = vpack.c.b16 %v1337, %v1336
  %v1574 = vpack.c.b16 %v1339, %v1338
  %v1575 = vpack.c.b16 %v1341, %v1340
  %v1576 = vpack.c.b16 %v1343, %v1342
  %v1577 = vpack.c.b16 %v1345, %v1344
  %v1578 = vpack.c.b16 %v1347, %v1346
  %v1579 = vpack.c.b16 %v1349, %v1348
  %v1580 = vpack.c.b16 %v1351, %v1350
  %v1581 = vpack.c.b16 %v1353, %v1352
  %v1582 = vpack.c.b16 %v1355, %v1354
  %v1583 = vpack.c.b16 %v1357, %v1356
  %v1584 = vpack.c.b16 %v1359, %v1358
  %v1585 = vpack.c.b16 %v1361, %v1360
  %v1586 = vpack.c.b16 %v1363, %v1362
  %v1587 = vpack.c.b16 %v1365, %v1364
  %v1588 = vpack.c.b16 %v1367, %v1366
  %v1589 = vpack.c.b16 %v1369, %v1368
  %v1590 = vpack.c.b16 %v1371, %v1370
  %v1591 = vpack.c.b16 %v1373, %v1372
  %v1592 = vpack.c.b16 %v1375, %v1374
  %v1593 = vpack.c.b16 %v1377, %v1376
  %v1594 = vpack.c.b16 %v1379, %v1378
  %v1595 = vpack.c.b16 %v1381, %v1380
  %v1596 = vpack.c.b16 %v1383, %v1382
  %v1597 = vpack.c.b16 %v1385, %v1384
  %v1598 = vpack.c.b16 %v1387, %v1386
  %v1599 = vpack.c.b16 %v1389, %v1388
  %v1600 = vpack.c.b16 %v1391, %v1390
  %v1601 = vpack.c.b16 %v1393, %v1392
  %v1602 = vpack.c.b16 %v1395, %v1394
  %v1603 = vpack.c.b16 %v1397, %v1396
  %v1604 = vpack.c.b16 %v1399, %v1398
  %v1605 = vpack.c.b16 %v1401, %v1400
  %v1606 = vpack.c.b16 %v1403, %v1402
  %v1607 = vpack.c.b16 %v1405, %v1404
  %v1608 = vpack.c.b16 %v1407, %v1406
  %v1609 = vpack.c.b16 %v1409, %v1408
  %v1610 = vpack.c.b16 %v1411, %v1410
  %v1611 = vpack.c.b16 %v1413, %v1412
  %v1612 = vpack.c.b16 %v1415, %v1414
  %v1613 = vpack.c.b16 %v1417, %v1416
  %v1614 = vpack.c.b16 %v1419, %v1418
  %v1615 = vpack.c.b16 %v1421, %v1420
  %v1616 = vpack.c.b16 %v1423, %v1422
  %v1617 = vpack.c.b16 %v1425, %v1424
  %v1618 = vpack.c.b16 %v1427, %v1426
  %v1619 = vpack.c.b16 %v1429, %v1428
  %v1620 = vpack.c.b16 %v1431, %v1430
  %v1621 = vpack.c.b16 %v1433, %v1432
  %v1622 = vpack.c.b16 %v1435, %v1434
  %v1623 = vpack.c.b16 %v1437, %v1436
  %v1624 = vpack.c.b16 %v1439, %v1438
  %v1625 = vpack.c.b16 %v1441, %v1440
  %v1626 = vpack.c.b16 %v1443, %v1442
  %v1627 = vpack.c.b16 %v1445, %v1444
  %v1628 = vpack.c.b16 %v1447, %v1446
  %v1629 = vpack.c.b16 %v1449, %v1448
  %v1630 = vpack.c.b16 %v1451, %v1450
  %v1631 = vpack.c.b16 %v1453, %v1452
  %v1632 = vpack.c.b16 %v1455, %v1454
  %v1633 = vpack.c.b16 %v1457, %v1456
  %v1634 = vpack.c.b16 %v1459, %v1458
  %v1635 = vpack.c.b16 %v1461, %v1460
  %v1636 = vpack.c.b16 %v1463, %v1462
  %v1637 = vpack.c.b16 %v1465, %v1464
  %v1638 = vpack.c.b16 %v1467, %v1466
  %v1639 = vpack.c.b16 %v1469, %v1468
  %v1640 = vpack.c.b16 %v1471, %v1470
  %v1641 = vpack.c.b16 %v1473, %v1472
  %v1642 = vpack.c.b16 %v1475, %v1474
  %v1643 = vpack.c.b16 %v1477, %v1476
  %v1644 = vpack.c.b16 %v1479, %v1478
  %v1645 = vpack.c.b16 %v1481, %v1480
  %v1646 = vpack.c.b16 %v1483, %v1482
  %v1647 = vpack.c.b16 %v1485, %v1484
  %v1648 = vpack.c.b16 %v1487, %v1486
  %v1649 = vpack.c.b16 %v1489, %v1488
  %v1650 = vpack.c.b16 %v1491, %v1490
  %v1651 = vpack.c.b16 %v1493, %v1492
  %v1652 = vpack.c.b16 %v1495, %v1494
  %v1653 = vpack.c.b16 %v1497, %v1496
  %v1654 = vpack.c.b16 %v1499, %v1498
  %v1655 = vpack.c.b16 %v1501, %v1500
  %v1656 = vpack.c.b16 %v1503, %v1502
  %v1657 = vpack.c.b16 %v1505, %v1504
  %v1658 = vpack.c.b16 %v1507, %v1506
  %v1659 = vpack.c.b16 %v1509, %v1508
  %v1660 = vpack.c.b16 %v1511, %v1510
  %v1661 = vpack.c.b16 %v1513, %v1512
  %v1662 = vpack.c.b16 %v1515, %v1514
  %v1663 = vpack.c.b16 %v1517, %v1516
  %v1664 = vpack.c.b16 %v1519, %v1518
  %v1665 = vpack.c.b16 %v1521, %v1520
  %v1666 = vpack.c.b16 %v1523, %v1522
  %v1667 = vpack.c.b16 %v1525, %v1524
  %v1668 = vpack.c.b16 %v1527, %v1526
  %v1669 = vpack.c.b16 %v1529, %v1528
  %v1670 = vpack.c.b16 %v1531, %v1530
  %v1671 = vpack.c.b16 %v1533, %v1532
  %v1672 = vpack.c.b16 %v1535, %v1534
  %v1673 = vpack.c.b16 %v1537, %v1536
  %v1674 = vpack.c.b16 %v1539, %v1538
  %v1675 = vpack.c.b16 %v1541, %v1540
  %v1676 = vpack.c.b16 %v1543, %v1542
  %v1677 = vpack.c.b16 %v1545, %v1544
  %v1678 = vpack.c.b16 %v1547, %v1546
  %v1679 = vpack.c.b16 %v1549, %v1548
  %v1680 = vpack.c.b16 %v1551, %v1550
  %v1681 = vpack.c.b16 %v1553, %v1552
  %1810 = vmatpush.bf16.msra.mxu0 %v1561
  %1811 = vmatpush.bf16.msra.mxu0 %v1560
  %1812 = vmatpush.bf16.msra.mxu0 %v1559
  %1813 = vmatpush.bf16.msra.mxu0 %v1558
  %1814 = vmatpush.bf16.msra.mxu0 %v1557
  %1815 = vmatpush.bf16.msra.mxu0 %v1556
  %1816 = vmatpush.bf16.msra.mxu0 %v1555
  %1817 = vmatpush.bf16.msra.mxu0 %v1554
  %1818 = vmatmul.bf16.gmra.mxu0 %v786
  %v1819 = vpop.f32.mrf.mxu0
  %v1820 = vadd.f32 %v400, %v1819
  %v1821 = vpop.f32.mrf.mxu0
  %v1822 = vadd.f32 %v400, %v1821
  %1823 = vmatmul.bf16.gmra.mxu0 %v802
  %v1824 = vpop.f32.mrf.mxu0
  %v1825 = vadd.f32 %v400, %v1824
  %v1826 = vpop.f32.mrf.mxu0
  %v1827 = vadd.f32 %v400, %v1826
  %1828 = vmatmul.bf16.gmra.mxu0 %v818
  %v1829 = vpop.f32.mrf.mxu0
  %v1830 = vadd.f32 %v400, %v1829
  %v1831 = vpop.f32.mrf.mxu0
  %v1832 = vadd.f32 %v400, %v1831
  %1833 = vmatmul.bf16.gmra.mxu0 %v834
  %v1834 = vpop.f32.mrf.mxu0
  %v1835 = vadd.f32 %v400, %v1834
  %v1836 = vpop.f32.mrf.mxu0
  %v1837 = vadd.f32 %v400, %v1836
  %1838 = vmatmul.bf16.gmra.mxu0 %v850
  %v1839 = vpop.f32.mrf.mxu0
  %v1840 = vadd.f32 %v400, %v1839
  %v1841 = vpop.f32.mrf.mxu0
  %v1842 = vadd.f32 %v400, %v1841
  %1843 = vmatmul.bf16.gmra.mxu0 %v866
  %v1844 = vpop.f32.mrf.mxu0
  %v1845 = vadd.f32 %v400, %v1844
  %v1846 = vpop.f32.mrf.mxu0
  %v1847 = vadd.f32 %v400, %v1846
  %1848 = vmatmul.bf16.gmra.mxu0 %v882
  %v1849 = vpop.f32.mrf.mxu0
  %v1850 = vadd.f32 %v400, %v1849
  %v1851 = vpop.f32.mrf.mxu0
  %v1852 = vadd.f32 %v400, %v1851
  %1853 = vmatmul.bf16.gmra.mxu0 %v898
  %v1854 = vpop.f32.mrf.mxu0
  %v1855 = vadd.f32 %v400, %v1854
  %v1856 = vpop.f32.mrf.mxu0
  %v1857 = vadd.f32 %v400, %v1856
  %1858 = vdwg.mxu0
  %1859 = vmatpush.bf16.msra.mxu0 %v1569
  %1860 = vmatpush.bf16.msra.mxu0 %v1568
  %1861 = vmatpush.bf16.msra.mxu0 %v1567
  %1862 = vmatpush.bf16.msra.mxu0 %v1566
  %1863 = vmatpush.bf16.msra.mxu0 %v1565
  %1864 = vmatpush.bf16.msra.mxu0 %v1564
  %1865 = vmatpush.bf16.msra.mxu0 %v1563
  %1866 = vmatpush.bf16.msra.mxu0 %v1562
  %1867 = vmatmul.bf16.gmra.mxu0 %v787
  %v1868 = vpop.f32.mrf.mxu0
  %v1869 = vadd.f32 %v1820, %v1868
  %v1870 = vpop.f32.mrf.mxu0
  %v1871 = vadd.f32 %v1822, %v1870
  %1872 = vmatmul.bf16.gmra.mxu0 %v803
  %v1873 = vpop.f32.mrf.mxu0
  %v1874 = vadd.f32 %v1825, %v1873
  %v1875 = vpop.f32.mrf.mxu0
  %v1876 = vadd.f32 %v1827, %v1875
  %1877 = vmatmul.bf16.gmra.mxu0 %v819
  %v1878 = vpop.f32.mrf.mxu0
  %v1879 = vadd.f32 %v1830, %v1878
  %v1880 = vpop.f32.mrf.mxu0
  %v1881 = vadd.f32 %v1832, %v1880
  %1882 = vmatmul.bf16.gmra.mxu0 %v835
  %v1883 = vpop.f32.mrf.mxu0
  %v1884 = vadd.f32 %v1835, %v1883
  %v1885 = vpop.f32.mrf.mxu0
  %v1886 = vadd.f32 %v1837, %v1885
  %1887 = vmatmul.bf16.gmra.mxu0 %v851
  %v1888 = vpop.f32.mrf.mxu0
  %v1889 = vadd.f32 %v1840, %v1888
  %v1890 = vpop.f32.mrf.mxu0
  %v1891 = vadd.f32 %v1842, %v1890
  %1892 = vmatmul.bf16.gmra.mxu0 %v867
  %v1893 = vpop.f32.mrf.mxu0
  %v1894 = vadd.f32 %v1845, %v1893
  %v1895 = vpop.f32.mrf.mxu0
  %v1896 = vadd.f32 %v1847, %v1895
  %1897 = vmatmul.bf16.gmra.mxu0 %v883
  %v1898 = vpop.f32.mrf.mxu0
  %v1899 = vadd.f32 %v1850, %v1898
  %v1900 = vpop.f32.mrf.mxu0
  %v1901 = vadd.f32 %v1852, %v1900
  %1902 = vmatmul.bf16.gmra.mxu0 %v899
  %v1903 = vpop.f32.mrf.mxu0
  %v1904 = vadd.f32 %v1855, %v1903
  %v1905 = vpop.f32.mrf.mxu0
  %v1906 = vadd.f32 %v1857, %v1905
  %1907 = vdwg.mxu0
  %1908 = vmatpush.bf16.msra.mxu0 %v1577
  %1909 = vmatpush.bf16.msra.mxu0 %v1576
  %1910 = vmatpush.bf16.msra.mxu0 %v1575
  %1911 = vmatpush.bf16.msra.mxu0 %v1574
  %1912 = vmatpush.bf16.msra.mxu0 %v1573
  %1913 = vmatpush.bf16.msra.mxu0 %v1572
  %1914 = vmatpush.bf16.msra.mxu0 %v1571
  %1915 = vmatpush.bf16.msra.mxu0 %v1570
  %1916 = vmatmul.bf16.gmra.mxu0 %v788
  %v1917 = vpop.f32.mrf.mxu0
  %v1918 = vadd.f32 %v1869, %v1917
  %v1919 = vpop.f32.mrf.mxu0
  %v1920 = vadd.f32 %v1871, %v1919
  %1921 = vmatmul.bf16.gmra.mxu0 %v804
  %v1922 = vpop.f32.mrf.mxu0
  %v1923 = vadd.f32 %v1874, %v1922
  %v1924 = vpop.f32.mrf.mxu0
  %v1925 = vadd.f32 %v1876, %v1924
  %1926 = vmatmul.bf16.gmra.mxu0 %v820
  %v1927 = vpop.f32.mrf.mxu0
  %v1928 = vadd.f32 %v1879, %v1927
  %v1929 = vpop.f32.mrf.mxu0
  %v1930 = vadd.f32 %v1881, %v1929
  %1931 = vmatmul.bf16.gmra.mxu0 %v836
  %v1932 = vpop.f32.mrf.mxu0
  %v1933 = vadd.f32 %v1884, %v1932
  %v1934 = vpop.f32.mrf.mxu0
  %v1935 = vadd.f32 %v1886, %v1934
  %1936 = vmatmul.bf16.gmra.mxu0 %v852
  %v1937 = vpop.f32.mrf.mxu0
  %v1938 = vadd.f32 %v1889, %v1937
  %v1939 = vpop.f32.mrf.mxu0
  %v1940 = vadd.f32 %v1891, %v1939
  %1941 = vmatmul.bf16.gmra.mxu0 %v868
  %v1942 = vpop.f32.mrf.mxu0
  %v1943 = vadd.f32 %v1894, %v1942
  %v1944 = vpop.f32.mrf.mxu0
  %v1945 = vadd.f32 %v1896, %v1944
  %1946 = vmatmul.bf16.gmra.mxu0 %v884
  %v1947 = vpop.f32.mrf.mxu0
  %v1948 = vadd.f32 %v1899, %v1947
  %v1949 = vpop.f32.mrf.mxu0
  %v1950 = vadd.f32 %v1901, %v1949
  %1951 = vmatmul.bf16.gmra.mxu0 %v900
  %v1952 = vpop.f32.mrf.mxu0
  %v1953 = vadd.f32 %v1904, %v1952
  %v1954 = vpop.f32.mrf.mxu0
  %v1955 = vadd.f32 %v1906, %v1954
  %1956 = vdwg.mxu0
  %1957 = vmatpush.bf16.msra.mxu0 %v1585
  %1958 = vmatpush.bf16.msra.mxu0 %v1584
  %1959 = vmatpush.bf16.msra.mxu0 %v1583
  %1960 = vmatpush.bf16.msra.mxu0 %v1582
  %1961 = vmatpush.bf16.msra.mxu0 %v1581
  %1962 = vmatpush.bf16.msra.mxu0 %v1580
  %1963 = vmatpush.bf16.msra.mxu0 %v1579
  %1964 = vmatpush.bf16.msra.mxu0 %v1578
  %1965 = vmatmul.bf16.gmra.mxu0 %v789
  %v1966 = vpop.f32.mrf.mxu0
  %v1967 = vadd.f32 %v1918, %v1966
  %v1968 = vpop.f32.mrf.mxu0
  %v1969 = vadd.f32 %v1920, %v1968
  %1970 = vmatmul.bf16.gmra.mxu0 %v805
  %v1971 = vpop.f32.mrf.mxu0
  %v1972 = vadd.f32 %v1923, %v1971
  %v1973 = vpop.f32.mrf.mxu0
  %v1974 = vadd.f32 %v1925, %v1973
  %1975 = vmatmul.bf16.gmra.mxu0 %v821
  %v1976 = vpop.f32.mrf.mxu0
  %v1977 = vadd.f32 %v1928, %v1976
  %v1978 = vpop.f32.mrf.mxu0
  %v1979 = vadd.f32 %v1930, %v1978
  %1980 = vmatmul.bf16.gmra.mxu0 %v837
  %v1981 = vpop.f32.mrf.mxu0
  %v1982 = vadd.f32 %v1933, %v1981
  %v1983 = vpop.f32.mrf.mxu0
  %v1984 = vadd.f32 %v1935, %v1983
  %1985 = vmatmul.bf16.gmra.mxu0 %v853
  %v1986 = vpop.f32.mrf.mxu0
  %v1987 = vadd.f32 %v1938, %v1986
  %v1988 = vpop.f32.mrf.mxu0
  %v1989 = vadd.f32 %v1940, %v1988
  %1990 = vmatmul.bf16.gmra.mxu0 %v869
  %v1991 = vpop.f32.mrf.mxu0
  %v1992 = vadd.f32 %v1943, %v1991
  %v1993 = vpop.f32.mrf.mxu0
  %v1994 = vadd.f32 %v1945, %v1993
  %1995 = vmatmul.bf16.gmra.mxu0 %v885
  %v1996 = vpop.f32.mrf.mxu0
  %v1997 = vadd.f32 %v1948, %v1996
  %v1998 = vpop.f32.mrf.mxu0
  %v1999 = vadd.f32 %v1950, %v1998
  %2000 = vmatmul.bf16.gmra.mxu0 %v901
  %v2001 = vpop.f32.mrf.mxu0
  %v2002 = vadd.f32 %v1953, %v2001
  %v2003 = vpop.f32.mrf.mxu0
  %v2004 = vadd.f32 %v1955, %v2003
  %2005 = vdwg.mxu0
  %2006 = vmatpush.bf16.msra.mxu0 %v1593
  %2007 = vmatpush.bf16.msra.mxu0 %v1592
  %2008 = vmatpush.bf16.msra.mxu0 %v1591
  %2009 = vmatpush.bf16.msra.mxu0 %v1590
  %2010 = vmatpush.bf16.msra.mxu0 %v1589
  %2011 = vmatpush.bf16.msra.mxu0 %v1588
  %2012 = vmatpush.bf16.msra.mxu0 %v1587
  %2013 = vmatpush.bf16.msra.mxu0 %v1586
  %2014 = vmatmul.bf16.gmra.mxu0 %v790
  %v2015 = vpop.f32.mrf.mxu0
  %v2016 = vadd.f32 %v1967, %v2015
  %v2017 = vpop.f32.mrf.mxu0
  %v2018 = vadd.f32 %v1969, %v2017
  %2019 = vmatmul.bf16.gmra.mxu0 %v806
  %v2020 = vpop.f32.mrf.mxu0
  %v2021 = vadd.f32 %v1972, %v2020
  %v2022 = vpop.f32.mrf.mxu0
  %v2023 = vadd.f32 %v1974, %v2022
  %2024 = vmatmul.bf16.gmra.mxu0 %v822
  %v2025 = vpop.f32.mrf.mxu0
  %v2026 = vadd.f32 %v1977, %v2025
  %v2027 = vpop.f32.mrf.mxu0
  %v2028 = vadd.f32 %v1979, %v2027
  %2029 = vmatmul.bf16.gmra.mxu0 %v838
  %v2030 = vpop.f32.mrf.mxu0
  %v2031 = vadd.f32 %v1982, %v2030
  %v2032 = vpop.f32.mrf.mxu0
  %v2033 = vadd.f32 %v1984, %v2032
  %2034 = vmatmul.bf16.gmra.mxu0 %v854
  %v2035 = vpop.f32.mrf.mxu0
  %v2036 = vadd.f32 %v1987, %v2035
  %v2037 = vpop.f32.mrf.mxu0
  %v2038 = vadd.f32 %v1989, %v2037
  %2039 = vmatmul.bf16.gmra.mxu0 %v870
  %v2040 = vpop.f32.mrf.mxu0
  %v2041 = vadd.f32 %v1992, %v2040
  %v2042 = vpop.f32.mrf.mxu0
  %v2043 = vadd.f32 %v1994, %v2042
  %2044 = vmatmul.bf16.gmra.mxu0 %v886
  %v2045 = vpop.f32.mrf.mxu0
  %v2046 = vadd.f32 %v1997, %v2045
  %v2047 = vpop.f32.mrf.mxu0
  %v2048 = vadd.f32 %v1999, %v2047
  %2049 = vmatmul.bf16.gmra.mxu0 %v902
  %v2050 = vpop.f32.mrf.mxu0
  %v2051 = vadd.f32 %v2002, %v2050
  %v2052 = vpop.f32.mrf.mxu0
  %v2053 = vadd.f32 %v2004, %v2052
  %2054 = vdwg.mxu0
  %2055 = vmatpush.bf16.msra.mxu0 %v1601
  %2056 = vmatpush.bf16.msra.mxu0 %v1600
  %2057 = vmatpush.bf16.msra.mxu0 %v1599
  %2058 = vmatpush.bf16.msra.mxu0 %v1598
  %2059 = vmatpush.bf16.msra.mxu0 %v1597
  %2060 = vmatpush.bf16.msra.mxu0 %v1596
  %2061 = vmatpush.bf16.msra.mxu0 %v1595
  %2062 = vmatpush.bf16.msra.mxu0 %v1594
  %2063 = vmatmul.bf16.gmra.mxu0 %v791
  %v2064 = vpop.f32.mrf.mxu0
  %v2065 = vadd.f32 %v2016, %v2064
  %v2066 = vpop.f32.mrf.mxu0
  %v2067 = vadd.f32 %v2018, %v2066
  %2068 = vmatmul.bf16.gmra.mxu0 %v807
  %v2069 = vpop.f32.mrf.mxu0
  %v2070 = vadd.f32 %v2021, %v2069
  %v2071 = vpop.f32.mrf.mxu0
  %v2072 = vadd.f32 %v2023, %v2071
  %2073 = vmatmul.bf16.gmra.mxu0 %v823
  %v2074 = vpop.f32.mrf.mxu0
  %v2075 = vadd.f32 %v2026, %v2074
  %v2076 = vpop.f32.mrf.mxu0
  %v2077 = vadd.f32 %v2028, %v2076
  %2078 = vmatmul.bf16.gmra.mxu0 %v839
  %v2079 = vpop.f32.mrf.mxu0
  %v2080 = vadd.f32 %v2031, %v2079
  %v2081 = vpop.f32.mrf.mxu0
  %v2082 = vadd.f32 %v2033, %v2081
  %2083 = vmatmul.bf16.gmra.mxu0 %v855
  %v2084 = vpop.f32.mrf.mxu0
  %v2085 = vadd.f32 %v2036, %v2084
  %v2086 = vpop.f32.mrf.mxu0
  %v2087 = vadd.f32 %v2038, %v2086
  %2088 = vmatmul.bf16.gmra.mxu0 %v871
  %v2089 = vpop.f32.mrf.mxu0
  %v2090 = vadd.f32 %v2041, %v2089
  %v2091 = vpop.f32.mrf.mxu0
  %v2092 = vadd.f32 %v2043, %v2091
  %2093 = vmatmul.bf16.gmra.mxu0 %v887
  %v2094 = vpop.f32.mrf.mxu0
  %v2095 = vadd.f32 %v2046, %v2094
  %v2096 = vpop.f32.mrf.mxu0
  %v2097 = vadd.f32 %v2048, %v2096
  %2098 = vmatmul.bf16.gmra.mxu0 %v903
  %v2099 = vpop.f32.mrf.mxu0
  %v2100 = vadd.f32 %v2051, %v2099
  %v2101 = vpop.f32.mrf.mxu0
  %v2102 = vadd.f32 %v2053, %v2101
  %2103 = vdwg.mxu0
  %2104 = vmatpush.bf16.msra.mxu0 %v1609
  %2105 = vmatpush.bf16.msra.mxu0 %v1608
  %2106 = vmatpush.bf16.msra.mxu0 %v1607
  %2107 = vmatpush.bf16.msra.mxu0 %v1606
  %2108 = vmatpush.bf16.msra.mxu0 %v1605
  %2109 = vmatpush.bf16.msra.mxu0 %v1604
  %2110 = vmatpush.bf16.msra.mxu0 %v1603
  %2111 = vmatpush.bf16.msra.mxu0 %v1602
  %2112 = vmatmul.bf16.gmra.mxu0 %v792
  %v2113 = vpop.f32.mrf.mxu0
  %v2114 = vadd.f32 %v2065, %v2113
  %v2115 = vpop.f32.mrf.mxu0
  %v2116 = vadd.f32 %v2067, %v2115
  %2117 = vmatmul.bf16.gmra.mxu0 %v808
  %v2118 = vpop.f32.mrf.mxu0
  %v2119 = vadd.f32 %v2070, %v2118
  %v2120 = vpop.f32.mrf.mxu0
  %v2121 = vadd.f32 %v2072, %v2120
  %2122 = vmatmul.bf16.gmra.mxu0 %v824
  %v2123 = vpop.f32.mrf.mxu0
  %v2124 = vadd.f32 %v2075, %v2123
  %v2125 = vpop.f32.mrf.mxu0
  %v2126 = vadd.f32 %v2077, %v2125
  %2127 = vmatmul.bf16.gmra.mxu0 %v840
  %v2128 = vpop.f32.mrf.mxu0
  %v2129 = vadd.f32 %v2080, %v2128
  %v2130 = vpop.f32.mrf.mxu0
  %v2131 = vadd.f32 %v2082, %v2130
  %2132 = vmatmul.bf16.gmra.mxu0 %v856
  %v2133 = vpop.f32.mrf.mxu0
  %v2134 = vadd.f32 %v2085, %v2133
  %v2135 = vpop.f32.mrf.mxu0
  %v2136 = vadd.f32 %v2087, %v2135
  %2137 = vmatmul.bf16.gmra.mxu0 %v872
  %v2138 = vpop.f32.mrf.mxu0
  %v2139 = vadd.f32 %v2090, %v2138
  %v2140 = vpop.f32.mrf.mxu0
  %v2141 = vadd.f32 %v2092, %v2140
  %2142 = vmatmul.bf16.gmra.mxu0 %v888
  %v2143 = vpop.f32.mrf.mxu0
  %v2144 = vadd.f32 %v2095, %v2143
  %v2145 = vpop.f32.mrf.mxu0
  %v2146 = vadd.f32 %v2097, %v2145
  %2147 = vmatmul.bf16.gmra.mxu0 %v904
  %v2148 = vpop.f32.mrf.mxu0
  %v2149 = vadd.f32 %v2100, %v2148
  %v2150 = vpop.f32.mrf.mxu0
  %v2151 = vadd.f32 %v2102, %v2150
  %2152 = vdwg.mxu0
  %2153 = vmatpush.bf16.msra.mxu0 %v1617
  %2154 = vmatpush.bf16.msra.mxu0 %v1616
  %2155 = vmatpush.bf16.msra.mxu0 %v1615
  %2156 = vmatpush.bf16.msra.mxu0 %v1614
  %2157 = vmatpush.bf16.msra.mxu0 %v1613
  %2158 = vmatpush.bf16.msra.mxu0 %v1612
  %2159 = vmatpush.bf16.msra.mxu0 %v1611
  %2160 = vmatpush.bf16.msra.mxu0 %v1610
  %2161 = vmatmul.bf16.gmra.mxu0 %v793
  %v2162 = vpop.f32.mrf.mxu0
  %v2163 = vadd.f32 %v2114, %v2162
  %v2164 = vpop.f32.mrf.mxu0
  %v2165 = vadd.f32 %v2116, %v2164
  %2166 = vmatmul.bf16.gmra.mxu0 %v809
  %v2167 = vpop.f32.mrf.mxu0
  %v2168 = vadd.f32 %v2119, %v2167
  %v2169 = vpop.f32.mrf.mxu0
  %v2170 = vadd.f32 %v2121, %v2169
  %2171 = vmatmul.bf16.gmra.mxu0 %v825
  %v2172 = vpop.f32.mrf.mxu0
  %v2173 = vadd.f32 %v2124, %v2172
  %v2174 = vpop.f32.mrf.mxu0
  %v2175 = vadd.f32 %v2126, %v2174
  %2176 = vmatmul.bf16.gmra.mxu0 %v841
  %v2177 = vpop.f32.mrf.mxu0
  %v2178 = vadd.f32 %v2129, %v2177
  %v2179 = vpop.f32.mrf.mxu0
  %v2180 = vadd.f32 %v2131, %v2179
  %2181 = vmatmul.bf16.gmra.mxu0 %v857
  %v2182 = vpop.f32.mrf.mxu0
  %v2183 = vadd.f32 %v2134, %v2182
  %v2184 = vpop.f32.mrf.mxu0
  %v2185 = vadd.f32 %v2136, %v2184
  %2186 = vmatmul.bf16.gmra.mxu0 %v873
  %v2187 = vpop.f32.mrf.mxu0
  %v2188 = vadd.f32 %v2139, %v2187
  %v2189 = vpop.f32.mrf.mxu0
  %v2190 = vadd.f32 %v2141, %v2189
  %2191 = vmatmul.bf16.gmra.mxu0 %v889
  %v2192 = vpop.f32.mrf.mxu0
  %v2193 = vadd.f32 %v2144, %v2192
  %v2194 = vpop.f32.mrf.mxu0
  %v2195 = vadd.f32 %v2146, %v2194
  %2196 = vmatmul.bf16.gmra.mxu0 %v905
  %v2197 = vpop.f32.mrf.mxu0
  %v2198 = vadd.f32 %v2149, %v2197
  %v2199 = vpop.f32.mrf.mxu0
  %v2200 = vadd.f32 %v2151, %v2199
  %2201 = vdwg.mxu0
  %2202 = vmatpush.bf16.msra.mxu0 %v1625
  %2203 = vmatpush.bf16.msra.mxu0 %v1624
  %2204 = vmatpush.bf16.msra.mxu0 %v1623
  %2205 = vmatpush.bf16.msra.mxu0 %v1622
  %2206 = vmatpush.bf16.msra.mxu0 %v1621
  %2207 = vmatpush.bf16.msra.mxu0 %v1620
  %2208 = vmatpush.bf16.msra.mxu0 %v1619
  %2209 = vmatpush.bf16.msra.mxu0 %v1618
  %2210 = vmatmul.bf16.gmra.mxu0 %v794
  %v2211 = vpop.f32.mrf.mxu0
  %v2212 = vadd.f32 %v2163, %v2211
  %v2213 = vpop.f32.mrf.mxu0
  %v2214 = vadd.f32 %v2165, %v2213
  %2215 = vmatmul.bf16.gmra.mxu0 %v810
  %v2216 = vpop.f32.mrf.mxu0
  %v2217 = vadd.f32 %v2168, %v2216
  %v2218 = vpop.f32.mrf.mxu0
  %v2219 = vadd.f32 %v2170, %v2218
  %2220 = vmatmul.bf16.gmra.mxu0 %v826
  %v2221 = vpop.f32.mrf.mxu0
  %v2222 = vadd.f32 %v2173, %v2221
  %v2223 = vpop.f32.mrf.mxu0
  %v2224 = vadd.f32 %v2175, %v2223
  %2225 = vmatmul.bf16.gmra.mxu0 %v842
  %v2226 = vpop.f32.mrf.mxu0
  %v2227 = vadd.f32 %v2178, %v2226
  %v2228 = vpop.f32.mrf.mxu0
  %v2229 = vadd.f32 %v2180, %v2228
  %2230 = vmatmul.bf16.gmra.mxu0 %v858
  %v2231 = vpop.f32.mrf.mxu0
  %v2232 = vadd.f32 %v2183, %v2231
  %v2233 = vpop.f32.mrf.mxu0
  %v2234 = vadd.f32 %v2185, %v2233
  %2235 = vmatmul.bf16.gmra.mxu0 %v874
  %v2236 = vpop.f32.mrf.mxu0
  %v2237 = vadd.f32 %v2188, %v2236
  %v2238 = vpop.f32.mrf.mxu0
  %v2239 = vadd.f32 %v2190, %v2238
  %2240 = vmatmul.bf16.gmra.mxu0 %v890
  %v2241 = vpop.f32.mrf.mxu0
  %v2242 = vadd.f32 %v2193, %v2241
  %v2243 = vpop.f32.mrf.mxu0
  %v2244 = vadd.f32 %v2195, %v2243
  %2245 = vmatmul.bf16.gmra.mxu0 %v906
  %v2246 = vpop.f32.mrf.mxu0
  %v2247 = vadd.f32 %v2198, %v2246
  %v2248 = vpop.f32.mrf.mxu0
  %v2249 = vadd.f32 %v2200, %v2248
  %2250 = vdwg.mxu0
  %2251 = vmatpush.bf16.msra.mxu0 %v1633
  %2252 = vmatpush.bf16.msra.mxu0 %v1632
  %2253 = vmatpush.bf16.msra.mxu0 %v1631
  %2254 = vmatpush.bf16.msra.mxu0 %v1630
  %2255 = vmatpush.bf16.msra.mxu0 %v1629
  %2256 = vmatpush.bf16.msra.mxu0 %v1628
  %2257 = vmatpush.bf16.msra.mxu0 %v1627
  %2258 = vmatpush.bf16.msra.mxu0 %v1626
  %2259 = vmatmul.bf16.gmra.mxu0 %v795
  %v2260 = vpop.f32.mrf.mxu0
  %v2261 = vadd.f32 %v2212, %v2260
  %v2262 = vpop.f32.mrf.mxu0
  %v2263 = vadd.f32 %v2214, %v2262
  %2264 = vmatmul.bf16.gmra.mxu0 %v811
  %v2265 = vpop.f32.mrf.mxu0
  %v2266 = vadd.f32 %v2217, %v2265
  %v2267 = vpop.f32.mrf.mxu0
  %v2268 = vadd.f32 %v2219, %v2267
  %2269 = vmatmul.bf16.gmra.mxu0 %v827
  %v2270 = vpop.f32.mrf.mxu0
  %v2271 = vadd.f32 %v2222, %v2270
  %v2272 = vpop.f32.mrf.mxu0
  %v2273 = vadd.f32 %v2224, %v2272
  %2274 = vmatmul.bf16.gmra.mxu0 %v843
  %v2275 = vpop.f32.mrf.mxu0
  %v2276 = vadd.f32 %v2227, %v2275
  %v2277 = vpop.f32.mrf.mxu0
  %v2278 = vadd.f32 %v2229, %v2277
  %2279 = vmatmul.bf16.gmra.mxu0 %v859
  %v2280 = vpop.f32.mrf.mxu0
  %v2281 = vadd.f32 %v2232, %v2280
  %v2282 = vpop.f32.mrf.mxu0
  %v2283 = vadd.f32 %v2234, %v2282
  %2284 = vmatmul.bf16.gmra.mxu0 %v875
  %v2285 = vpop.f32.mrf.mxu0
  %v2286 = vadd.f32 %v2237, %v2285
  %v2287 = vpop.f32.mrf.mxu0
  %v2288 = vadd.f32 %v2239, %v2287
  %2289 = vmatmul.bf16.gmra.mxu0 %v891
  %v2290 = vpop.f32.mrf.mxu0
  %v2291 = vadd.f32 %v2242, %v2290
  %v2292 = vpop.f32.mrf.mxu0
  %v2293 = vadd.f32 %v2244, %v2292
  %2294 = vmatmul.bf16.gmra.mxu0 %v907
  %v2295 = vpop.f32.mrf.mxu0
  %v2296 = vadd.f32 %v2247, %v2295
  %v2297 = vpop.f32.mrf.mxu0
  %v2298 = vadd.f32 %v2249, %v2297
  %2299 = vdwg.mxu0
  %2300 = vmatpush.bf16.msra.mxu0 %v1641
  %2301 = vmatpush.bf16.msra.mxu0 %v1640
  %2302 = vmatpush.bf16.msra.mxu0 %v1639
  %2303 = vmatpush.bf16.msra.mxu0 %v1638
  %2304 = vmatpush.bf16.msra.mxu0 %v1637
  %2305 = vmatpush.bf16.msra.mxu0 %v1636
  %2306 = vmatpush.bf16.msra.mxu0 %v1635
  %2307 = vmatpush.bf16.msra.mxu0 %v1634
  %2308 = vmatmul.bf16.gmra.mxu0 %v796
  %v2309 = vpop.f32.mrf.mxu0
  %v2310 = vadd.f32 %v2261, %v2309
  %v2311 = vpop.f32.mrf.mxu0
  %v2312 = vadd.f32 %v2263, %v2311
  %2313 = vmatmul.bf16.gmra.mxu0 %v812
  %v2314 = vpop.f32.mrf.mxu0
  %v2315 = vadd.f32 %v2266, %v2314
  %v2316 = vpop.f32.mrf.mxu0
  %v2317 = vadd.f32 %v2268, %v2316
  %2318 = vmatmul.bf16.gmra.mxu0 %v828
  %v2319 = vpop.f32.mrf.mxu0
  %v2320 = vadd.f32 %v2271, %v2319
  %v2321 = vpop.f32.mrf.mxu0
  %v2322 = vadd.f32 %v2273, %v2321
  %2323 = vmatmul.bf16.gmra.mxu0 %v844
  %v2324 = vpop.f32.mrf.mxu0
  %v2325 = vadd.f32 %v2276, %v2324
  %v2326 = vpop.f32.mrf.mxu0
  %v2327 = vadd.f32 %v2278, %v2326
  %2328 = vmatmul.bf16.gmra.mxu0 %v860
  %v2329 = vpop.f32.mrf.mxu0
  %v2330 = vadd.f32 %v2281, %v2329
  %v2331 = vpop.f32.mrf.mxu0
  %v2332 = vadd.f32 %v2283, %v2331
  %2333 = vmatmul.bf16.gmra.mxu0 %v876
  %v2334 = vpop.f32.mrf.mxu0
  %v2335 = vadd.f32 %v2286, %v2334
  %v2336 = vpop.f32.mrf.mxu0
  %v2337 = vadd.f32 %v2288, %v2336
  %2338 = vmatmul.bf16.gmra.mxu0 %v892
  %v2339 = vpop.f32.mrf.mxu0
  %v2340 = vadd.f32 %v2291, %v2339
  %v2341 = vpop.f32.mrf.mxu0
  %v2342 = vadd.f32 %v2293, %v2341
  %2343 = vmatmul.bf16.gmra.mxu0 %v908
  %v2344 = vpop.f32.mrf.mxu0
  %v2345 = vadd.f32 %v2296, %v2344
  %v2346 = vpop.f32.mrf.mxu0
  %v2347 = vadd.f32 %v2298, %v2346
  %2348 = vdwg.mxu0
  %2349 = vmatpush.bf16.msra.mxu0 %v1649
  %2350 = vmatpush.bf16.msra.mxu0 %v1648
  %2351 = vmatpush.bf16.msra.mxu0 %v1647
  %2352 = vmatpush.bf16.msra.mxu0 %v1646
  %2353 = vmatpush.bf16.msra.mxu0 %v1645
  %2354 = vmatpush.bf16.msra.mxu0 %v1644
  %2355 = vmatpush.bf16.msra.mxu0 %v1643
  %2356 = vmatpush.bf16.msra.mxu0 %v1642
  %2357 = vmatmul.bf16.gmra.mxu0 %v797
  %v2358 = vpop.f32.mrf.mxu0
  %v2359 = vadd.f32 %v2310, %v2358
  %v2360 = vpop.f32.mrf.mxu0
  %v2361 = vadd.f32 %v2312, %v2360
  %2362 = vmatmul.bf16.gmra.mxu0 %v813
  %v2363 = vpop.f32.mrf.mxu0
  %v2364 = vadd.f32 %v2315, %v2363
  %v2365 = vpop.f32.mrf.mxu0
  %v2366 = vadd.f32 %v2317, %v2365
  %2367 = vmatmul.bf16.gmra.mxu0 %v829
  %v2368 = vpop.f32.mrf.mxu0
  %v2369 = vadd.f32 %v2320, %v2368
  %v2370 = vpop.f32.mrf.mxu0
  %v2371 = vadd.f32 %v2322, %v2370
  %2372 = vmatmul.bf16.gmra.mxu0 %v845
  %v2373 = vpop.f32.mrf.mxu0
  %v2374 = vadd.f32 %v2325, %v2373
  %v2375 = vpop.f32.mrf.mxu0
  %v2376 = vadd.f32 %v2327, %v2375
  %2377 = vmatmul.bf16.gmra.mxu0 %v861
  %v2378 = vpop.f32.mrf.mxu0
  %v2379 = vadd.f32 %v2330, %v2378
  %v2380 = vpop.f32.mrf.mxu0
  %v2381 = vadd.f32 %v2332, %v2380
  %2382 = vmatmul.bf16.gmra.mxu0 %v877
  %v2383 = vpop.f32.mrf.mxu0
  %v2384 = vadd.f32 %v2335, %v2383
  %v2385 = vpop.f32.mrf.mxu0
  %v2386 = vadd.f32 %v2337, %v2385
  %2387 = vmatmul.bf16.gmra.mxu0 %v893
  %v2388 = vpop.f32.mrf.mxu0
  %v2389 = vadd.f32 %v2340, %v2388
  %v2390 = vpop.f32.mrf.mxu0
  %v2391 = vadd.f32 %v2342, %v2390
  %2392 = vmatmul.bf16.gmra.mxu0 %v909
  %v2393 = vpop.f32.mrf.mxu0
  %v2394 = vadd.f32 %v2345, %v2393
  %v2395 = vpop.f32.mrf.mxu0
  %v2396 = vadd.f32 %v2347, %v2395
  %2397 = vdwg.mxu0
  %2398 = vmatpush.bf16.msra.mxu0 %v1657
  %2399 = vmatpush.bf16.msra.mxu0 %v1656
  %2400 = vmatpush.bf16.msra.mxu0 %v1655
  %2401 = vmatpush.bf16.msra.mxu0 %v1654
  %2402 = vmatpush.bf16.msra.mxu0 %v1653
  %2403 = vmatpush.bf16.msra.mxu0 %v1652
  %2404 = vmatpush.bf16.msra.mxu0 %v1651
  %2405 = vmatpush.bf16.msra.mxu0 %v1650
  %2406 = vmatmul.bf16.gmra.mxu0 %v798
  %v2407 = vpop.f32.mrf.mxu0
  %v2408 = vadd.f32 %v2359, %v2407
  %v2409 = vpop.f32.mrf.mxu0
  %v2410 = vadd.f32 %v2361, %v2409
  %2411 = vmatmul.bf16.gmra.mxu0 %v814
  %v2412 = vpop.f32.mrf.mxu0
  %v2413 = vadd.f32 %v2364, %v2412
  %v2414 = vpop.f32.mrf.mxu0
  %v2415 = vadd.f32 %v2366, %v2414
  %2416 = vmatmul.bf16.gmra.mxu0 %v830
  %v2417 = vpop.f32.mrf.mxu0
  %v2418 = vadd.f32 %v2369, %v2417
  %v2419 = vpop.f32.mrf.mxu0
  %v2420 = vadd.f32 %v2371, %v2419
  %2421 = vmatmul.bf16.gmra.mxu0 %v846
  %v2422 = vpop.f32.mrf.mxu0
  %v2423 = vadd.f32 %v2374, %v2422
  %v2424 = vpop.f32.mrf.mxu0
  %v2425 = vadd.f32 %v2376, %v2424
  %2426 = vmatmul.bf16.gmra.mxu0 %v862
  %v2427 = vpop.f32.mrf.mxu0
  %v2428 = vadd.f32 %v2379, %v2427
  %v2429 = vpop.f32.mrf.mxu0
  %v2430 = vadd.f32 %v2381, %v2429
  %2431 = vmatmul.bf16.gmra.mxu0 %v878
  %v2432 = vpop.f32.mrf.mxu0
  %v2433 = vadd.f32 %v2384, %v2432
  %v2434 = vpop.f32.mrf.mxu0
  %v2435 = vadd.f32 %v2386, %v2434
  %2436 = vmatmul.bf16.gmra.mxu0 %v894
  %v2437 = vpop.f32.mrf.mxu0
  %v2438 = vadd.f32 %v2389, %v2437
  %v2439 = vpop.f32.mrf.mxu0
  %v2440 = vadd.f32 %v2391, %v2439
  %2441 = vmatmul.bf16.gmra.mxu0 %v910
  %v2442 = vpop.f32.mrf.mxu0
  %v2443 = vadd.f32 %v2394, %v2442
  %v2444 = vpop.f32.mrf.mxu0
  %v2445 = vadd.f32 %v2396, %v2444
  %2446 = vdwg.mxu0
  %2447 = vmatpush.bf16.msra.mxu0 %v1665
  %2448 = vmatpush.bf16.msra.mxu0 %v1664
  %2449 = vmatpush.bf16.msra.mxu0 %v1663
  %2450 = vmatpush.bf16.msra.mxu0 %v1662
  %2451 = vmatpush.bf16.msra.mxu0 %v1661
  %2452 = vmatpush.bf16.msra.mxu0 %v1660
  %2453 = vmatpush.bf16.msra.mxu0 %v1659
  %2454 = vmatpush.bf16.msra.mxu0 %v1658
  %2455 = vmatmul.bf16.gmra.mxu0 %v799
  %v2456 = vpop.f32.mrf.mxu0
  %v2457 = vadd.f32 %v2408, %v2456
  %v2458 = vpop.f32.mrf.mxu0
  %v2459 = vadd.f32 %v2410, %v2458
  %2460 = vmatmul.bf16.gmra.mxu0 %v815
  %v2461 = vpop.f32.mrf.mxu0
  %v2462 = vadd.f32 %v2413, %v2461
  %v2463 = vpop.f32.mrf.mxu0
  %v2464 = vadd.f32 %v2415, %v2463
  %2465 = vmatmul.bf16.gmra.mxu0 %v831
  %v2466 = vpop.f32.mrf.mxu0
  %v2467 = vadd.f32 %v2418, %v2466
  %v2468 = vpop.f32.mrf.mxu0
  %v2469 = vadd.f32 %v2420, %v2468
  %2470 = vmatmul.bf16.gmra.mxu0 %v847
  %v2471 = vpop.f32.mrf.mxu0
  %v2472 = vadd.f32 %v2423, %v2471
  %v2473 = vpop.f32.mrf.mxu0
  %v2474 = vadd.f32 %v2425, %v2473
  %2475 = vmatmul.bf16.gmra.mxu0 %v863
  %v2476 = vpop.f32.mrf.mxu0
  %v2477 = vadd.f32 %v2428, %v2476
  %v2478 = vpop.f32.mrf.mxu0
  %v2479 = vadd.f32 %v2430, %v2478
  %2480 = vmatmul.bf16.gmra.mxu0 %v879
  %v2481 = vpop.f32.mrf.mxu0
  %v2482 = vadd.f32 %v2433, %v2481
  %v2483 = vpop.f32.mrf.mxu0
  %v2484 = vadd.f32 %v2435, %v2483
  %2485 = vmatmul.bf16.gmra.mxu0 %v895
  %v2486 = vpop.f32.mrf.mxu0
  %v2487 = vadd.f32 %v2438, %v2486
  %v2488 = vpop.f32.mrf.mxu0
  %v2489 = vadd.f32 %v2440, %v2488
  %2490 = vmatmul.bf16.gmra.mxu0 %v911
  %v2491 = vpop.f32.mrf.mxu0
  %v2492 = vadd.f32 %v2443, %v2491
  %v2493 = vpop.f32.mrf.mxu0
  %v2494 = vadd.f32 %v2445, %v2493
  %2495 = vdwg.mxu0
  %2496 = vmatpush.bf16.msra.mxu0 %v1673
  %2497 = vmatpush.bf16.msra.mxu0 %v1672
  %2498 = vmatpush.bf16.msra.mxu0 %v1671
  %2499 = vmatpush.bf16.msra.mxu0 %v1670
  %2500 = vmatpush.bf16.msra.mxu0 %v1669
  %2501 = vmatpush.bf16.msra.mxu0 %v1668
  %2502 = vmatpush.bf16.msra.mxu0 %v1667
  %2503 = vmatpush.bf16.msra.mxu0 %v1666
  %2504 = vmatmul.bf16.gmra.mxu0 %v800
  %v2505 = vpop.f32.mrf.mxu0
  %v2506 = vadd.f32 %v2457, %v2505
  %v2507 = vpop.f32.mrf.mxu0
  %v2508 = vadd.f32 %v2459, %v2507
  %2509 = vmatmul.bf16.gmra.mxu0 %v816
  %v2510 = vpop.f32.mrf.mxu0
  %v2511 = vadd.f32 %v2462, %v2510
  %v2512 = vpop.f32.mrf.mxu0
  %v2513 = vadd.f32 %v2464, %v2512
  %2514 = vmatmul.bf16.gmra.mxu0 %v832
  %v2515 = vpop.f32.mrf.mxu0
  %v2516 = vadd.f32 %v2467, %v2515
  %v2517 = vpop.f32.mrf.mxu0
  %v2518 = vadd.f32 %v2469, %v2517
  %2519 = vmatmul.bf16.gmra.mxu0 %v848
  %v2520 = vpop.f32.mrf.mxu0
  %v2521 = vadd.f32 %v2472, %v2520
  %v2522 = vpop.f32.mrf.mxu0
  %v2523 = vadd.f32 %v2474, %v2522
  %2524 = vmatmul.bf16.gmra.mxu0 %v864
  %v2525 = vpop.f32.mrf.mxu0
  %v2526 = vadd.f32 %v2477, %v2525
  %v2527 = vpop.f32.mrf.mxu0
  %v2528 = vadd.f32 %v2479, %v2527
  %2529 = vmatmul.bf16.gmra.mxu0 %v880
  %v2530 = vpop.f32.mrf.mxu0
  %v2531 = vadd.f32 %v2482, %v2530
  %v2532 = vpop.f32.mrf.mxu0
  %v2533 = vadd.f32 %v2484, %v2532
  %2534 = vmatmul.bf16.gmra.mxu0 %v896
  %v2535 = vpop.f32.mrf.mxu0
  %v2536 = vadd.f32 %v2487, %v2535
  %v2537 = vpop.f32.mrf.mxu0
  %v2538 = vadd.f32 %v2489, %v2537
  %2539 = vmatmul.bf16.gmra.mxu0 %v912
  %v2540 = vpop.f32.mrf.mxu0
  %v2541 = vadd.f32 %v2492, %v2540
  %v2542 = vpop.f32.mrf.mxu0
  %v2543 = vadd.f32 %v2494, %v2542
  %2544 = vdwg.mxu0
  %2545 = vmatpush.bf16.msra.mxu0 %v1681
  %2546 = vmatpush.bf16.msra.mxu0 %v1680
  %2547 = vmatpush.bf16.msra.mxu0 %v1679
  %2548 = vmatpush.bf16.msra.mxu0 %v1678
  %2549 = vmatpush.bf16.msra.mxu0 %v1677
  %2550 = vmatpush.bf16.msra.mxu0 %v1676
  %2551 = vmatpush.bf16.msra.mxu0 %v1675
  %2552 = vmatpush.bf16.msra.mxu0 %v1674
  %2553 = vmatmul.bf16.gmra.mxu0 %v801
  %v2554 = vpop.f32.mrf.mxu0
  %v2555 = vadd.f32 %v2506, %v2554
  %v2556 = vpop.f32.mrf.mxu0
  %v2557 = vadd.f32 %v2508, %v2556
  %2558 = vmatmul.bf16.gmra.mxu0 %v817
  %v2559 = vpop.f32.mrf.mxu0
  %v2560 = vadd.f32 %v2511, %v2559
  %v2561 = vpop.f32.mrf.mxu0
  %v2562 = vadd.f32 %v2513, %v2561
  %2563 = vmatmul.bf16.gmra.mxu0 %v833
  %v2564 = vpop.f32.mrf.mxu0
  %v2565 = vadd.f32 %v2516, %v2564
  %v2566 = vpop.f32.mrf.mxu0
  %v2567 = vadd.f32 %v2518, %v2566
  %2568 = vmatmul.bf16.gmra.mxu0 %v849
  %v2569 = vpop.f32.mrf.mxu0
  %v2570 = vadd.f32 %v2521, %v2569
  %v2571 = vpop.f32.mrf.mxu0
  %v2572 = vadd.f32 %v2523, %v2571
  %2573 = vmatmul.bf16.gmra.mxu0 %v865
  %v2574 = vpop.f32.mrf.mxu0
  %v2575 = vadd.f32 %v2526, %v2574
  %v2576 = vpop.f32.mrf.mxu0
  %v2577 = vadd.f32 %v2528, %v2576
  %2578 = vmatmul.bf16.gmra.mxu0 %v881
  %v2579 = vpop.f32.mrf.mxu0
  %v2580 = vadd.f32 %v2531, %v2579
  %v2581 = vpop.f32.mrf.mxu0
  %v2582 = vadd.f32 %v2533, %v2581
  %2583 = vmatmul.bf16.gmra.mxu0 %v897
  %v2584 = vpop.f32.mrf.mxu0
  %v2585 = vadd.f32 %v2536, %v2584
  %v2586 = vpop.f32.mrf.mxu0
  %v2587 = vadd.f32 %v2538, %v2586
  %2588 = vmatmul.bf16.gmra.mxu0 %v913
  %v2589 = vpop.f32.mrf.mxu0
  %v2590 = vadd.f32 %v2541, %v2589
  %v2591 = vpop.f32.mrf.mxu0
  %v2592 = vadd.f32 %v2543, %v2591
  %2593 = vdwg.mxu0
  %v2594 = vmax.f32 %v2555, 0.0
  %v2595 = vmax.f32 %v2557, 0.0
  %v2596 = vmax.f32 %v2560, 0.0
  %v2597 = vmax.f32 %v2562, 0.0
  %v2598 = vmax.f32 %v2565, 0.0
  %v2599 = vmax.f32 %v2567, 0.0
  %v2600 = vmax.f32 %v2570, 0.0
  %v2601 = vmax.f32 %v2572, 0.0
  %v2602 = vmax.f32 %v2575, 0.0
  %v2603 = vmax.f32 %v2577, 0.0
  %v2604 = vmax.f32 %v2580, 0.0
  %v2605 = vmax.f32 %v2582, 0.0
  %v2606 = vmax.f32 %v2585, 0.0
  %v2607 = vmax.f32 %v2587, 0.0
  %v2608 = vmax.f32 %v2590, 0.0
  %v2609 = vmax.f32 %v2592, 0.0
  %v2610 = vpack.c.bf16 %v2594, %v2594
  %v2611 = vpack.c.bf16 %v2595, %v2595
  %v2612 = vpack.c.bf16 %v2596, %v2596
  %v2613 = vpack.c.bf16 %v2597, %v2597
  %v2614 = vpack.c.bf16 %v2598, %v2598
  %v2615 = vpack.c.bf16 %v2599, %v2599
  %v2616 = vpack.c.bf16 %v2600, %v2600
  %v2617 = vpack.c.bf16 %v2601, %v2601
  %v2618 = vpack.c.bf16 %v2602, %v2602
  %v2619 = vpack.c.bf16 %v2603, %v2603
  %v2620 = vpack.c.bf16 %v2604, %v2604
  %v2621 = vpack.c.bf16 %v2605, %v2605
  %v2622 = vpack.c.bf16 %v2606, %v2606
  %v2623 = vpack.c.bf16 %v2607, %v2607
  %v2624 = vpack.c.bf16 %v2608, %v2608
  %v2625 = vpack.c.bf16 %v2609, %v2609
  %2626 = vst [vmem:[%s3] sm:$0xf] %v2610
  %2627 = vst [vmem:[%s3 + $0x4] sm:$0xf] %v2611
  %2628 = vst [vmem:[%s3 + $0x8] sm:$0xf] %v2612
  %2629 = vst [vmem:[%s3 + $0xc] sm:$0xf] %v2613
  %2630 = vst [vmem:[%s3 + $0x10] sm:$0xf] %v2614
  %2631 = vst [vmem:[%s3 + $0x14] sm:$0xf] %v2615
  %2632 = vst [vmem:[%s3 + $0x18] sm:$0xf] %v2616
  %2633 = vst [vmem:[%s3 + $0x1c] sm:$0xf] %v2617
  %2634 = vst [vmem:[%s3 + $0x20] sm:$0xf] %v2618
  %2635 = vst [vmem:[%s3 + $0x24] sm:$0xf] %v2619
  %2636 = vst [vmem:[%s3 + $0x28] sm:$0xf] %v2620
  %2637 = vst [vmem:[%s3 + $0x2c] sm:$0xf] %v2621
  %2638 = vst [vmem:[%s3 + $0x30] sm:$0xf] %v2622
  %2639 = vst [vmem:[%s3 + $0x34] sm:$0xf] %v2623
  %2640 = vst [vmem:[%s3 + $0x38] sm:$0xf] %v2624
  %2641 = vst [vmem:[%s3 + $0x3c] sm:$0xf] %v2625
  // Predicated region
  $region14: #{svhn_encoder_forward.5} parent=0 // pred_check
    _
  $region15: #{svhn_encoder_forward.5} parent=0 // pred_check_branch
    %2643 = sbr.rel (0) target = $region17
  $region16: #{svhn_encoder_forward.5} parent=0 // pred_region
    _
  $region17: #{svhn_encoder_forward.5} parent=0 // pred_fallthru
    _
  // Predicated region
  $region18: #{svhn_encoder_forward.5} parent=0 // pred_check
    _
  $region19: #{svhn_encoder_forward.5} parent=0 // pred_check_branch
    %2645 = sbr.rel (0) target = $region21
  $region20: #{svhn_encoder_forward.5} parent=0 // pred_region
    _
  $region21: #{svhn_encoder_forward.5} parent=0 // pred_fallthru
    _

// kernel: svhn_encoder_forward.6
$region0: #{svhn_encoder_forward.6}
  #allocation0 [shape = 'u32[]', space=smem, size = 0x4, offset = 0x4, fixed_abs, tag = 'smem constant byte address 0x4 - core index']
  #allocation1 [shape = 'u32[72,128]{1,0:T(1,128)}', space=vmem, size = 0x9000, scoped, tag = 'internal scratch']
  %s0 = inlined_call_operand.vmem [shape: bf16[32,2048], index: 0, kind: input, shape index: {}]
  %s1 = inlined_call_operand.vmem [shape: bf16[2048,128], index: 1, kind: input, shape index: {}]
  %s2 = inlined_call_operand.vmem [shape: f32[1,128], index: 2, kind: input, shape index: {}]
  %s3 = inlined_call_operand.vmem [shape: bf16[32,128], index: 3, kind: output, shape index: {}]
  %s4 = sld [smem:[#allocation0]]
  $region22: #{svhn_encoder_forward.6} parent=0
    _
  %s6 = ssub.s32 1, %s4
  %s7 = scalar_select 0, %s6, %s4
  // Predicated region
  $region2: #{svhn_encoder_forward.6} parent=0 // pred_check
    _
  $region3: #{svhn_encoder_forward.6} parent=0 // pred_check_branch
    %9 = sbr.rel (0) target = $region5
  $region4: #{svhn_encoder_forward.6} parent=0 // pred_region
    _
  $region5: #{svhn_encoder_forward.6} parent=0 // pred_fallthru
    _
  // Predicated region
  $region6: #{svhn_encoder_forward.6} parent=0 // pred_check
    _
  $region7: #{svhn_encoder_forward.6} parent=0 // pred_check_branch
    %11 = sbr.rel (0) target = $region9
  $region8: #{svhn_encoder_forward.6} parent=0 // pred_region
    _
  $region9: #{svhn_encoder_forward.6} parent=0 // pred_fallthru
    _
  // Predicated region
  $region10: #{svhn_encoder_forward.6} parent=0 // pred_check
    _
  $region11: #{svhn_encoder_forward.6} parent=0 // pred_check_branch
    %13 = sbr.rel (0) target = $region13
  $region12: #{svhn_encoder_forward.6} parent=0 // pred_region
    _
  $region13: #{svhn_encoder_forward.6} parent=0 // pred_fallthru
    _
  %v14 = vld [vmem:[%s0] sm:$0xff]
  %v15 = vld [vmem:[%s0 + $0x8] sm:$0xff]
  %v16 = vld [vmem:[%s0 + $0x10] sm:$0xff]
  %v17 = vld [vmem:[%s0 + $0x18] sm:$0xff]
  %v18 = vld [vmem:[%s0 + $0x20] sm:$0xff]
  %v19 = vld [vmem:[%s0 + $0x28] sm:$0xff]
  %v20 = vld [vmem:[%s0 + $0x30] sm:$0xff]
  %v21 = vld [vmem:[%s0 + $0x38] sm:$0xff]
  %v22 = vld [vmem:[%s0 + $0x40] sm:$0xff]
  %v23 = vld [vmem:[%s0 + $0x48] sm:$0xff]
  %v24 = vld [vmem:[%s0 + $0x50] sm:$0xff]
  %v25 = vld [vmem:[%s0 + $0x58] sm:$0xff]
  %v26 = vld [vmem:[%s0 + $0x60] sm:$0xff]
  %v27 = vld [vmem:[%s0 + $0x68] sm:$0xff]
  %v28 = vld [vmem:[%s0 + $0x70] sm:$0xff]
  %v29 = vld [vmem:[%s0 + $0x78] sm:$0xff]
  %v30 = vld [vmem:[%s0 + $0x80] sm:$0xff]
  %v31 = vld [vmem:[%s0 + $0x88] sm:$0xff]
  %v32 = vld [vmem:[%s0 + $0x90] sm:$0xff]
  %v33 = vld [vmem:[%s0 + $0x98] sm:$0xff]
  %v34 = vld [vmem:[%s0 + $0xa0] sm:$0xff]
  %v35 = vld [vmem:[%s0 + $0xa8] sm:$0xff]
  %v36 = vld [vmem:[%s0 + $0xb0] sm:$0xff]
  %v37 = vld [vmem:[%s0 + $0xb8] sm:$0xff]
  %v38 = vld [vmem:[%s0 + $0xc0] sm:$0xff]
  %v39 = vld [vmem:[%s0 + $0xc8] sm:$0xff]
  %v40 = vld [vmem:[%s0 + $0xd0] sm:$0xff]
  %v41 = vld [vmem:[%s0 + $0xd8] sm:$0xff]
  %v42 = vld [vmem:[%s0 + $0xe0] sm:$0xff]
  %v43 = vld [vmem:[%s0 + $0xe8] sm:$0xff]
  %v44 = vld [vmem:[%s0 + $0xf0] sm:$0xff]
  %v45 = vld [vmem:[%s0 + $0xf8] sm:$0xff]
  %v46 = vld [vmem:[%s1] sm:$0xf]
  %v47 = vld [vmem:[%s1 + $0x4] sm:$0xf]
  %v48 = vld [vmem:[%s1 + $0x8] sm:$0xf]
  %v49 = vld [vmem:[%s1 + $0xc] sm:$0xf]
  %v50 = vld [vmem:[%s1 + $0x10] sm:$0xf]
  %v51 = vld [vmem:[%s1 + $0x14] sm:$0xf]
  %v52 = vld [vmem:[%s1 + $0x18] sm:$0xf]
  %v53 = vld [vmem:[%s1 + $0x1c] sm:$0xf]
  %v54 = vld [vmem:[%s1 + $0x20] sm:$0xf]
  %v55 = vld [vmem:[%s1 + $0x24] sm:$0xf]
  %v56 = vld [vmem:[%s1 + $0x28] sm:$0xf]
  %v57 = vld [vmem:[%s1 + $0x2c] sm:$0xf]
  %v58 = vld [vmem:[%s1 + $0x30] sm:$0xf]
  %v59 = vld [vmem:[%s1 + $0x34] sm:$0xf]
  %v60 = vld [vmem:[%s1 + $0x38] sm:$0xf]
  %v61 = vld [vmem:[%s1 + $0x3c] sm:$0xf]
  %v62 = vld [vmem:[%s1 + $0x40] sm:$0xf]
  %v63 = vld [vmem:[%s1 + $0x44] sm:$0xf]
  %v64 = vld [vmem:[%s1 + $0x48] sm:$0xf]
  %v65 = vld [vmem:[%s1 + $0x4c] sm:$0xf]
  %v66 = vld [vmem:[%s1 + $0x50] sm:$0xf]
  %v67 = vld [vmem:[%s1 + $0x54] sm:$0xf]
  %v68 = vld [vmem:[%s1 + $0x58] sm:$0xf]
  %v69 = vld [vmem:[%s1 + $0x5c] sm:$0xf]
  %v70 = vld [vmem:[%s1 + $0x60] sm:$0xf]
  %v71 = vld [vmem:[%s1 + $0x64] sm:$0xf]
  %v72 = vld [vmem:[%s1 + $0x68] sm:$0xf]
  %v73 = vld [vmem:[%s1 + $0x6c] sm:$0xf]
  %v74 = vld [vmem:[%s1 + $0x70] sm:$0xf]
  %v75 = vld [vmem:[%s1 + $0x74] sm:$0xf]
  %v76 = vld [vmem:[%s1 + $0x78] sm:$0xf]
  %v77 = vld [vmem:[%s1 + $0x7c] sm:$0xf]
  %v78 = vld [vmem:[%s1 + $0x80] sm:$0xf]
  %v79 = vld [vmem:[%s1 + $0x84] sm:$0xf]
  %v80 = vld [vmem:[%s1 + $0x88] sm:$0xf]
  %v81 = vld [vmem:[%s1 + $0x8c] sm:$0xf]
  %v82 = vld [vmem:[%s1 + $0x90] sm:$0xf]
  %v83 = vld [vmem:[%s1 + $0x94] sm:$0xf]
  %v84 = vld [vmem:[%s1 + $0x98] sm:$0xf]
  %v85 = vld [vmem:[%s1 + $0x9c] sm:$0xf]
  %v86 = vld [vmem:[%s1 + $0xa0] sm:$0xf]
  %v87 = vld [vmem:[%s1 + $0xa4] sm:$0xf]
  %v88 = vld [vmem:[%s1 + $0xa8] sm:$0xf]
  %v89 = vld [vmem:[%s1 + $0xac] sm:$0xf]
  %v90 = vld [vmem:[%s1 + $0xb0] sm:$0xf]
  %v91 = vld [vmem:[%s1 + $0xb4] sm:$0xf]
  %v92 = vld [vmem:[%s1 + $0xb8] sm:$0xf]
  %v93 = vld [vmem:[%s1 + $0xbc] sm:$0xf]
  %v94 = vld [vmem:[%s1 + $0xc0] sm:$0xf]
  %v95 = vld [vmem:[%s1 + $0xc4] sm:$0xf]
  %v96 = vld [vmem:[%s1 + $0xc8] sm:$0xf]
  %v97 = vld [vmem:[%s1 + $0xcc] sm:$0xf]
  %v98 = vld [vmem:[%s1 + $0xd0] sm:$0xf]
  %v99 = vld [vmem:[%s1 + $0xd4] sm:$0xf]
  %v100 = vld [vmem:[%s1 + $0xd8] sm:$0xf]
  %v101 = vld [vmem:[%s1 + $0xdc] sm:$0xf]
  %v102 = vld [vmem:[%s1 + $0xe0] sm:$0xf]
  %v103 = vld [vmem:[%s1 + $0xe4] sm:$0xf]
  %v104 = vld [vmem:[%s1 + $0xe8] sm:$0xf]
  %v105 = vld [vmem:[%s1 + $0xec] sm:$0xf]
  %v106 = vld [vmem:[%s1 + $0xf0] sm:$0xf]
  %v107 = vld [vmem:[%s1 + $0xf4] sm:$0xf]
  %v108 = vld [vmem:[%s1 + $0xf8] sm:$0xf]
  %v109 = vld [vmem:[%s1 + $0xfc] sm:$0xf]
  %v110 = vld [vmem:[%s1 + $0x100] sm:$0xf]
  %v111 = vld [vmem:[%s1 + $0x104] sm:$0xf]
  %v112 = vld [vmem:[%s1 + $0x108] sm:$0xf]
  %v113 = vld [vmem:[%s1 + $0x10c] sm:$0xf]
  %v114 = vld [vmem:[%s1 + $0x110] sm:$0xf]
  %v115 = vld [vmem:[%s1 + $0x114] sm:$0xf]
  %v116 = vld [vmem:[%s1 + $0x118] sm:$0xf]
  %v117 = vld [vmem:[%s1 + $0x11c] sm:$0xf]
  %v118 = vld [vmem:[%s1 + $0x120] sm:$0xf]
  %v119 = vld [vmem:[%s1 + $0x124] sm:$0xf]
  %v120 = vld [vmem:[%s1 + $0x128] sm:$0xf]
  %v121 = vld [vmem:[%s1 + $0x12c] sm:$0xf]
  %v122 = vld [vmem:[%s1 + $0x130] sm:$0xf]
  %v123 = vld [vmem:[%s1 + $0x134] sm:$0xf]
  %v124 = vld [vmem:[%s1 + $0x138] sm:$0xf]
  %v125 = vld [vmem:[%s1 + $0x13c] sm:$0xf]
  %v126 = vld [vmem:[%s1 + $0x140] sm:$0xf]
  %v127 = vld [vmem:[%s1 + $0x144] sm:$0xf]
  %v128 = vld [vmem:[%s1 + $0x148] sm:$0xf]
  %v129 = vld [vmem:[%s1 + $0x14c] sm:$0xf]
  %v130 = vld [vmem:[%s1 + $0x150] sm:$0xf]
  %v131 = vld [vmem:[%s1 + $0x154] sm:$0xf]
  %v132 = vld [vmem:[%s1 + $0x158] sm:$0xf]
  %v133 = vld [vmem:[%s1 + $0x15c] sm:$0xf]
  %v134 = vld [vmem:[%s1 + $0x160] sm:$0xf]
  %v135 = vld [vmem:[%s1 + $0x164] sm:$0xf]
  %v136 = vld [vmem:[%s1 + $0x168] sm:$0xf]
  %v137 = vld [vmem:[%s1 + $0x16c] sm:$0xf]
  %v138 = vld [vmem:[%s1 + $0x170] sm:$0xf]
  %v139 = vld [vmem:[%s1 + $0x174] sm:$0xf]
  %v140 = vld [vmem:[%s1 + $0x178] sm:$0xf]
  %v141 = vld [vmem:[%s1 + $0x17c] sm:$0xf]
  %v142 = vld [vmem:[%s1 + $0x180] sm:$0xf]
  %v143 = vld [vmem:[%s1 + $0x184] sm:$0xf]
  %v144 = vld [vmem:[%s1 + $0x188] sm:$0xf]
  %v145 = vld [vmem:[%s1 + $0x18c] sm:$0xf]
  %v146 = vld [vmem:[%s1 + $0x190] sm:$0xf]
  %v147 = vld [vmem:[%s1 + $0x194] sm:$0xf]
  %v148 = vld [vmem:[%s1 + $0x198] sm:$0xf]
  %v149 = vld [vmem:[%s1 + $0x19c] sm:$0xf]
  %v150 = vld [vmem:[%s1 + $0x1a0] sm:$0xf]
  %v151 = vld [vmem:[%s1 + $0x1a4] sm:$0xf]
  %v152 = vld [vmem:[%s1 + $0x1a8] sm:$0xf]
  %v153 = vld [vmem:[%s1 + $0x1ac] sm:$0xf]
  %v154 = vld [vmem:[%s1 + $0x1b0] sm:$0xf]
  %v155 = vld [vmem:[%s1 + $0x1b4] sm:$0xf]
  %v156 = vld [vmem:[%s1 + $0x1b8] sm:$0xf]
  %v157 = vld [vmem:[%s1 + $0x1bc] sm:$0xf]
  %v158 = vld [vmem:[%s1 + $0x1c0] sm:$0xf]
  %v159 = vld [vmem:[%s1 + $0x1c4] sm:$0xf]
  %v160 = vld [vmem:[%s1 + $0x1c8] sm:$0xf]
  %v161 = vld [vmem:[%s1 + $0x1cc] sm:$0xf]
  %v162 = vld [vmem:[%s1 + $0x1d0] sm:$0xf]
  %v163 = vld [vmem:[%s1 + $0x1d4] sm:$0xf]
  %v164 = vld [vmem:[%s1 + $0x1d8] sm:$0xf]
  %v165 = vld [vmem:[%s1 + $0x1dc] sm:$0xf]
  %v166 = vld [vmem:[%s1 + $0x1e0] sm:$0xf]
  %v167 = vld [vmem:[%s1 + $0x1e4] sm:$0xf]
  %v168 = vld [vmem:[%s1 + $0x1e8] sm:$0xf]
  %v169 = vld [vmem:[%s1 + $0x1ec] sm:$0xf]
  %v170 = vld [vmem:[%s1 + $0x1f0] sm:$0xf]
  %v171 = vld [vmem:[%s1 + $0x1f4] sm:$0xf]
  %v172 = vld [vmem:[%s1 + $0x1f8] sm:$0xf]
  %v173 = vld [vmem:[%s1 + $0x1fc] sm:$0xf]
  %v174 = vld [vmem:[%s1 + $0x200] sm:$0xf]
  %v175 = vld [vmem:[%s1 + $0x204] sm:$0xf]
  %v176 = vld [vmem:[%s1 + $0x208] sm:$0xf]
  %v177 = vld [vmem:[%s1 + $0x20c] sm:$0xf]
  %v178 = vld [vmem:[%s1 + $0x210] sm:$0xf]
  %v179 = vld [vmem:[%s1 + $0x214] sm:$0xf]
  %v180 = vld [vmem:[%s1 + $0x218] sm:$0xf]
  %v181 = vld [vmem:[%s1 + $0x21c] sm:$0xf]
  %v182 = vld [vmem:[%s1 + $0x220] sm:$0xf]
  %v183 = vld [vmem:[%s1 + $0x224] sm:$0xf]
  %v184 = vld [vmem:[%s1 + $0x228] sm:$0xf]
  %v185 = vld [vmem:[%s1 + $0x22c] sm:$0xf]
  %v186 = vld [vmem:[%s1 + $0x230] sm:$0xf]
  %v187 = vld [vmem:[%s1 + $0x234] sm:$0xf]
  %v188 = vld [vmem:[%s1 + $0x238] sm:$0xf]
  %v189 = vld [vmem:[%s1 + $0x23c] sm:$0xf]
  %v190 = vld [vmem:[%s1 + $0x240] sm:$0xf]
  %v191 = vld [vmem:[%s1 + $0x244] sm:$0xf]
  %v192 = vld [vmem:[%s1 + $0x248] sm:$0xf]
  %v193 = vld [vmem:[%s1 + $0x24c] sm:$0xf]
  %v194 = vld [vmem:[%s1 + $0x250] sm:$0xf]
  %v195 = vld [vmem:[%s1 + $0x254] sm:$0xf]
  %v196 = vld [vmem:[%s1 + $0x258] sm:$0xf]
  %v197 = vld [vmem:[%s1 + $0x25c] sm:$0xf]
  %v198 = vld [vmem:[%s1 + $0x260] sm:$0xf]
  %v199 = vld [vmem:[%s1 + $0x264] sm:$0xf]
  %v200 = vld [vmem:[%s1 + $0x268] sm:$0xf]
  %v201 = vld [vmem:[%s1 + $0x26c] sm:$0xf]
  %v202 = vld [vmem:[%s1 + $0x270] sm:$0xf]
  %v203 = vld [vmem:[%s1 + $0x274] sm:$0xf]
  %v204 = vld [vmem:[%s1 + $0x278] sm:$0xf]
  %v205 = vld [vmem:[%s1 + $0x27c] sm:$0xf]
  %v206 = vld [vmem:[%s1 + $0x280] sm:$0xf]
  %v207 = vld [vmem:[%s1 + $0x284] sm:$0xf]
  %v208 = vld [vmem:[%s1 + $0x288] sm:$0xf]
  %v209 = vld [vmem:[%s1 + $0x28c] sm:$0xf]
  %v210 = vld [vmem:[%s1 + $0x290] sm:$0xf]
  %v211 = vld [vmem:[%s1 + $0x294] sm:$0xf]
  %v212 = vld [vmem:[%s1 + $0x298] sm:$0xf]
  %v213 = vld [vmem:[%s1 + $0x29c] sm:$0xf]
  %v214 = vld [vmem:[%s1 + $0x2a0] sm:$0xf]
  %v215 = vld [vmem:[%s1 + $0x2a4] sm:$0xf]
  %v216 = vld [vmem:[%s1 + $0x2a8] sm:$0xf]
  %v217 = vld [vmem:[%s1 + $0x2ac] sm:$0xf]
  %v218 = vld [vmem:[%s1 + $0x2b0] sm:$0xf]
  %v219 = vld [vmem:[%s1 + $0x2b4] sm:$0xf]
  %v220 = vld [vmem:[%s1 + $0x2b8] sm:$0xf]
  %v221 = vld [vmem:[%s1 + $0x2bc] sm:$0xf]
  %v222 = vld [vmem:[%s1 + $0x2c0] sm:$0xf]
  %v223 = vld [vmem:[%s1 + $0x2c4] sm:$0xf]
  %v224 = vld [vmem:[%s1 + $0x2c8] sm:$0xf]
  %v225 = vld [vmem:[%s1 + $0x2cc] sm:$0xf]
  %v226 = vld [vmem:[%s1 + $0x2d0] sm:$0xf]
  %v227 = vld [vmem:[%s1 + $0x2d4] sm:$0xf]
  %v228 = vld [vmem:[%s1 + $0x2d8] sm:$0xf]
  %v229 = vld [vmem:[%s1 + $0x2dc] sm:$0xf]
  %v230 = vld [vmem:[%s1 + $0x2e0] sm:$0xf]
  %v231 = vld [vmem:[%s1 + $0x2e4] sm:$0xf]
  %v232 = vld [vmem:[%s1 + $0x2e8] sm:$0xf]
  %v233 = vld [vmem:[%s1 + $0x2ec] sm:$0xf]
  %v234 = vld [vmem:[%s1 + $0x2f0] sm:$0xf]
  %v235 = vld [vmem:[%s1 + $0x2f4] sm:$0xf]
  %v236 = vld [vmem:[%s1 + $0x2f8] sm:$0xf]
  %v237 = vld [vmem:[%s1 + $0x2fc] sm:$0xf]
  %v238 = vld [vmem:[%s1 + $0x300] sm:$0xf]
  %v239 = vld [vmem:[%s1 + $0x304] sm:$0xf]
  %v240 = vld [vmem:[%s1 + $0x308] sm:$0xf]
  %v241 = vld [vmem:[%s1 + $0x30c] sm:$0xf]
  %v242 = vld [vmem:[%s1 + $0x310] sm:$0xf]
  %v243 = vld [vmem:[%s1 + $0x314] sm:$0xf]
  %v244 = vld [vmem:[%s1 + $0x318] sm:$0xf]
  %v245 = vld [vmem:[%s1 + $0x31c] sm:$0xf]
  %v246 = vld [vmem:[%s1 + $0x320] sm:$0xf]
  %v247 = vld [vmem:[%s1 + $0x324] sm:$0xf]
  %v248 = vld [vmem:[%s1 + $0x328] sm:$0xf]
  %v249 = vld [vmem:[%s1 + $0x32c] sm:$0xf]
  %v250 = vld [vmem:[%s1 + $0x330] sm:$0xf]
  %v251 = vld [vmem:[%s1 + $0x334] sm:$0xf]
  %v252 = vld [vmem:[%s1 + $0x338] sm:$0xf]
  %v253 = vld [vmem:[%s1 + $0x33c] sm:$0xf]
  %v254 = vld [vmem:[%s1 + $0x340] sm:$0xf]
  %v255 = vld [vmem:[%s1 + $0x344] sm:$0xf]
  %v256 = vld [vmem:[%s1 + $0x348] sm:$0xf]
  %v257 = vld [vmem:[%s1 + $0x34c] sm:$0xf]
  %v258 = vld [vmem:[%s1 + $0x350] sm:$0xf]
  %v259 = vld [vmem:[%s1 + $0x354] sm:$0xf]
  %v260 = vld [vmem:[%s1 + $0x358] sm:$0xf]
  %v261 = vld [vmem:[%s1 + $0x35c] sm:$0xf]
  %v262 = vld [vmem:[%s1 + $0x360] sm:$0xf]
  %v263 = vld [vmem:[%s1 + $0x364] sm:$0xf]
  %v264 = vld [vmem:[%s1 + $0x368] sm:$0xf]
  %v265 = vld [vmem:[%s1 + $0x36c] sm:$0xf]
  %v266 = vld [vmem:[%s1 + $0x370] sm:$0xf]
  %v267 = vld [vmem:[%s1 + $0x374] sm:$0xf]
  %v268 = vld [vmem:[%s1 + $0x378] sm:$0xf]
  %v269 = vld [vmem:[%s1 + $0x37c] sm:$0xf]
  %v270 = vld [vmem:[%s1 + $0x380] sm:$0xf]
  %v271 = vld [vmem:[%s1 + $0x384] sm:$0xf]
  %v272 = vld [vmem:[%s1 + $0x388] sm:$0xf]
  %v273 = vld [vmem:[%s1 + $0x38c] sm:$0xf]
  %v274 = vld [vmem:[%s1 + $0x390] sm:$0xf]
  %v275 = vld [vmem:[%s1 + $0x394] sm:$0xf]
  %v276 = vld [vmem:[%s1 + $0x398] sm:$0xf]
  %v277 = vld [vmem:[%s1 + $0x39c] sm:$0xf]
  %v278 = vld [vmem:[%s1 + $0x3a0] sm:$0xf]
  %v279 = vld [vmem:[%s1 + $0x3a4] sm:$0xf]
  %v280 = vld [vmem:[%s1 + $0x3a8] sm:$0xf]
  %v281 = vld [vmem:[%s1 + $0x3ac] sm:$0xf]
  %v282 = vld [vmem:[%s1 + $0x3b0] sm:$0xf]
  %v283 = vld [vmem:[%s1 + $0x3b4] sm:$0xf]
  %v284 = vld [vmem:[%s1 + $0x3b8] sm:$0xf]
  %v285 = vld [vmem:[%s1 + $0x3bc] sm:$0xf]
  %v286 = vld [vmem:[%s1 + $0x3c0] sm:$0xf]
  %v287 = vld [vmem:[%s1 + $0x3c4] sm:$0xf]
  %v288 = vld [vmem:[%s1 + $0x3c8] sm:$0xf]
  %v289 = vld [vmem:[%s1 + $0x3cc] sm:$0xf]
  %v290 = vld [vmem:[%s1 + $0x3d0] sm:$0xf]
  %v291 = vld [vmem:[%s1 + $0x3d4] sm:$0xf]
  %v292 = vld [vmem:[%s1 + $0x3d8] sm:$0xf]
  %v293 = vld [vmem:[%s1 + $0x3dc] sm:$0xf]
  %v294 = vld [vmem:[%s1 + $0x3e0] sm:$0xf]
  %v295 = vld [vmem:[%s1 + $0x3e4] sm:$0xf]
  %v296 = vld [vmem:[%s1 + $0x3e8] sm:$0xf]
  %v297 = vld [vmem:[%s1 + $0x3ec] sm:$0xf]
  %v298 = vld [vmem:[%s1 + $0x3f0] sm:$0xf]
  %v299 = vld [vmem:[%s1 + $0x3f4] sm:$0xf]
  %v300 = vld [vmem:[%s1 + $0x3f8] sm:$0xf]
  %v301 = vld [vmem:[%s1 + $0x3fc] sm:$0xf]
  %v302 = vld [vmem:[%s2] sm:$0x1]
  %v304 = vperm.slane %v302, 0
  %v338 = vunpack.c.l.b16 %v14
  %v339 = vunpack.c.h.b16 %v14
  %v340 = vunpack.c.l.b16 %v15
  %v341 = vunpack.c.h.b16 %v15
  %v342 = vunpack.c.l.b16 %v16
  %v343 = vunpack.c.h.b16 %v16
  %v344 = vunpack.c.l.b16 %v17
  %v345 = vunpack.c.h.b16 %v17
  %v346 = vunpack.c.l.b16 %v18
  %v347 = vunpack.c.h.b16 %v18
  %v348 = vunpack.c.l.b16 %v19
  %v349 = vunpack.c.h.b16 %v19
  %v350 = vunpack.c.l.b16 %v20
  %v351 = vunpack.c.h.b16 %v20
  %v352 = vunpack.c.l.b16 %v21
  %v353 = vunpack.c.h.b16 %v21
  %v354 = vunpack.c.l.b16 %v22
  %v355 = vunpack.c.h.b16 %v22
  %v356 = vunpack.c.l.b16 %v23
  %v357 = vunpack.c.h.b16 %v23
  %v358 = vunpack.c.l.b16 %v24
  %v359 = vunpack.c.h.b16 %v24
  %v360 = vunpack.c.l.b16 %v25
  %v361 = vunpack.c.h.b16 %v25
  %v362 = vunpack.c.l.b16 %v26
  %v363 = vunpack.c.h.b16 %v26
  %v364 = vunpack.c.l.b16 %v27
  %v365 = vunpack.c.h.b16 %v27
  %v366 = vunpack.c.l.b16 %v28
  %v367 = vunpack.c.h.b16 %v28
  %v368 = vunpack.c.l.b16 %v29
  %v369 = vunpack.c.h.b16 %v29
  %v370 = vunpack.c.l.b16 %v30
  %v371 = vunpack.c.h.b16 %v30
  %v372 = vunpack.c.l.b16 %v31
  %v373 = vunpack.c.h.b16 %v31
  %v374 = vunpack.c.l.b16 %v32
  %v375 = vunpack.c.h.b16 %v32
  %v376 = vunpack.c.l.b16 %v33
  %v377 = vunpack.c.h.b16 %v33
  %v378 = vunpack.c.l.b16 %v34
  %v379 = vunpack.c.h.b16 %v34
  %v380 = vunpack.c.l.b16 %v35
  %v381 = vunpack.c.h.b16 %v35
  %v382 = vunpack.c.l.b16 %v36
  %v383 = vunpack.c.h.b16 %v36
  %v384 = vunpack.c.l.b16 %v37
  %v385 = vunpack.c.h.b16 %v37
  %v386 = vunpack.c.l.b16 %v38
  %v387 = vunpack.c.h.b16 %v38
  %v388 = vunpack.c.l.b16 %v39
  %v389 = vunpack.c.h.b16 %v39
  %v390 = vunpack.c.l.b16 %v40
  %v391 = vunpack.c.h.b16 %v40
  %v392 = vunpack.c.l.b16 %v41
  %v393 = vunpack.c.h.b16 %v41
  %v394 = vunpack.c.l.b16 %v42
  %v395 = vunpack.c.h.b16 %v42
  %v396 = vunpack.c.l.b16 %v43
  %v397 = vunpack.c.h.b16 %v43
  %v398 = vunpack.c.l.b16 %v44
  %v399 = vunpack.c.h.b16 %v44
  %v400 = vunpack.c.l.b16 %v45
  %v401 = vunpack.c.h.b16 %v45
  %v402 = vpack.c.b16 %v354, %v338
  %v403 = vpack.c.b16 %v355, %v339
  %v404 = vpack.c.b16 %v356, %v340
  %v405 = vpack.c.b16 %v357, %v341
  %v406 = vpack.c.b16 %v358, %v342
  %v407 = vpack.c.b16 %v359, %v343
  %v408 = vpack.c.b16 %v360, %v344
  %v409 = vpack.c.b16 %v361, %v345
  %v410 = vpack.c.b16 %v362, %v346
  %v411 = vpack.c.b16 %v363, %v347
  %v412 = vpack.c.b16 %v364, %v348
  %v413 = vpack.c.b16 %v365, %v349
  %v414 = vpack.c.b16 %v366, %v350
  %v415 = vpack.c.b16 %v367, %v351
  %v416 = vpack.c.b16 %v368, %v352
  %v417 = vpack.c.b16 %v369, %v353
  %v418 = vpack.c.b16 %v386, %v370
  %v419 = vpack.c.b16 %v387, %v371
  %v420 = vpack.c.b16 %v388, %v372
  %v421 = vpack.c.b16 %v389, %v373
  %v422 = vpack.c.b16 %v390, %v374
  %v423 = vpack.c.b16 %v391, %v375
  %v424 = vpack.c.b16 %v392, %v376
  %v425 = vpack.c.b16 %v393, %v377
  %v426 = vpack.c.b16 %v394, %v378
  %v427 = vpack.c.b16 %v395, %v379
  %v428 = vpack.c.b16 %v396, %v380
  %v429 = vpack.c.b16 %v397, %v381
  %v430 = vpack.c.b16 %v398, %v382
  %v431 = vpack.c.b16 %v399, %v383
  %v432 = vpack.c.b16 %v400, %v384
  %v433 = vpack.c.b16 %v401, %v385
  %v722 = vunpack.c.l.b16 %v46
  %v723 = vunpack.c.l.b16 %v47
  %v724 = vunpack.c.l.b16 %v48
  %v725 = vunpack.c.l.b16 %v49
  %v726 = vunpack.c.l.b16 %v50
  %v727 = vunpack.c.l.b16 %v51
  %v728 = vunpack.c.l.b16 %v52
  %v729 = vunpack.c.l.b16 %v53
  %v730 = vunpack.c.l.b16 %v54
  %v731 = vunpack.c.l.b16 %v55
  %v732 = vunpack.c.l.b16 %v56
  %v733 = vunpack.c.l.b16 %v57
  %v734 = vunpack.c.l.b16 %v58
  %v735 = vunpack.c.l.b16 %v59
  %v736 = vunpack.c.l.b16 %v60
  %v737 = vunpack.c.l.b16 %v61
  %v738 = vunpack.c.l.b16 %v62
  %v739 = vunpack.c.l.b16 %v63
  %v740 = vunpack.c.l.b16 %v64
  %v741 = vunpack.c.l.b16 %v65
  %v742 = vunpack.c.l.b16 %v66
  %v743 = vunpack.c.l.b16 %v67
  %v744 = vunpack.c.l.b16 %v68
  %v745 = vunpack.c.l.b16 %v69
  %v746 = vunpack.c.l.b16 %v70
  %v747 = vunpack.c.l.b16 %v71
  %v748 = vunpack.c.l.b16 %v72
  %v749 = vunpack.c.l.b16 %v73
  %v750 = vunpack.c.l.b16 %v74
  %v751 = vunpack.c.l.b16 %v75
  %v752 = vunpack.c.l.b16 %v76
  %v753 = vunpack.c.l.b16 %v77
  %v754 = vunpack.c.l.b16 %v78
  %v755 = vunpack.c.l.b16 %v79
  %v756 = vunpack.c.l.b16 %v80
  %v757 = vunpack.c.l.b16 %v81
  %v758 = vunpack.c.l.b16 %v82
  %v759 = vunpack.c.l.b16 %v83
  %v760 = vunpack.c.l.b16 %v84
  %v761 = vunpack.c.l.b16 %v85
  %v762 = vunpack.c.l.b16 %v86
  %v763 = vunpack.c.l.b16 %v87
  %v764 = vunpack.c.l.b16 %v88
  %v765 = vunpack.c.l.b16 %v89
  %v766 = vunpack.c.l.b16 %v90
  %v767 = vunpack.c.l.b16 %v91
  %v768 = vunpack.c.l.b16 %v92
  %v769 = vunpack.c.l.b16 %v93
  %v770 = vunpack.c.l.b16 %v94
  %v771 = vunpack.c.l.b16 %v95
  %v772 = vunpack.c.l.b16 %v96
  %v773 = vunpack.c.l.b16 %v97
  %v774 = vunpack.c.l.b16 %v98
  %v775 = vunpack.c.l.b16 %v99
  %v776 = vunpack.c.l.b16 %v100
  %v777 = vunpack.c.l.b16 %v101
  %v778 = vunpack.c.l.b16 %v102
  %v779 = vunpack.c.l.b16 %v103
  %v780 = vunpack.c.l.b16 %v104
  %v781 = vunpack.c.l.b16 %v105
  %v782 = vunpack.c.l.b16 %v106
  %v783 = vunpack.c.l.b16 %v107
  %v784 = vunpack.c.l.b16 %v108
  %v785 = vunpack.c.l.b16 %v109
  %v786 = vunpack.c.l.b16 %v110
  %v787 = vunpack.c.l.b16 %v111
  %v788 = vunpack.c.l.b16 %v112
  %v789 = vunpack.c.l.b16 %v113
  %v790 = vunpack.c.l.b16 %v114
  %v791 = vunpack.c.l.b16 %v115
  %v792 = vunpack.c.l.b16 %v116
  %v793 = vunpack.c.l.b16 %v117
  %v794 = vunpack.c.l.b16 %v118
  %v795 = vunpack.c.l.b16 %v119
  %v796 = vunpack.c.l.b16 %v120
  %v797 = vunpack.c.l.b16 %v121
  %v798 = vunpack.c.l.b16 %v122
  %v799 = vunpack.c.l.b16 %v123
  %v800 = vunpack.c.l.b16 %v124
  %v801 = vunpack.c.l.b16 %v125
  %v802 = vunpack.c.l.b16 %v126
  %v803 = vunpack.c.l.b16 %v127
  %v804 = vunpack.c.l.b16 %v128
  %v805 = vunpack.c.l.b16 %v129
  %v806 = vunpack.c.l.b16 %v130
  %v807 = vunpack.c.l.b16 %v131
  %v808 = vunpack.c.l.b16 %v132
  %v809 = vunpack.c.l.b16 %v133
  %v810 = vunpack.c.l.b16 %v134
  %v811 = vunpack.c.l.b16 %v135
  %v812 = vunpack.c.l.b16 %v136
  %v813 = vunpack.c.l.b16 %v137
  %v814 = vunpack.c.l.b16 %v138
  %v815 = vunpack.c.l.b16 %v139
  %v816 = vunpack.c.l.b16 %v140
  %v817 = vunpack.c.l.b16 %v141
  %v818 = vunpack.c.l.b16 %v142
  %v819 = vunpack.c.l.b16 %v143
  %v820 = vunpack.c.l.b16 %v144
  %v821 = vunpack.c.l.b16 %v145
  %v822 = vunpack.c.l.b16 %v146
  %v823 = vunpack.c.l.b16 %v147
  %v824 = vunpack.c.l.b16 %v148
  %v825 = vunpack.c.l.b16 %v149
  %v826 = vunpack.c.l.b16 %v150
  %v827 = vunpack.c.l.b16 %v151
  %v828 = vunpack.c.l.b16 %v152
  %v829 = vunpack.c.l.b16 %v153
  %v830 = vunpack.c.l.b16 %v154
  %v831 = vunpack.c.l.b16 %v155
  %v832 = vunpack.c.l.b16 %v156
  %v833 = vunpack.c.l.b16 %v157
  %v834 = vunpack.c.l.b16 %v158
  %v835 = vunpack.c.l.b16 %v159
  %v836 = vunpack.c.l.b16 %v160
  %v837 = vunpack.c.l.b16 %v161
  %v838 = vunpack.c.l.b16 %v162
  %v839 = vunpack.c.l.b16 %v163
  %v840 = vunpack.c.l.b16 %v164
  %v841 = vunpack.c.l.b16 %v165
  %v842 = vunpack.c.l.b16 %v166
  %v843 = vunpack.c.l.b16 %v167
  %v844 = vunpack.c.l.b16 %v168
  %v845 = vunpack.c.l.b16 %v169
  %v846 = vunpack.c.l.b16 %v170
  %v847 = vunpack.c.l.b16 %v171
  %v848 = vunpack.c.l.b16 %v172
  %v849 = vunpack.c.l.b16 %v173
  %v850 = vunpack.c.l.b16 %v174
  %v851 = vunpack.c.l.b16 %v175
  %v852 = vunpack.c.l.b16 %v176
  %v853 = vunpack.c.l.b16 %v177
  %v854 = vunpack.c.l.b16 %v178
  %v855 = vunpack.c.l.b16 %v179
  %v856 = vunpack.c.l.b16 %v180
  %v857 = vunpack.c.l.b16 %v181
  %v858 = vunpack.c.l.b16 %v182
  %v859 = vunpack.c.l.b16 %v183
  %v860 = vunpack.c.l.b16 %v184
  %v861 = vunpack.c.l.b16 %v185
  %v862 = vunpack.c.l.b16 %v186
  %v863 = vunpack.c.l.b16 %v187
  %v864 = vunpack.c.l.b16 %v188
  %v865 = vunpack.c.l.b16 %v189
  %v866 = vunpack.c.l.b16 %v190
  %v867 = vunpack.c.l.b16 %v191
  %v868 = vunpack.c.l.b16 %v192
  %v869 = vunpack.c.l.b16 %v193
  %v870 = vunpack.c.l.b16 %v194
  %v871 = vunpack.c.l.b16 %v195
  %v872 = vunpack.c.l.b16 %v196
  %v873 = vunpack.c.l.b16 %v197
  %v874 = vunpack.c.l.b16 %v198
  %v875 = vunpack.c.l.b16 %v199
  %v876 = vunpack.c.l.b16 %v200
  %v877 = vunpack.c.l.b16 %v201
  %v878 = vunpack.c.l.b16 %v202
  %v879 = vunpack.c.l.b16 %v203
  %v880 = vunpack.c.l.b16 %v204
  %v881 = vunpack.c.l.b16 %v205
  %v882 = vunpack.c.l.b16 %v206
  %v883 = vunpack.c.l.b16 %v207
  %v884 = vunpack.c.l.b16 %v208
  %v885 = vunpack.c.l.b16 %v209
  %v886 = vunpack.c.l.b16 %v210
  %v887 = vunpack.c.l.b16 %v211
  %v888 = vunpack.c.l.b16 %v212
  %v889 = vunpack.c.l.b16 %v213
  %v890 = vunpack.c.l.b16 %v214
  %v891 = vunpack.c.l.b16 %v215
  %v892 = vunpack.c.l.b16 %v216
  %v893 = vunpack.c.l.b16 %v217
  %v894 = vunpack.c.l.b16 %v218
  %v895 = vunpack.c.l.b16 %v219
  %v896 = vunpack.c.l.b16 %v220
  %v897 = vunpack.c.l.b16 %v221
  %v898 = vunpack.c.l.b16 %v222
  %v899 = vunpack.c.l.b16 %v223
  %v900 = vunpack.c.l.b16 %v224
  %v901 = vunpack.c.l.b16 %v225
  %v902 = vunpack.c.l.b16 %v226
  %v903 = vunpack.c.l.b16 %v227
  %v904 = vunpack.c.l.b16 %v228
  %v905 = vunpack.c.l.b16 %v229
  %v906 = vunpack.c.l.b16 %v230
  %v907 = vunpack.c.l.b16 %v231
  %v908 = vunpack.c.l.b16 %v232
  %v909 = vunpack.c.l.b16 %v233
  %v910 = vunpack.c.l.b16 %v234
  %v911 = vunpack.c.l.b16 %v235
  %v912 = vunpack.c.l.b16 %v236
  %v913 = vunpack.c.l.b16 %v237
  %v914 = vunpack.c.l.b16 %v238
  %v915 = vunpack.c.l.b16 %v239
  %v916 = vunpack.c.l.b16 %v240
  %v917 = vunpack.c.l.b16 %v241
  %v918 = vunpack.c.l.b16 %v242
  %v919 = vunpack.c.l.b16 %v243
  %v920 = vunpack.c.l.b16 %v244
  %v921 = vunpack.c.l.b16 %v245
  %v922 = vunpack.c.l.b16 %v246
  %v923 = vunpack.c.l.b16 %v247
  %v924 = vunpack.c.l.b16 %v248
  %v925 = vunpack.c.l.b16 %v249
  %v926 = vunpack.c.l.b16 %v250
  %v927 = vunpack.c.l.b16 %v251
  %v928 = vunpack.c.l.b16 %v252
  %v929 = vunpack.c.l.b16 %v253
  %v930 = vunpack.c.l.b16 %v254
  %v931 = vunpack.c.l.b16 %v255
  %v932 = vunpack.c.l.b16 %v256
  %v933 = vunpack.c.l.b16 %v257
  %v934 = vunpack.c.l.b16 %v258
  %v935 = vunpack.c.l.b16 %v259
  %v936 = vunpack.c.l.b16 %v260
  %v937 = vunpack.c.l.b16 %v261
  %v938 = vunpack.c.l.b16 %v262
  %v939 = vunpack.c.l.b16 %v263
  %v940 = vunpack.c.l.b16 %v264
  %v941 = vunpack.c.l.b16 %v265
  %v942 = vunpack.c.l.b16 %v266
  %v943 = vunpack.c.l.b16 %v267
  %v944 = vunpack.c.l.b16 %v268
  %v945 = vunpack.c.l.b16 %v269
  %v946 = vunpack.c.l.b16 %v270
  %v947 = vunpack.c.l.b16 %v271
  %v948 = vunpack.c.l.b16 %v272
  %v949 = vunpack.c.l.b16 %v273
  %v950 = vunpack.c.l.b16 %v274
  %v951 = vunpack.c.l.b16 %v275
  %v952 = vunpack.c.l.b16 %v276
  %v953 = vunpack.c.l.b16 %v277
  %v954 = vunpack.c.l.b16 %v278
  %v955 = vunpack.c.l.b16 %v279
  %v956 = vunpack.c.l.b16 %v280
  %v957 = vunpack.c.l.b16 %v281
  %v958 = vunpack.c.l.b16 %v282
  %v959 = vunpack.c.l.b16 %v283
  %v960 = vunpack.c.l.b16 %v284
  %v961 = vunpack.c.l.b16 %v285
  %v962 = vunpack.c.l.b16 %v286
  %v963 = vunpack.c.l.b16 %v287
  %v964 = vunpack.c.l.b16 %v288
  %v965 = vunpack.c.l.b16 %v289
  %v966 = vunpack.c.l.b16 %v290
  %v967 = vunpack.c.l.b16 %v291
  %v968 = vunpack.c.l.b16 %v292
  %v969 = vunpack.c.l.b16 %v293
  %v970 = vunpack.c.l.b16 %v294
  %v971 = vunpack.c.l.b16 %v295
  %v972 = vunpack.c.l.b16 %v296
  %v973 = vunpack.c.l.b16 %v297
  %v974 = vunpack.c.l.b16 %v298
  %v975 = vunpack.c.l.b16 %v299
  %v976 = vunpack.c.l.b16 %v300
  %v977 = vunpack.c.l.b16 %v301
  %v978 = vpack.c.b16 %v723, %v722
  %v979 = vpack.c.b16 %v725, %v724
  %v980 = vpack.c.b16 %v727, %v726
  %v981 = vpack.c.b16 %v729, %v728
  %v982 = vpack.c.b16 %v731, %v730
  %v983 = vpack.c.b16 %v733, %v732
  %v984 = vpack.c.b16 %v735, %v734
  %v985 = vpack.c.b16 %v737, %v736
  %v986 = vpack.c.b16 %v739, %v738
  %v987 = vpack.c.b16 %v741, %v740
  %v988 = vpack.c.b16 %v743, %v742
  %v989 = vpack.c.b16 %v745, %v744
  %v990 = vpack.c.b16 %v747, %v746
  %v991 = vpack.c.b16 %v749, %v748
  %v992 = vpack.c.b16 %v751, %v750
  %v993 = vpack.c.b16 %v753, %v752
  %v994 = vpack.c.b16 %v755, %v754
  %v995 = vpack.c.b16 %v757, %v756
  %v996 = vpack.c.b16 %v759, %v758
  %v997 = vpack.c.b16 %v761, %v760
  %v998 = vpack.c.b16 %v763, %v762
  %v999 = vpack.c.b16 %v765, %v764
  %v1000 = vpack.c.b16 %v767, %v766
  %v1001 = vpack.c.b16 %v769, %v768
  %v1002 = vpack.c.b16 %v771, %v770
  %v1003 = vpack.c.b16 %v773, %v772
  %v1004 = vpack.c.b16 %v775, %v774
  %v1005 = vpack.c.b16 %v777, %v776
  %v1006 = vpack.c.b16 %v779, %v778
  %v1007 = vpack.c.b16 %v781, %v780
  %v1008 = vpack.c.b16 %v783, %v782
  %v1009 = vpack.c.b16 %v785, %v784
  %v1010 = vpack.c.b16 %v787, %v786
  %v1011 = vpack.c.b16 %v789, %v788
  %v1012 = vpack.c.b16 %v791, %v790
  %v1013 = vpack.c.b16 %v793, %v792
  %v1014 = vpack.c.b16 %v795, %v794
  %v1015 = vpack.c.b16 %v797, %v796
  %v1016 = vpack.c.b16 %v799, %v798
  %v1017 = vpack.c.b16 %v801, %v800
  %v1018 = vpack.c.b16 %v803, %v802
  %v1019 = vpack.c.b16 %v805, %v804
  %v1020 = vpack.c.b16 %v807, %v806
  %v1021 = vpack.c.b16 %v809, %v808
  %v1022 = vpack.c.b16 %v811, %v810
  %v1023 = vpack.c.b16 %v813, %v812
  %v1024 = vpack.c.b16 %v815, %v814
  %v1025 = vpack.c.b16 %v817, %v816
  %v1026 = vpack.c.b16 %v819, %v818
  %v1027 = vpack.c.b16 %v821, %v820
  %v1028 = vpack.c.b16 %v823, %v822
  %v1029 = vpack.c.b16 %v825, %v824
  %v1030 = vpack.c.b16 %v827, %v826
  %v1031 = vpack.c.b16 %v829, %v828
  %v1032 = vpack.c.b16 %v831, %v830
  %v1033 = vpack.c.b16 %v833, %v832
  %v1034 = vpack.c.b16 %v835, %v834
  %v1035 = vpack.c.b16 %v837, %v836
  %v1036 = vpack.c.b16 %v839, %v838
  %v1037 = vpack.c.b16 %v841, %v840
  %v1038 = vpack.c.b16 %v843, %v842
  %v1039 = vpack.c.b16 %v845, %v844
  %v1040 = vpack.c.b16 %v847, %v846
  %v1041 = vpack.c.b16 %v849, %v848
  %v1042 = vpack.c.b16 %v851, %v850
  %v1043 = vpack.c.b16 %v853, %v852
  %v1044 = vpack.c.b16 %v855, %v854
  %v1045 = vpack.c.b16 %v857, %v856
  %v1046 = vpack.c.b16 %v859, %v858
  %v1047 = vpack.c.b16 %v861, %v860
  %v1048 = vpack.c.b16 %v863, %v862
  %v1049 = vpack.c.b16 %v865, %v864
  %v1050 = vpack.c.b16 %v867, %v866
  %v1051 = vpack.c.b16 %v869, %v868
  %v1052 = vpack.c.b16 %v871, %v870
  %v1053 = vpack.c.b16 %v873, %v872
  %v1054 = vpack.c.b16 %v875, %v874
  %v1055 = vpack.c.b16 %v877, %v876
  %v1056 = vpack.c.b16 %v879, %v878
  %v1057 = vpack.c.b16 %v881, %v880
  %v1058 = vpack.c.b16 %v883, %v882
  %v1059 = vpack.c.b16 %v885, %v884
  %v1060 = vpack.c.b16 %v887, %v886
  %v1061 = vpack.c.b16 %v889, %v888
  %v1062 = vpack.c.b16 %v891, %v890
  %v1063 = vpack.c.b16 %v893, %v892
  %v1064 = vpack.c.b16 %v895, %v894
  %v1065 = vpack.c.b16 %v897, %v896
  %v1066 = vpack.c.b16 %v899, %v898
  %v1067 = vpack.c.b16 %v901, %v900
  %v1068 = vpack.c.b16 %v903, %v902
  %v1069 = vpack.c.b16 %v905, %v904
  %v1070 = vpack.c.b16 %v907, %v906
  %v1071 = vpack.c.b16 %v909, %v908
  %v1072 = vpack.c.b16 %v911, %v910
  %v1073 = vpack.c.b16 %v913, %v912
  %v1074 = vpack.c.b16 %v915, %v914
  %v1075 = vpack.c.b16 %v917, %v916
  %v1076 = vpack.c.b16 %v919, %v918
  %v1077 = vpack.c.b16 %v921, %v920
  %v1078 = vpack.c.b16 %v923, %v922
  %v1079 = vpack.c.b16 %v925, %v924
  %v1080 = vpack.c.b16 %v927, %v926
  %v1081 = vpack.c.b16 %v929, %v928
  %v1082 = vpack.c.b16 %v931, %v930
  %v1083 = vpack.c.b16 %v933, %v932
  %v1084 = vpack.c.b16 %v935, %v934
  %v1085 = vpack.c.b16 %v937, %v936
  %v1086 = vpack.c.b16 %v939, %v938
  %v1087 = vpack.c.b16 %v941, %v940
  %v1088 = vpack.c.b16 %v943, %v942
  %v1089 = vpack.c.b16 %v945, %v944
  %v1090 = vpack.c.b16 %v947, %v946
  %v1091 = vpack.c.b16 %v949, %v948
  %v1092 = vpack.c.b16 %v951, %v950
  %v1093 = vpack.c.b16 %v953, %v952
  %v1094 = vpack.c.b16 %v955, %v954
  %v1095 = vpack.c.b16 %v957, %v956
  %v1096 = vpack.c.b16 %v959, %v958
  %v1097 = vpack.c.b16 %v961, %v960
  %v1098 = vpack.c.b16 %v963, %v962
  %v1099 = vpack.c.b16 %v965, %v964
  %v1100 = vpack.c.b16 %v967, %v966
  %v1101 = vpack.c.b16 %v969, %v968
  %v1102 = vpack.c.b16 %v971, %v970
  %v1103 = vpack.c.b16 %v973, %v972
  %v1104 = vpack.c.b16 %v975, %v974
  %v1105 = vpack.c.b16 %v977, %v976
  %1234 = vmatpush.bf16.msra.mxu0 %v985
  %1235 = vmatpush.bf16.msra.mxu0 %v984
  %1236 = vmatpush.bf16.msra.mxu0 %v983
  %1237 = vmatpush.bf16.msra.mxu0 %v982
  %1238 = vmatpush.bf16.msra.mxu0 %v981
  %1239 = vmatpush.bf16.msra.mxu0 %v980
  %1240 = vmatpush.bf16.msra.mxu0 %v979
  %1241 = vmatpush.bf16.msra.mxu0 %v978
  %1242 = vmatmul.bf16.gmra.mxu0 %v402
  %v1243 = vpop.f32.mrf.mxu0
  %v1244 = vadd.f32 %v304, %v1243
  %v1245 = vpop.f32.mrf.mxu0
  %v1246 = vadd.f32 %v304, %v1245
  %1247 = vmatmul.bf16.gmra.mxu0 %v418
  %v1248 = vpop.f32.mrf.mxu0
  %v1249 = vadd.f32 %v304, %v1248
  %v1250 = vpop.f32.mrf.mxu0
  %v1251 = vadd.f32 %v304, %v1250
  %1252 = vdwg.mxu0
  %1253 = vmatpush.bf16.msra.mxu0 %v993
  %1254 = vmatpush.bf16.msra.mxu0 %v992
  %1255 = vmatpush.bf16.msra.mxu0 %v991
  %1256 = vmatpush.bf16.msra.mxu0 %v990
  %1257 = vmatpush.bf16.msra.mxu0 %v989
  %1258 = vmatpush.bf16.msra.mxu0 %v988
  %1259 = vmatpush.bf16.msra.mxu0 %v987
  %1260 = vmatpush.bf16.msra.mxu0 %v986
  %1261 = vmatmul.bf16.gmra.mxu0 %v403
  %v1262 = vpop.f32.mrf.mxu0
  %v1263 = vadd.f32 %v1244, %v1262
  %v1264 = vpop.f32.mrf.mxu0
  %v1265 = vadd.f32 %v1246, %v1264
  %1266 = vmatmul.bf16.gmra.mxu0 %v419
  %v1267 = vpop.f32.mrf.mxu0
  %v1268 = vadd.f32 %v1249, %v1267
  %v1269 = vpop.f32.mrf.mxu0
  %v1270 = vadd.f32 %v1251, %v1269
  %1271 = vdwg.mxu0
  %1272 = vmatpush.bf16.msra.mxu0 %v1001
  %1273 = vmatpush.bf16.msra.mxu0 %v1000
  %1274 = vmatpush.bf16.msra.mxu0 %v999
  %1275 = vmatpush.bf16.msra.mxu0 %v998
  %1276 = vmatpush.bf16.msra.mxu0 %v997
  %1277 = vmatpush.bf16.msra.mxu0 %v996
  %1278 = vmatpush.bf16.msra.mxu0 %v995
  %1279 = vmatpush.bf16.msra.mxu0 %v994
  %1280 = vmatmul.bf16.gmra.mxu0 %v404
  %v1281 = vpop.f32.mrf.mxu0
  %v1282 = vadd.f32 %v1263, %v1281
  %v1283 = vpop.f32.mrf.mxu0
  %v1284 = vadd.f32 %v1265, %v1283
  %1285 = vmatmul.bf16.gmra.mxu0 %v420
  %v1286 = vpop.f32.mrf.mxu0
  %v1287 = vadd.f32 %v1268, %v1286
  %v1288 = vpop.f32.mrf.mxu0
  %v1289 = vadd.f32 %v1270, %v1288
  %1290 = vdwg.mxu0
  %1291 = vmatpush.bf16.msra.mxu0 %v1009
  %1292 = vmatpush.bf16.msra.mxu0 %v1008
  %1293 = vmatpush.bf16.msra.mxu0 %v1007
  %1294 = vmatpush.bf16.msra.mxu0 %v1006
  %1295 = vmatpush.bf16.msra.mxu0 %v1005
  %1296 = vmatpush.bf16.msra.mxu0 %v1004
  %1297 = vmatpush.bf16.msra.mxu0 %v1003
  %1298 = vmatpush.bf16.msra.mxu0 %v1002
  %1299 = vmatmul.bf16.gmra.mxu0 %v405
  %v1300 = vpop.f32.mrf.mxu0
  %v1301 = vadd.f32 %v1282, %v1300
  %v1302 = vpop.f32.mrf.mxu0
  %v1303 = vadd.f32 %v1284, %v1302
  %1304 = vmatmul.bf16.gmra.mxu0 %v421
  %v1305 = vpop.f32.mrf.mxu0
  %v1306 = vadd.f32 %v1287, %v1305
  %v1307 = vpop.f32.mrf.mxu0
  %v1308 = vadd.f32 %v1289, %v1307
  %1309 = vdwg.mxu0
  %1310 = vmatpush.bf16.msra.mxu0 %v1017
  %1311 = vmatpush.bf16.msra.mxu0 %v1016
  %1312 = vmatpush.bf16.msra.mxu0 %v1015
  %1313 = vmatpush.bf16.msra.mxu0 %v1014
  %1314 = vmatpush.bf16.msra.mxu0 %v1013
  %1315 = vmatpush.bf16.msra.mxu0 %v1012
  %1316 = vmatpush.bf16.msra.mxu0 %v1011
  %1317 = vmatpush.bf16.msra.mxu0 %v1010
  %1318 = vmatmul.bf16.gmra.mxu0 %v406
  %v1319 = vpop.f32.mrf.mxu0
  %v1320 = vadd.f32 %v1301, %v1319
  %v1321 = vpop.f32.mrf.mxu0
  %v1322 = vadd.f32 %v1303, %v1321
  %1323 = vmatmul.bf16.gmra.mxu0 %v422
  %v1324 = vpop.f32.mrf.mxu0
  %v1325 = vadd.f32 %v1306, %v1324
  %v1326 = vpop.f32.mrf.mxu0
  %v1327 = vadd.f32 %v1308, %v1326
  %1328 = vdwg.mxu0
  %1329 = vmatpush.bf16.msra.mxu0 %v1025
  %1330 = vmatpush.bf16.msra.mxu0 %v1024
  %1331 = vmatpush.bf16.msra.mxu0 %v1023
  %1332 = vmatpush.bf16.msra.mxu0 %v1022
  %1333 = vmatpush.bf16.msra.mxu0 %v1021
  %1334 = vmatpush.bf16.msra.mxu0 %v1020
  %1335 = vmatpush.bf16.msra.mxu0 %v1019
  %1336 = vmatpush.bf16.msra.mxu0 %v1018
  %1337 = vmatmul.bf16.gmra.mxu0 %v407
  %v1338 = vpop.f32.mrf.mxu0
  %v1339 = vadd.f32 %v1320, %v1338
  %v1340 = vpop.f32.mrf.mxu0
  %v1341 = vadd.f32 %v1322, %v1340
  %1342 = vmatmul.bf16.gmra.mxu0 %v423
  %v1343 = vpop.f32.mrf.mxu0
  %v1344 = vadd.f32 %v1325, %v1343
  %v1345 = vpop.f32.mrf.mxu0
  %v1346 = vadd.f32 %v1327, %v1345
  %1347 = vdwg.mxu0
  %1348 = vmatpush.bf16.msra.mxu0 %v1033
  %1349 = vmatpush.bf16.msra.mxu0 %v1032
  %1350 = vmatpush.bf16.msra.mxu0 %v1031
  %1351 = vmatpush.bf16.msra.mxu0 %v1030
  %1352 = vmatpush.bf16.msra.mxu0 %v1029
  %1353 = vmatpush.bf16.msra.mxu0 %v1028
  %1354 = vmatpush.bf16.msra.mxu0 %v1027
  %1355 = vmatpush.bf16.msra.mxu0 %v1026
  %1356 = vmatmul.bf16.gmra.mxu0 %v408
  %v1357 = vpop.f32.mrf.mxu0
  %v1358 = vadd.f32 %v1339, %v1357
  %v1359 = vpop.f32.mrf.mxu0
  %v1360 = vadd.f32 %v1341, %v1359
  %1361 = vmatmul.bf16.gmra.mxu0 %v424
  %v1362 = vpop.f32.mrf.mxu0
  %v1363 = vadd.f32 %v1344, %v1362
  %v1364 = vpop.f32.mrf.mxu0
  %v1365 = vadd.f32 %v1346, %v1364
  %1366 = vdwg.mxu0
  %1367 = vmatpush.bf16.msra.mxu0 %v1041
  %1368 = vmatpush.bf16.msra.mxu0 %v1040
  %1369 = vmatpush.bf16.msra.mxu0 %v1039
  %1370 = vmatpush.bf16.msra.mxu0 %v1038
  %1371 = vmatpush.bf16.msra.mxu0 %v1037
  %1372 = vmatpush.bf16.msra.mxu0 %v1036
  %1373 = vmatpush.bf16.msra.mxu0 %v1035
  %1374 = vmatpush.bf16.msra.mxu0 %v1034
  %1375 = vmatmul.bf16.gmra.mxu0 %v409
  %v1376 = vpop.f32.mrf.mxu0
  %v1377 = vadd.f32 %v1358, %v1376
  %v1378 = vpop.f32.mrf.mxu0
  %v1379 = vadd.f32 %v1360, %v1378
  %1380 = vmatmul.bf16.gmra.mxu0 %v425
  %v1381 = vpop.f32.mrf.mxu0
  %v1382 = vadd.f32 %v1363, %v1381
  %v1383 = vpop.f32.mrf.mxu0
  %v1384 = vadd.f32 %v1365, %v1383
  %1385 = vdwg.mxu0
  %1386 = vmatpush.bf16.msra.mxu0 %v1049
  %1387 = vmatpush.bf16.msra.mxu0 %v1048
  %1388 = vmatpush.bf16.msra.mxu0 %v1047
  %1389 = vmatpush.bf16.msra.mxu0 %v1046
  %1390 = vmatpush.bf16.msra.mxu0 %v1045
  %1391 = vmatpush.bf16.msra.mxu0 %v1044
  %1392 = vmatpush.bf16.msra.mxu0 %v1043
  %1393 = vmatpush.bf16.msra.mxu0 %v1042
  %1394 = vmatmul.bf16.gmra.mxu0 %v410
  %v1395 = vpop.f32.mrf.mxu0
  %v1396 = vadd.f32 %v1377, %v1395
  %v1397 = vpop.f32.mrf.mxu0
  %v1398 = vadd.f32 %v1379, %v1397
  %1399 = vmatmul.bf16.gmra.mxu0 %v426
  %v1400 = vpop.f32.mrf.mxu0
  %v1401 = vadd.f32 %v1382, %v1400
  %v1402 = vpop.f32.mrf.mxu0
  %v1403 = vadd.f32 %v1384, %v1402
  %1404 = vdwg.mxu0
  %1405 = vmatpush.bf16.msra.mxu0 %v1057
  %1406 = vmatpush.bf16.msra.mxu0 %v1056
  %1407 = vmatpush.bf16.msra.mxu0 %v1055
  %1408 = vmatpush.bf16.msra.mxu0 %v1054
  %1409 = vmatpush.bf16.msra.mxu0 %v1053
  %1410 = vmatpush.bf16.msra.mxu0 %v1052
  %1411 = vmatpush.bf16.msra.mxu0 %v1051
  %1412 = vmatpush.bf16.msra.mxu0 %v1050
  %1413 = vmatmul.bf16.gmra.mxu0 %v411
  %v1414 = vpop.f32.mrf.mxu0
  %v1415 = vadd.f32 %v1396, %v1414
  %v1416 = vpop.f32.mrf.mxu0
  %v1417 = vadd.f32 %v1398, %v1416
  %1418 = vmatmul.bf16.gmra.mxu0 %v427
  %v1419 = vpop.f32.mrf.mxu0
  %v1420 = vadd.f32 %v1401, %v1419
  %v1421 = vpop.f32.mrf.mxu0
  %v1422 = vadd.f32 %v1403, %v1421
  %1423 = vdwg.mxu0
  %1424 = vmatpush.bf16.msra.mxu0 %v1065
  %1425 = vmatpush.bf16.msra.mxu0 %v1064
  %1426 = vmatpush.bf16.msra.mxu0 %v1063
  %1427 = vmatpush.bf16.msra.mxu0 %v1062
  %1428 = vmatpush.bf16.msra.mxu0 %v1061
  %1429 = vmatpush.bf16.msra.mxu0 %v1060
  %1430 = vmatpush.bf16.msra.mxu0 %v1059
  %1431 = vmatpush.bf16.msra.mxu0 %v1058
  %1432 = vmatmul.bf16.gmra.mxu0 %v412
  %v1433 = vpop.f32.mrf.mxu0
  %v1434 = vadd.f32 %v1415, %v1433
  %v1435 = vpop.f32.mrf.mxu0
  %v1436 = vadd.f32 %v1417, %v1435
  %1437 = vmatmul.bf16.gmra.mxu0 %v428
  %v1438 = vpop.f32.mrf.mxu0
  %v1439 = vadd.f32 %v1420, %v1438
  %v1440 = vpop.f32.mrf.mxu0
  %v1441 = vadd.f32 %v1422, %v1440
  %1442 = vdwg.mxu0
  %1443 = vmatpush.bf16.msra.mxu0 %v1073
  %1444 = vmatpush.bf16.msra.mxu0 %v1072
  %1445 = vmatpush.bf16.msra.mxu0 %v1071
  %1446 = vmatpush.bf16.msra.mxu0 %v1070
  %1447 = vmatpush.bf16.msra.mxu0 %v1069
  %1448 = vmatpush.bf16.msra.mxu0 %v1068
  %1449 = vmatpush.bf16.msra.mxu0 %v1067
  %1450 = vmatpush.bf16.msra.mxu0 %v1066
  %1451 = vmatmul.bf16.gmra.mxu0 %v413
  %v1452 = vpop.f32.mrf.mxu0
  %v1453 = vadd.f32 %v1434, %v1452
  %v1454 = vpop.f32.mrf.mxu0
  %v1455 = vadd.f32 %v1436, %v1454
  %1456 = vmatmul.bf16.gmra.mxu0 %v429
  %v1457 = vpop.f32.mrf.mxu0
  %v1458 = vadd.f32 %v1439, %v1457
  %v1459 = vpop.f32.mrf.mxu0
  %v1460 = vadd.f32 %v1441, %v1459
  %1461 = vdwg.mxu0
  %1462 = vmatpush.bf16.msra.mxu0 %v1081
  %1463 = vmatpush.bf16.msra.mxu0 %v1080
  %1464 = vmatpush.bf16.msra.mxu0 %v1079
  %1465 = vmatpush.bf16.msra.mxu0 %v1078
  %1466 = vmatpush.bf16.msra.mxu0 %v1077
  %1467 = vmatpush.bf16.msra.mxu0 %v1076
  %1468 = vmatpush.bf16.msra.mxu0 %v1075
  %1469 = vmatpush.bf16.msra.mxu0 %v1074
  %1470 = vmatmul.bf16.gmra.mxu0 %v414
  %v1471 = vpop.f32.mrf.mxu0
  %v1472 = vadd.f32 %v1453, %v1471
  %v1473 = vpop.f32.mrf.mxu0
  %v1474 = vadd.f32 %v1455, %v1473
  %1475 = vmatmul.bf16.gmra.mxu0 %v430
  %v1476 = vpop.f32.mrf.mxu0
  %v1477 = vadd.f32 %v1458, %v1476
  %v1478 = vpop.f32.mrf.mxu0
  %v1479 = vadd.f32 %v1460, %v1478
  %1480 = vdwg.mxu0
  %1481 = vmatpush.bf16.msra.mxu0 %v1089
  %1482 = vmatpush.bf16.msra.mxu0 %v1088
  %1483 = vmatpush.bf16.msra.mxu0 %v1087
  %1484 = vmatpush.bf16.msra.mxu0 %v1086
  %1485 = vmatpush.bf16.msra.mxu0 %v1085
  %1486 = vmatpush.bf16.msra.mxu0 %v1084
  %1487 = vmatpush.bf16.msra.mxu0 %v1083
  %1488 = vmatpush.bf16.msra.mxu0 %v1082
  %1489 = vmatmul.bf16.gmra.mxu0 %v415
  %v1490 = vpop.f32.mrf.mxu0
  %v1491 = vadd.f32 %v1472, %v1490
  %v1492 = vpop.f32.mrf.mxu0
  %v1493 = vadd.f32 %v1474, %v1492
  %1494 = vmatmul.bf16.gmra.mxu0 %v431
  %v1495 = vpop.f32.mrf.mxu0
  %v1496 = vadd.f32 %v1477, %v1495
  %v1497 = vpop.f32.mrf.mxu0
  %v1498 = vadd.f32 %v1479, %v1497
  %1499 = vdwg.mxu0
  %1500 = vmatpush.bf16.msra.mxu0 %v1097
  %1501 = vmatpush.bf16.msra.mxu0 %v1096
  %1502 = vmatpush.bf16.msra.mxu0 %v1095
  %1503 = vmatpush.bf16.msra.mxu0 %v1094
  %1504 = vmatpush.bf16.msra.mxu0 %v1093
  %1505 = vmatpush.bf16.msra.mxu0 %v1092
  %1506 = vmatpush.bf16.msra.mxu0 %v1091
  %1507 = vmatpush.bf16.msra.mxu0 %v1090
  %1508 = vmatmul.bf16.gmra.mxu0 %v416
  %v1509 = vpop.f32.mrf.mxu0
  %v1510 = vadd.f32 %v1491, %v1509
  %v1511 = vpop.f32.mrf.mxu0
  %v1512 = vadd.f32 %v1493, %v1511
  %1513 = vmatmul.bf16.gmra.mxu0 %v432
  %v1514 = vpop.f32.mrf.mxu0
  %v1515 = vadd.f32 %v1496, %v1514
  %v1516 = vpop.f32.mrf.mxu0
  %v1517 = vadd.f32 %v1498, %v1516
  %1518 = vdwg.mxu0
  %1519 = vmatpush.bf16.msra.mxu0 %v1105
  %1520 = vmatpush.bf16.msra.mxu0 %v1104
  %1521 = vmatpush.bf16.msra.mxu0 %v1103
  %1522 = vmatpush.bf16.msra.mxu0 %v1102
  %1523 = vmatpush.bf16.msra.mxu0 %v1101
  %1524 = vmatpush.bf16.msra.mxu0 %v1100
  %1525 = vmatpush.bf16.msra.mxu0 %v1099
  %1526 = vmatpush.bf16.msra.mxu0 %v1098
  %1527 = vmatmul.bf16.gmra.mxu0 %v417
  %v1528 = vpop.f32.mrf.mxu0
  %v1529 = vadd.f32 %v1510, %v1528
  %v1530 = vpop.f32.mrf.mxu0
  %v1531 = vadd.f32 %v1512, %v1530
  %1532 = vmatmul.bf16.gmra.mxu0 %v433
  %v1533 = vpop.f32.mrf.mxu0
  %v1534 = vadd.f32 %v1515, %v1533
  %v1535 = vpop.f32.mrf.mxu0
  %v1536 = vadd.f32 %v1517, %v1535
  %1537 = vdwg.mxu0
  %v1538 = vmax.f32 %v1529, 0.0
  %v1539 = vmax.f32 %v1531, 0.0
  %v1540 = vmax.f32 %v1534, 0.0
  %v1541 = vmax.f32 %v1536, 0.0
  %v1542 = vpack.c.bf16 %v1538, %v1538
  %v1543 = vpack.c.bf16 %v1539, %v1539
  %v1544 = vpack.c.bf16 %v1540, %v1540
  %v1545 = vpack.c.bf16 %v1541, %v1541
  %1546 = vst [vmem:[%s3] sm:$0xf] %v1542
  %1547 = vst [vmem:[%s3 + $0x4] sm:$0xf] %v1543
  %1548 = vst [vmem:[%s3 + $0x8] sm:$0xf] %v1544
  %1549 = vst [vmem:[%s3 + $0xc] sm:$0xf] %v1545
  // Predicated region
  $region14: #{svhn_encoder_forward.6} parent=0 // pred_check
    _
  $region15: #{svhn_encoder_forward.6} parent=0 // pred_check_branch
    %1551 = sbr.rel (0) target = $region17
  $region16: #{svhn_encoder_forward.6} parent=0 // pred_region
    _
  $region17: #{svhn_encoder_forward.6} parent=0 // pred_fallthru
    _
  // Predicated region
  $region18: #{svhn_encoder_forward.6} parent=0 // pred_check
    _
  $region19: #{svhn_encoder_forward.6} parent=0 // pred_check_branch
    %1553 = sbr.rel (0) target = $region21
  $region20: #{svhn_encoder_forward.6} parent=0 // pred_region
    _
  $region21: #{svhn_encoder_forward.6} parent=0 // pred_fallthru
    _

// kernel: svhn_encoder_forward.7
$region0: #{svhn_encoder_forward.7}
  #allocation0 [shape = 'u32[]', space=smem, size = 0x4, offset = 0x4, fixed_abs, tag = 'smem constant byte address 0x4 - core index']
  #allocation1 [shape = 'u32[72,128]{1,0:T(1,128)}', space=vmem, size = 0x9000, scoped, tag = 'internal scratch']
  %s0 = inlined_call_operand.vmem [shape: bf16[2,2048], index: 0, kind: input, shape index: {}]
  %s1 = inlined_call_operand.vmem [shape: bf16[2048,16], index: 1, kind: input, shape index: {}]
  %s2 = inlined_call_operand.vmem [shape: bf16[2048,16], index: 2, kind: input, shape index: {}]
  %s3 = inlined_call_operand.vmem [shape: f32[1,16], index: 3, kind: input, shape index: {}]
  %s4 = inlined_call_operand.vmem [shape: f32[1,16], index: 4, kind: input, shape index: {}]
  %s5 = inlined_call_operand.hbm [shape: f32[2,16], index: 5, kind: output, shape index: {0}]
  %s6 = inlined_call_operand.hbm [shape: f32[2,16], index: 6, kind: output, shape index: {1}]
  %7 = xla_tuple %s5, %s6
  %s8 = sld [smem:[#allocation0]]
  $region38: #{svhn_encoder_forward.7} parent=0
    _
  %s10 = ssub.s32 1, %s8
  %s11 = scalar_select 0, %s10, %s8
  $region1: #{svhn_encoder_forward.7} parent=0
    #allocation2 [shape = 'u8[1024]{0}', space=vmem, size = 0x400, scoped, tag = 'output window, operand 0, single buffered']
    #allocation3 [shape = 's32[1]{0}', space=sflag, size = 0x4, scoped, tag = 'scoped memory for svhn_encoder_forward.7']
    #allocation4 [shape = 'u8[1024]{0}', space=vmem, size = 0x400, scoped, tag = 'output window, operand 1, single buffered']
    #allocation5 [shape = 's32[1]{0}', space=sflag, size = 0x4, scoped, tag = 'scoped memory for svhn_encoder_forward.7']
    %12 = vsyncpa [#allocation3], 0
    %13 = vsyncpa [#allocation5], 0
    // Predicated region
    $region2: #{svhn_encoder_forward.7} parent=1 // pred_check
      _
    $region3: #{svhn_encoder_forward.7} parent=1 // pred_check_branch
      %15 = sbr.rel (0) target = $region5
    $region4: #{svhn_encoder_forward.7} parent=1 // pred_region
      _
    $region5: #{svhn_encoder_forward.7} parent=1 // pred_fallthru
      _
    // Predicated region
    $region6: #{svhn_encoder_forward.7} parent=1 // pred_check
      _
    $region7: #{svhn_encoder_forward.7} parent=1 // pred_check_branch
      %17 = sbr.rel (0) target = $region9
    $region8: #{svhn_encoder_forward.7} parent=1 // pred_region
      _
    $region9: #{svhn_encoder_forward.7} parent=1 // pred_fallthru
      _
    // Predicated region
    $region10: #{svhn_encoder_forward.7} parent=1 // pred_check
      _
    $region11: #{svhn_encoder_forward.7} parent=1 // pred_check_branch
      %19 = sbr.rel (0) target = $region13
    $region12: #{svhn_encoder_forward.7} parent=1 // pred_region
      _
    $region13: #{svhn_encoder_forward.7} parent=1 // pred_fallthru
      _
    // Predicated region
    $region14: #{svhn_encoder_forward.7} parent=1 // pred_check
      _
    $region15: #{svhn_encoder_forward.7} parent=1 // pred_check_branch
      %21 = sbr.rel (0) target = $region17
    $region16: #{svhn_encoder_forward.7} parent=1 // pred_region
      _
    $region17: #{svhn_encoder_forward.7} parent=1 // pred_fallthru
      _
    // Predicated region
    $region18: #{svhn_encoder_forward.7} parent=1 // pred_check
      _
    $region19: #{svhn_encoder_forward.7} parent=1 // pred_check_branch
      %23 = sbr.rel (0) target = $region21
    $region20: #{svhn_encoder_forward.7} parent=1 // pred_region
      _
    $region21: #{svhn_encoder_forward.7} parent=1 // pred_fallthru
      _
    %v24 = vld [vmem:[%s0] sm:$0xff]
    %v25 = vld [vmem:[%s0 + $0x8] sm:$0xff]
    %v26 = vld [vmem:[%s1] sm:$0xf]
    %v27 = vld [vmem:[%s1 + $0x4] sm:$0xf]
    %v28 = vld [vmem:[%s1 + $0x8] sm:$0xf]
    %v29 = vld [vmem:[%s1 + $0xc] sm:$0xf]
    %v30 = vld [vmem:[%s1 + $0x10] sm:$0xf]
    %v31 = vld [vmem:[%s1 + $0x14] sm:$0xf]
    %v32 = vld [vmem:[%s1 + $0x18] sm:$0xf]
    %v33 = vld [vmem:[%s1 + $0x1c] sm:$0xf]
    %v34 = vld [vmem:[%s1 + $0x20] sm:$0xf]
    %v35 = vld [vmem:[%s1 + $0x24] sm:$0xf]
    %v36 = vld [vmem:[%s1 + $0x28] sm:$0xf]
    %v37 = vld [vmem:[%s1 + $0x2c] sm:$0xf]
    %v38 = vld [vmem:[%s1 + $0x30] sm:$0xf]
    %v39 = vld [vmem:[%s1 + $0x34] sm:$0xf]
    %v40 = vld [vmem:[%s1 + $0x38] sm:$0xf]
    %v41 = vld [vmem:[%s1 + $0x3c] sm:$0xf]
    %v42 = vld [vmem:[%s1 + $0x40] sm:$0xf]
    %v43 = vld [vmem:[%s1 + $0x44] sm:$0xf]
    %v44 = vld [vmem:[%s1 + $0x48] sm:$0xf]
    %v45 = vld [vmem:[%s1 + $0x4c] sm:$0xf]
    %v46 = vld [vmem:[%s1 + $0x50] sm:$0xf]
    %v47 = vld [vmem:[%s1 + $0x54] sm:$0xf]
    %v48 = vld [vmem:[%s1 + $0x58] sm:$0xf]
    %v49 = vld [vmem:[%s1 + $0x5c] sm:$0xf]
    %v50 = vld [vmem:[%s1 + $0x60] sm:$0xf]
    %v51 = vld [vmem:[%s1 + $0x64] sm:$0xf]
    %v52 = vld [vmem:[%s1 + $0x68] sm:$0xf]
    %v53 = vld [vmem:[%s1 + $0x6c] sm:$0xf]
    %v54 = vld [vmem:[%s1 + $0x70] sm:$0xf]
    %v55 = vld [vmem:[%s1 + $0x74] sm:$0xf]
    %v56 = vld [vmem:[%s1 + $0x78] sm:$0xf]
    %v57 = vld [vmem:[%s1 + $0x7c] sm:$0xf]
    %v58 = vld [vmem:[%s1 + $0x80] sm:$0xf]
    %v59 = vld [vmem:[%s1 + $0x84] sm:$0xf]
    %v60 = vld [vmem:[%s1 + $0x88] sm:$0xf]
    %v61 = vld [vmem:[%s1 + $0x8c] sm:$0xf]
    %v62 = vld [vmem:[%s1 + $0x90] sm:$0xf]
    %v63 = vld [vmem:[%s1 + $0x94] sm:$0xf]
    %v64 = vld [vmem:[%s1 + $0x98] sm:$0xf]
    %v65 = vld [vmem:[%s1 + $0x9c] sm:$0xf]
    %v66 = vld [vmem:[%s1 + $0xa0] sm:$0xf]
    %v67 = vld [vmem:[%s1 + $0xa4] sm:$0xf]
    %v68 = vld [vmem:[%s1 + $0xa8] sm:$0xf]
    %v69 = vld [vmem:[%s1 + $0xac] sm:$0xf]
    %v70 = vld [vmem:[%s1 + $0xb0] sm:$0xf]
    %v71 = vld [vmem:[%s1 + $0xb4] sm:$0xf]
    %v72 = vld [vmem:[%s1 + $0xb8] sm:$0xf]
    %v73 = vld [vmem:[%s1 + $0xbc] sm:$0xf]
    %v74 = vld [vmem:[%s1 + $0xc0] sm:$0xf]
    %v75 = vld [vmem:[%s1 + $0xc4] sm:$0xf]
    %v76 = vld [vmem:[%s1 + $0xc8] sm:$0xf]
    %v77 = vld [vmem:[%s1 + $0xcc] sm:$0xf]
    %v78 = vld [vmem:[%s1 + $0xd0] sm:$0xf]
    %v79 = vld [vmem:[%s1 + $0xd4] sm:$0xf]
    %v80 = vld [vmem:[%s1 + $0xd8] sm:$0xf]
    %v81 = vld [vmem:[%s1 + $0xdc] sm:$0xf]
    %v82 = vld [vmem:[%s1 + $0xe0] sm:$0xf]
    %v83 = vld [vmem:[%s1 + $0xe4] sm:$0xf]
    %v84 = vld [vmem:[%s1 + $0xe8] sm:$0xf]
    %v85 = vld [vmem:[%s1 + $0xec] sm:$0xf]
    %v86 = vld [vmem:[%s1 + $0xf0] sm:$0xf]
    %v87 = vld [vmem:[%s1 + $0xf4] sm:$0xf]
    %v88 = vld [vmem:[%s1 + $0xf8] sm:$0xf]
    %v89 = vld [vmem:[%s1 + $0xfc] sm:$0xf]
    %v90 = vld [vmem:[%s1 + $0x100] sm:$0xf]
    %v91 = vld [vmem:[%s1 + $0x104] sm:$0xf]
    %v92 = vld [vmem:[%s1 + $0x108] sm:$0xf]
    %v93 = vld [vmem:[%s1 + $0x10c] sm:$0xf]
    %v94 = vld [vmem:[%s1 + $0x110] sm:$0xf]
    %v95 = vld [vmem:[%s1 + $0x114] sm:$0xf]
    %v96 = vld [vmem:[%s1 + $0x118] sm:$0xf]
    %v97 = vld [vmem:[%s1 + $0x11c] sm:$0xf]
    %v98 = vld [vmem:[%s1 + $0x120] sm:$0xf]
    %v99 = vld [vmem:[%s1 + $0x124] sm:$0xf]
    %v100 = vld [vmem:[%s1 + $0x128] sm:$0xf]
    %v101 = vld [vmem:[%s1 + $0x12c] sm:$0xf]
    %v102 = vld [vmem:[%s1 + $0x130] sm:$0xf]
    %v103 = vld [vmem:[%s1 + $0x134] sm:$0xf]
    %v104 = vld [vmem:[%s1 + $0x138] sm:$0xf]
    %v105 = vld [vmem:[%s1 + $0x13c] sm:$0xf]
    %v106 = vld [vmem:[%s1 + $0x140] sm:$0xf]
    %v107 = vld [vmem:[%s1 + $0x144] sm:$0xf]
    %v108 = vld [vmem:[%s1 + $0x148] sm:$0xf]
    %v109 = vld [vmem:[%s1 + $0x14c] sm:$0xf]
    %v110 = vld [vmem:[%s1 + $0x150] sm:$0xf]
    %v111 = vld [vmem:[%s1 + $0x154] sm:$0xf]
    %v112 = vld [vmem:[%s1 + $0x158] sm:$0xf]
    %v113 = vld [vmem:[%s1 + $0x15c] sm:$0xf]
    %v114 = vld [vmem:[%s1 + $0x160] sm:$0xf]
    %v115 = vld [vmem:[%s1 + $0x164] sm:$0xf]
    %v116 = vld [vmem:[%s1 + $0x168] sm:$0xf]
    %v117 = vld [vmem:[%s1 + $0x16c] sm:$0xf]
    %v118 = vld [vmem:[%s1 + $0x170] sm:$0xf]
    %v119 = vld [vmem:[%s1 + $0x174] sm:$0xf]
    %v120 = vld [vmem:[%s1 + $0x178] sm:$0xf]
    %v121 = vld [vmem:[%s1 + $0x17c] sm:$0xf]
    %v122 = vld [vmem:[%s1 + $0x180] sm:$0xf]
    %v123 = vld [vmem:[%s1 + $0x184] sm:$0xf]
    %v124 = vld [vmem:[%s1 + $0x188] sm:$0xf]
    %v125 = vld [vmem:[%s1 + $0x18c] sm:$0xf]
    %v126 = vld [vmem:[%s1 + $0x190] sm:$0xf]
    %v127 = vld [vmem:[%s1 + $0x194] sm:$0xf]
    %v128 = vld [vmem:[%s1 + $0x198] sm:$0xf]
    %v129 = vld [vmem:[%s1 + $0x19c] sm:$0xf]
    %v130 = vld [vmem:[%s1 + $0x1a0] sm:$0xf]
    %v131 = vld [vmem:[%s1 + $0x1a4] sm:$0xf]
    %v132 = vld [vmem:[%s1 + $0x1a8] sm:$0xf]
    %v133 = vld [vmem:[%s1 + $0x1ac] sm:$0xf]
    %v134 = vld [vmem:[%s1 + $0x1b0] sm:$0xf]
    %v135 = vld [vmem:[%s1 + $0x1b4] sm:$0xf]
    %v136 = vld [vmem:[%s1 + $0x1b8] sm:$0xf]
    %v137 = vld [vmem:[%s1 + $0x1bc] sm:$0xf]
    %v138 = vld [vmem:[%s1 + $0x1c0] sm:$0xf]
    %v139 = vld [vmem:[%s1 + $0x1c4] sm:$0xf]
    %v140 = vld [vmem:[%s1 + $0x1c8] sm:$0xf]
    %v141 = vld [vmem:[%s1 + $0x1cc] sm:$0xf]
    %v142 = vld [vmem:[%s1 + $0x1d0] sm:$0xf]
    %v143 = vld [vmem:[%s1 + $0x1d4] sm:$0xf]
    %v144 = vld [vmem:[%s1 + $0x1d8] sm:$0xf]
    %v145 = vld [vmem:[%s1 + $0x1dc] sm:$0xf]
    %v146 = vld [vmem:[%s1 + $0x1e0] sm:$0xf]
    %v147 = vld [vmem:[%s1 + $0x1e4] sm:$0xf]
    %v148 = vld [vmem:[%s1 + $0x1e8] sm:$0xf]
    %v149 = vld [vmem:[%s1 + $0x1ec] sm:$0xf]
    %v150 = vld [vmem:[%s1 + $0x1f0] sm:$0xf]
    %v151 = vld [vmem:[%s1 + $0x1f4] sm:$0xf]
    %v152 = vld [vmem:[%s1 + $0x1f8] sm:$0xf]
    %v153 = vld [vmem:[%s1 + $0x1fc] sm:$0xf]
    %v154 = vld [vmem:[%s1 + $0x200] sm:$0xf]
    %v155 = vld [vmem:[%s1 + $0x204] sm:$0xf]
    %v156 = vld [vmem:[%s1 + $0x208] sm:$0xf]
    %v157 = vld [vmem:[%s1 + $0x20c] sm:$0xf]
    %v158 = vld [vmem:[%s1 + $0x210] sm:$0xf]
    %v159 = vld [vmem:[%s1 + $0x214] sm:$0xf]
    %v160 = vld [vmem:[%s1 + $0x218] sm:$0xf]
    %v161 = vld [vmem:[%s1 + $0x21c] sm:$0xf]
    %v162 = vld [vmem:[%s1 + $0x220] sm:$0xf]
    %v163 = vld [vmem:[%s1 + $0x224] sm:$0xf]
    %v164 = vld [vmem:[%s1 + $0x228] sm:$0xf]
    %v165 = vld [vmem:[%s1 + $0x22c] sm:$0xf]
    %v166 = vld [vmem:[%s1 + $0x230] sm:$0xf]
    %v167 = vld [vmem:[%s1 + $0x234] sm:$0xf]
    %v168 = vld [vmem:[%s1 + $0x238] sm:$0xf]
    %v169 = vld [vmem:[%s1 + $0x23c] sm:$0xf]
    %v170 = vld [vmem:[%s1 + $0x240] sm:$0xf]
    %v171 = vld [vmem:[%s1 + $0x244] sm:$0xf]
    %v172 = vld [vmem:[%s1 + $0x248] sm:$0xf]
    %v173 = vld [vmem:[%s1 + $0x24c] sm:$0xf]
    %v174 = vld [vmem:[%s1 + $0x250] sm:$0xf]
    %v175 = vld [vmem:[%s1 + $0x254] sm:$0xf]
    %v176 = vld [vmem:[%s1 + $0x258] sm:$0xf]
    %v177 = vld [vmem:[%s1 + $0x25c] sm:$0xf]
    %v178 = vld [vmem:[%s1 + $0x260] sm:$0xf]
    %v179 = vld [vmem:[%s1 + $0x264] sm:$0xf]
    %v180 = vld [vmem:[%s1 + $0x268] sm:$0xf]
    %v181 = vld [vmem:[%s1 + $0x26c] sm:$0xf]
    %v182 = vld [vmem:[%s1 + $0x270] sm:$0xf]
    %v183 = vld [vmem:[%s1 + $0x274] sm:$0xf]
    %v184 = vld [vmem:[%s1 + $0x278] sm:$0xf]
    %v185 = vld [vmem:[%s1 + $0x27c] sm:$0xf]
    %v186 = vld [vmem:[%s1 + $0x280] sm:$0xf]
    %v187 = vld [vmem:[%s1 + $0x284] sm:$0xf]
    %v188 = vld [vmem:[%s1 + $0x288] sm:$0xf]
    %v189 = vld [vmem:[%s1 + $0x28c] sm:$0xf]
    %v190 = vld [vmem:[%s1 + $0x290] sm:$0xf]
    %v191 = vld [vmem:[%s1 + $0x294] sm:$0xf]
    %v192 = vld [vmem:[%s1 + $0x298] sm:$0xf]
    %v193 = vld [vmem:[%s1 + $0x29c] sm:$0xf]
    %v194 = vld [vmem:[%s1 + $0x2a0] sm:$0xf]
    %v195 = vld [vmem:[%s1 + $0x2a4] sm:$0xf]
    %v196 = vld [vmem:[%s1 + $0x2a8] sm:$0xf]
    %v197 = vld [vmem:[%s1 + $0x2ac] sm:$0xf]
    %v198 = vld [vmem:[%s1 + $0x2b0] sm:$0xf]
    %v199 = vld [vmem:[%s1 + $0x2b4] sm:$0xf]
    %v200 = vld [vmem:[%s1 + $0x2b8] sm:$0xf]
    %v201 = vld [vmem:[%s1 + $0x2bc] sm:$0xf]
    %v202 = vld [vmem:[%s1 + $0x2c0] sm:$0xf]
    %v203 = vld [vmem:[%s1 + $0x2c4] sm:$0xf]
    %v204 = vld [vmem:[%s1 + $0x2c8] sm:$0xf]
    %v205 = vld [vmem:[%s1 + $0x2cc] sm:$0xf]
    %v206 = vld [vmem:[%s1 + $0x2d0] sm:$0xf]
    %v207 = vld [vmem:[%s1 + $0x2d4] sm:$0xf]
    %v208 = vld [vmem:[%s1 + $0x2d8] sm:$0xf]
    %v209 = vld [vmem:[%s1 + $0x2dc] sm:$0xf]
    %v210 = vld [vmem:[%s1 + $0x2e0] sm:$0xf]
    %v211 = vld [vmem:[%s1 + $0x2e4] sm:$0xf]
    %v212 = vld [vmem:[%s1 + $0x2e8] sm:$0xf]
    %v213 = vld [vmem:[%s1 + $0x2ec] sm:$0xf]
    %v214 = vld [vmem:[%s1 + $0x2f0] sm:$0xf]
    %v215 = vld [vmem:[%s1 + $0x2f4] sm:$0xf]
    %v216 = vld [vmem:[%s1 + $0x2f8] sm:$0xf]
    %v217 = vld [vmem:[%s1 + $0x2fc] sm:$0xf]
    %v218 = vld [vmem:[%s1 + $0x300] sm:$0xf]
    %v219 = vld [vmem:[%s1 + $0x304] sm:$0xf]
    %v220 = vld [vmem:[%s1 + $0x308] sm:$0xf]
    %v221 = vld [vmem:[%s1 + $0x30c] sm:$0xf]
    %v222 = vld [vmem:[%s1 + $0x310] sm:$0xf]
    %v223 = vld [vmem:[%s1 + $0x314] sm:$0xf]
    %v224 = vld [vmem:[%s1 + $0x318] sm:$0xf]
    %v225 = vld [vmem:[%s1 + $0x31c] sm:$0xf]
    %v226 = vld [vmem:[%s1 + $0x320] sm:$0xf]
    %v227 = vld [vmem:[%s1 + $0x324] sm:$0xf]
    %v228 = vld [vmem:[%s1 + $0x328] sm:$0xf]
    %v229 = vld [vmem:[%s1 + $0x32c] sm:$0xf]
    %v230 = vld [vmem:[%s1 + $0x330] sm:$0xf]
    %v231 = vld [vmem:[%s1 + $0x334] sm:$0xf]
    %v232 = vld [vmem:[%s1 + $0x338] sm:$0xf]
    %v233 = vld [vmem:[%s1 + $0x33c] sm:$0xf]
    %v234 = vld [vmem:[%s1 + $0x340] sm:$0xf]
    %v235 = vld [vmem:[%s1 + $0x344] sm:$0xf]
    %v236 = vld [vmem:[%s1 + $0x348] sm:$0xf]
    %v237 = vld [vmem:[%s1 + $0x34c] sm:$0xf]
    %v238 = vld [vmem:[%s1 + $0x350] sm:$0xf]
    %v239 = vld [vmem:[%s1 + $0x354] sm:$0xf]
    %v240 = vld [vmem:[%s1 + $0x358] sm:$0xf]
    %v241 = vld [vmem:[%s1 + $0x35c] sm:$0xf]
    %v242 = vld [vmem:[%s1 + $0x360] sm:$0xf]
    %v243 = vld [vmem:[%s1 + $0x364] sm:$0xf]
    %v244 = vld [vmem:[%s1 + $0x368] sm:$0xf]
    %v245 = vld [vmem:[%s1 + $0x36c] sm:$0xf]
    %v246 = vld [vmem:[%s1 + $0x370] sm:$0xf]
    %v247 = vld [vmem:[%s1 + $0x374] sm:$0xf]
    %v248 = vld [vmem:[%s1 + $0x378] sm:$0xf]
    %v249 = vld [vmem:[%s1 + $0x37c] sm:$0xf]
    %v250 = vld [vmem:[%s1 + $0x380] sm:$0xf]
    %v251 = vld [vmem:[%s1 + $0x384] sm:$0xf]
    %v252 = vld [vmem:[%s1 + $0x388] sm:$0xf]
    %v253 = vld [vmem:[%s1 + $0x38c] sm:$0xf]
    %v254 = vld [vmem:[%s1 + $0x390] sm:$0xf]
    %v255 = vld [vmem:[%s1 + $0x394] sm:$0xf]
    %v256 = vld [vmem:[%s1 + $0x398] sm:$0xf]
    %v257 = vld [vmem:[%s1 + $0x39c] sm:$0xf]
    %v258 = vld [vmem:[%s1 + $0x3a0] sm:$0xf]
    %v259 = vld [vmem:[%s1 + $0x3a4] sm:$0xf]
    %v260 = vld [vmem:[%s1 + $0x3a8] sm:$0xf]
    %v261 = vld [vmem:[%s1 + $0x3ac] sm:$0xf]
    %v262 = vld [vmem:[%s1 + $0x3b0] sm:$0xf]
    %v263 = vld [vmem:[%s1 + $0x3b4] sm:$0xf]
    %v264 = vld [vmem:[%s1 + $0x3b8] sm:$0xf]
    %v265 = vld [vmem:[%s1 + $0x3bc] sm:$0xf]
    %v266 = vld [vmem:[%s1 + $0x3c0] sm:$0xf]
    %v267 = vld [vmem:[%s1 + $0x3c4] sm:$0xf]
    %v268 = vld [vmem:[%s1 + $0x3c8] sm:$0xf]
    %v269 = vld [vmem:[%s1 + $0x3cc] sm:$0xf]
    %v270 = vld [vmem:[%s1 + $0x3d0] sm:$0xf]
    %v271 = vld [vmem:[%s1 + $0x3d4] sm:$0xf]
    %v272 = vld [vmem:[%s1 + $0x3d8] sm:$0xf]
    %v273 = vld [vmem:[%s1 + $0x3dc] sm:$0xf]
    %v274 = vld [vmem:[%s1 + $0x3e0] sm:$0xf]
    %v275 = vld [vmem:[%s1 + $0x3e4] sm:$0xf]
    %v276 = vld [vmem:[%s1 + $0x3e8] sm:$0xf]
    %v277 = vld [vmem:[%s1 + $0x3ec] sm:$0xf]
    %v278 = vld [vmem:[%s1 + $0x3f0] sm:$0xf]
    %v279 = vld [vmem:[%s1 + $0x3f4] sm:$0xf]
    %v280 = vld [vmem:[%s1 + $0x3f8] sm:$0xf]
    %v281 = vld [vmem:[%s1 + $0x3fc] sm:$0xf]
    %v282 = vld [vmem:[%s3] sm:$0x1]
    %v284 = vperm.slane %v282, 0
    %287 = vst [vmem:[#allocation1] ss:$9 sm:$0xff] %v24
    %v288 = vld [vmem:[#allocation1] sm:$0xff]
    %v289 = vld [vmem:[#allocation1 + $0x9] sm:$0xff]
    %v290 = vld [vmem:[#allocation1 + $0x12] sm:$0xff]
    %v291 = vld [vmem:[#allocation1 + $0x1b] sm:$0xff]
    %v292 = vld [vmem:[#allocation1 + $0x24] sm:$0xff]
    %v293 = vld [vmem:[#allocation1 + $0x2d] sm:$0xff]
    %v294 = vld [vmem:[#allocation1 + $0x36] sm:$0xff]
    %v295 = vld [vmem:[#allocation1 + $0x3f] sm:$0xff]
    %297 = vst [vmem:[#allocation1] ss:$9 sm:$0xff] %v25
    %v298 = vld [vmem:[#allocation1] sm:$0xff]
    %v299 = vld [vmem:[#allocation1 + $0x9] sm:$0xff]
    %v300 = vld [vmem:[#allocation1 + $0x12] sm:$0xff]
    %v301 = vld [vmem:[#allocation1 + $0x1b] sm:$0xff]
    %v302 = vld [vmem:[#allocation1 + $0x24] sm:$0xff]
    %v303 = vld [vmem:[#allocation1 + $0x2d] sm:$0xff]
    %v304 = vld [vmem:[#allocation1 + $0x36] sm:$0xff]
    %v305 = vld [vmem:[#allocation1 + $0x3f] sm:$0xff]
    %v578 = vunpack.c.l.b16 %v26
    %v579 = vunpack.c.l.b16 %v27
    %v580 = vunpack.c.l.b16 %v28
    %v581 = vunpack.c.l.b16 %v29
    %v582 = vunpack.c.l.b16 %v30
    %v583 = vunpack.c.l.b16 %v31
    %v584 = vunpack.c.l.b16 %v32
    %v585 = vunpack.c.l.b16 %v33
    %v586 = vunpack.c.l.b16 %v34
    %v587 = vunpack.c.l.b16 %v35
    %v588 = vunpack.c.l.b16 %v36
    %v589 = vunpack.c.l.b16 %v37
    %v590 = vunpack.c.l.b16 %v38
    %v591 = vunpack.c.l.b16 %v39
    %v592 = vunpack.c.l.b16 %v40
    %v593 = vunpack.c.l.b16 %v41
    %v594 = vunpack.c.l.b16 %v42
    %v595 = vunpack.c.l.b16 %v43
    %v596 = vunpack.c.l.b16 %v44
    %v597 = vunpack.c.l.b16 %v45
    %v598 = vunpack.c.l.b16 %v46
    %v599 = vunpack.c.l.b16 %v47
    %v600 = vunpack.c.l.b16 %v48
    %v601 = vunpack.c.l.b16 %v49
    %v602 = vunpack.c.l.b16 %v50
    %v603 = vunpack.c.l.b16 %v51
    %v604 = vunpack.c.l.b16 %v52
    %v605 = vunpack.c.l.b16 %v53
    %v606 = vunpack.c.l.b16 %v54
    %v607 = vunpack.c.l.b16 %v55
    %v608 = vunpack.c.l.b16 %v56
    %v609 = vunpack.c.l.b16 %v57
    %v610 = vunpack.c.l.b16 %v58
    %v611 = vunpack.c.l.b16 %v59
    %v612 = vunpack.c.l.b16 %v60
    %v613 = vunpack.c.l.b16 %v61
    %v614 = vunpack.c.l.b16 %v62
    %v615 = vunpack.c.l.b16 %v63
    %v616 = vunpack.c.l.b16 %v64
    %v617 = vunpack.c.l.b16 %v65
    %v618 = vunpack.c.l.b16 %v66
    %v619 = vunpack.c.l.b16 %v67
    %v620 = vunpack.c.l.b16 %v68
    %v621 = vunpack.c.l.b16 %v69
    %v622 = vunpack.c.l.b16 %v70
    %v623 = vunpack.c.l.b16 %v71
    %v624 = vunpack.c.l.b16 %v72
    %v625 = vunpack.c.l.b16 %v73
    %v626 = vunpack.c.l.b16 %v74
    %v627 = vunpack.c.l.b16 %v75
    %v628 = vunpack.c.l.b16 %v76
    %v629 = vunpack.c.l.b16 %v77
    %v630 = vunpack.c.l.b16 %v78
    %v631 = vunpack.c.l.b16 %v79
    %v632 = vunpack.c.l.b16 %v80
    %v633 = vunpack.c.l.b16 %v81
    %v634 = vunpack.c.l.b16 %v82
    %v635 = vunpack.c.l.b16 %v83
    %v636 = vunpack.c.l.b16 %v84
    %v637 = vunpack.c.l.b16 %v85
    %v638 = vunpack.c.l.b16 %v86
    %v639 = vunpack.c.l.b16 %v87
    %v640 = vunpack.c.l.b16 %v88
    %v641 = vunpack.c.l.b16 %v89
    %v642 = vunpack.c.l.b16 %v90
    %v643 = vunpack.c.l.b16 %v91
    %v644 = vunpack.c.l.b16 %v92
    %v645 = vunpack.c.l.b16 %v93
    %v646 = vunpack.c.l.b16 %v94
    %v647 = vunpack.c.l.b16 %v95
    %v648 = vunpack.c.l.b16 %v96
    %v649 = vunpack.c.l.b16 %v97
    %v650 = vunpack.c.l.b16 %v98
    %v651 = vunpack.c.l.b16 %v99
    %v652 = vunpack.c.l.b16 %v100
    %v653 = vunpack.c.l.b16 %v101
    %v654 = vunpack.c.l.b16 %v102
    %v655 = vunpack.c.l.b16 %v103
    %v656 = vunpack.c.l.b16 %v104
    %v657 = vunpack.c.l.b16 %v105
    %v658 = vunpack.c.l.b16 %v106
    %v659 = vunpack.c.l.b16 %v107
    %v660 = vunpack.c.l.b16 %v108
    %v661 = vunpack.c.l.b16 %v109
    %v662 = vunpack.c.l.b16 %v110
    %v663 = vunpack.c.l.b16 %v111
    %v664 = vunpack.c.l.b16 %v112
    %v665 = vunpack.c.l.b16 %v113
    %v666 = vunpack.c.l.b16 %v114
    %v667 = vunpack.c.l.b16 %v115
    %v668 = vunpack.c.l.b16 %v116
    %v669 = vunpack.c.l.b16 %v117
    %v670 = vunpack.c.l.b16 %v118
    %v671 = vunpack.c.l.b16 %v119
    %v672 = vunpack.c.l.b16 %v120
    %v673 = vunpack.c.l.b16 %v121
    %v674 = vunpack.c.l.b16 %v122
    %v675 = vunpack.c.l.b16 %v123
    %v676 = vunpack.c.l.b16 %v124
    %v677 = vunpack.c.l.b16 %v125
    %v678 = vunpack.c.l.b16 %v126
    %v679 = vunpack.c.l.b16 %v127
    %v680 = vunpack.c.l.b16 %v128
    %v681 = vunpack.c.l.b16 %v129
    %v682 = vunpack.c.l.b16 %v130
    %v683 = vunpack.c.l.b16 %v131
    %v684 = vunpack.c.l.b16 %v132
    %v685 = vunpack.c.l.b16 %v133
    %v686 = vunpack.c.l.b16 %v134
    %v687 = vunpack.c.l.b16 %v135
    %v688 = vunpack.c.l.b16 %v136
    %v689 = vunpack.c.l.b16 %v137
    %v690 = vunpack.c.l.b16 %v138
    %v691 = vunpack.c.l.b16 %v139
    %v692 = vunpack.c.l.b16 %v140
    %v693 = vunpack.c.l.b16 %v141
    %v694 = vunpack.c.l.b16 %v142
    %v695 = vunpack.c.l.b16 %v143
    %v696 = vunpack.c.l.b16 %v144
    %v697 = vunpack.c.l.b16 %v145
    %v698 = vunpack.c.l.b16 %v146
    %v699 = vunpack.c.l.b16 %v147
    %v700 = vunpack.c.l.b16 %v148
    %v701 = vunpack.c.l.b16 %v149
    %v702 = vunpack.c.l.b16 %v150
    %v703 = vunpack.c.l.b16 %v151
    %v704 = vunpack.c.l.b16 %v152
    %v705 = vunpack.c.l.b16 %v153
    %v706 = vunpack.c.l.b16 %v154
    %v707 = vunpack.c.l.b16 %v155
    %v708 = vunpack.c.l.b16 %v156
    %v709 = vunpack.c.l.b16 %v157
    %v710 = vunpack.c.l.b16 %v158
    %v711 = vunpack.c.l.b16 %v159
    %v712 = vunpack.c.l.b16 %v160
    %v713 = vunpack.c.l.b16 %v161
    %v714 = vunpack.c.l.b16 %v162
    %v715 = vunpack.c.l.b16 %v163
    %v716 = vunpack.c.l.b16 %v164
    %v717 = vunpack.c.l.b16 %v165
    %v718 = vunpack.c.l.b16 %v166
    %v719 = vunpack.c.l.b16 %v167
    %v720 = vunpack.c.l.b16 %v168
    %v721 = vunpack.c.l.b16 %v169
    %v722 = vunpack.c.l.b16 %v170
    %v723 = vunpack.c.l.b16 %v171
    %v724 = vunpack.c.l.b16 %v172
    %v725 = vunpack.c.l.b16 %v173
    %v726 = vunpack.c.l.b16 %v174
    %v727 = vunpack.c.l.b16 %v175
    %v728 = vunpack.c.l.b16 %v176
    %v729 = vunpack.c.l.b16 %v177
    %v730 = vunpack.c.l.b16 %v178
    %v731 = vunpack.c.l.b16 %v179
    %v732 = vunpack.c.l.b16 %v180
    %v733 = vunpack.c.l.b16 %v181
    %v734 = vunpack.c.l.b16 %v182
    %v735 = vunpack.c.l.b16 %v183
    %v736 = vunpack.c.l.b16 %v184
    %v737 = vunpack.c.l.b16 %v185
    %v738 = vunpack.c.l.b16 %v186
    %v739 = vunpack.c.l.b16 %v187
    %v740 = vunpack.c.l.b16 %v188
    %v741 = vunpack.c.l.b16 %v189
    %v742 = vunpack.c.l.b16 %v190
    %v743 = vunpack.c.l.b16 %v191
    %v744 = vunpack.c.l.b16 %v192
    %v745 = vunpack.c.l.b16 %v193
    %v746 = vunpack.c.l.b16 %v194
    %v747 = vunpack.c.l.b16 %v195
    %v748 = vunpack.c.l.b16 %v196
    %v749 = vunpack.c.l.b16 %v197
    %v750 = vunpack.c.l.b16 %v198
    %v751 = vunpack.c.l.b16 %v199
    %v752 = vunpack.c.l.b16 %v200
    %v753 = vunpack.c.l.b16 %v201
    %v754 = vunpack.c.l.b16 %v202
    %v755 = vunpack.c.l.b16 %v203
    %v756 = vunpack.c.l.b16 %v204
    %v757 = vunpack.c.l.b16 %v205
    %v758 = vunpack.c.l.b16 %v206
    %v759 = vunpack.c.l.b16 %v207
    %v760 = vunpack.c.l.b16 %v208
    %v761 = vunpack.c.l.b16 %v209
    %v762 = vunpack.c.l.b16 %v210
    %v763 = vunpack.c.l.b16 %v211
    %v764 = vunpack.c.l.b16 %v212
    %v765 = vunpack.c.l.b16 %v213
    %v766 = vunpack.c.l.b16 %v214
    %v767 = vunpack.c.l.b16 %v215
    %v768 = vunpack.c.l.b16 %v216
    %v769 = vunpack.c.l.b16 %v217
    %v770 = vunpack.c.l.b16 %v218
    %v771 = vunpack.c.l.b16 %v219
    %v772 = vunpack.c.l.b16 %v220
    %v773 = vunpack.c.l.b16 %v221
    %v774 = vunpack.c.l.b16 %v222
    %v775 = vunpack.c.l.b16 %v223
    %v776 = vunpack.c.l.b16 %v224
    %v777 = vunpack.c.l.b16 %v225
    %v778 = vunpack.c.l.b16 %v226
    %v779 = vunpack.c.l.b16 %v227
    %v780 = vunpack.c.l.b16 %v228
    %v781 = vunpack.c.l.b16 %v229
    %v782 = vunpack.c.l.b16 %v230
    %v783 = vunpack.c.l.b16 %v231
    %v784 = vunpack.c.l.b16 %v232
    %v785 = vunpack.c.l.b16 %v233
    %v786 = vunpack.c.l.b16 %v234
    %v787 = vunpack.c.l.b16 %v235
    %v788 = vunpack.c.l.b16 %v236
    %v789 = vunpack.c.l.b16 %v237
    %v790 = vunpack.c.l.b16 %v238
    %v791 = vunpack.c.l.b16 %v239
    %v792 = vunpack.c.l.b16 %v240
    %v793 = vunpack.c.l.b16 %v241
    %v794 = vunpack.c.l.b16 %v242
    %v795 = vunpack.c.l.b16 %v243
    %v796 = vunpack.c.l.b16 %v244
    %v797 = vunpack.c.l.b16 %v245
    %v798 = vunpack.c.l.b16 %v246
    %v799 = vunpack.c.l.b16 %v247
    %v800 = vunpack.c.l.b16 %v248
    %v801 = vunpack.c.l.b16 %v249
    %v802 = vunpack.c.l.b16 %v250
    %v803 = vunpack.c.l.b16 %v251
    %v804 = vunpack.c.l.b16 %v252
    %v805 = vunpack.c.l.b16 %v253
    %v806 = vunpack.c.l.b16 %v254
    %v807 = vunpack.c.l.b16 %v255
    %v808 = vunpack.c.l.b16 %v256
    %v809 = vunpack.c.l.b16 %v257
    %v810 = vunpack.c.l.b16 %v258
    %v811 = vunpack.c.l.b16 %v259
    %v812 = vunpack.c.l.b16 %v260
    %v813 = vunpack.c.l.b16 %v261
    %v814 = vunpack.c.l.b16 %v262
    %v815 = vunpack.c.l.b16 %v263
    %v816 = vunpack.c.l.b16 %v264
    %v817 = vunpack.c.l.b16 %v265
    %v818 = vunpack.c.l.b16 %v266
    %v819 = vunpack.c.l.b16 %v267
    %v820 = vunpack.c.l.b16 %v268
    %v821 = vunpack.c.l.b16 %v269
    %v822 = vunpack.c.l.b16 %v270
    %v823 = vunpack.c.l.b16 %v271
    %v824 = vunpack.c.l.b16 %v272
    %v825 = vunpack.c.l.b16 %v273
    %v826 = vunpack.c.l.b16 %v274
    %v827 = vunpack.c.l.b16 %v275
    %v828 = vunpack.c.l.b16 %v276
    %v829 = vunpack.c.l.b16 %v277
    %v830 = vunpack.c.l.b16 %v278
    %v831 = vunpack.c.l.b16 %v279
    %v832 = vunpack.c.l.b16 %v280
    %v833 = vunpack.c.l.b16 %v281
    %v834 = vpack.c.b16 %v579, %v578
    %v835 = vpack.c.b16 %v581, %v580
    %v836 = vpack.c.b16 %v583, %v582
    %v837 = vpack.c.b16 %v585, %v584
    %v838 = vpack.c.b16 %v587, %v586
    %v839 = vpack.c.b16 %v589, %v588
    %v840 = vpack.c.b16 %v591, %v590
    %v841 = vpack.c.b16 %v593, %v592
    %v842 = vpack.c.b16 %v595, %v594
    %v843 = vpack.c.b16 %v597, %v596
    %v844 = vpack.c.b16 %v599, %v598
    %v845 = vpack.c.b16 %v601, %v600
    %v846 = vpack.c.b16 %v603, %v602
    %v847 = vpack.c.b16 %v605, %v604
    %v848 = vpack.c.b16 %v607, %v606
    %v849 = vpack.c.b16 %v609, %v608
    %v850 = vpack.c.b16 %v611, %v610
    %v851 = vpack.c.b16 %v613, %v612
    %v852 = vpack.c.b16 %v615, %v614
    %v853 = vpack.c.b16 %v617, %v616
    %v854 = vpack.c.b16 %v619, %v618
    %v855 = vpack.c.b16 %v621, %v620
    %v856 = vpack.c.b16 %v623, %v622
    %v857 = vpack.c.b16 %v625, %v624
    %v858 = vpack.c.b16 %v627, %v626
    %v859 = vpack.c.b16 %v629, %v628
    %v860 = vpack.c.b16 %v631, %v630
    %v861 = vpack.c.b16 %v633, %v632
    %v862 = vpack.c.b16 %v635, %v634
    %v863 = vpack.c.b16 %v637, %v636
    %v864 = vpack.c.b16 %v639, %v638
    %v865 = vpack.c.b16 %v641, %v640
    %v866 = vpack.c.b16 %v643, %v642
    %v867 = vpack.c.b16 %v645, %v644
    %v868 = vpack.c.b16 %v647, %v646
    %v869 = vpack.c.b16 %v649, %v648
    %v870 = vpack.c.b16 %v651, %v650
    %v871 = vpack.c.b16 %v653, %v652
    %v872 = vpack.c.b16 %v655, %v654
    %v873 = vpack.c.b16 %v657, %v656
    %v874 = vpack.c.b16 %v659, %v658
    %v875 = vpack.c.b16 %v661, %v660
    %v876 = vpack.c.b16 %v663, %v662
    %v877 = vpack.c.b16 %v665, %v664
    %v878 = vpack.c.b16 %v667, %v666
    %v879 = vpack.c.b16 %v669, %v668
    %v880 = vpack.c.b16 %v671, %v670
    %v881 = vpack.c.b16 %v673, %v672
    %v882 = vpack.c.b16 %v675, %v674
    %v883 = vpack.c.b16 %v677, %v676
    %v884 = vpack.c.b16 %v679, %v678
    %v885 = vpack.c.b16 %v681, %v680
    %v886 = vpack.c.b16 %v683, %v682
    %v887 = vpack.c.b16 %v685, %v684
    %v888 = vpack.c.b16 %v687, %v686
    %v889 = vpack.c.b16 %v689, %v688
    %v890 = vpack.c.b16 %v691, %v690
    %v891 = vpack.c.b16 %v693, %v692
    %v892 = vpack.c.b16 %v695, %v694
    %v893 = vpack.c.b16 %v697, %v696
    %v894 = vpack.c.b16 %v699, %v698
    %v895 = vpack.c.b16 %v701, %v700
    %v896 = vpack.c.b16 %v703, %v702
    %v897 = vpack.c.b16 %v705, %v704
    %v898 = vpack.c.b16 %v707, %v706
    %v899 = vpack.c.b16 %v709, %v708
    %v900 = vpack.c.b16 %v711, %v710
    %v901 = vpack.c.b16 %v713, %v712
    %v902 = vpack.c.b16 %v715, %v714
    %v903 = vpack.c.b16 %v717, %v716
    %v904 = vpack.c.b16 %v719, %v718
    %v905 = vpack.c.b16 %v721, %v720
    %v906 = vpack.c.b16 %v723, %v722
    %v907 = vpack.c.b16 %v725, %v724
    %v908 = vpack.c.b16 %v727, %v726
    %v909 = vpack.c.b16 %v729, %v728
    %v910 = vpack.c.b16 %v731, %v730
    %v911 = vpack.c.b16 %v733, %v732
    %v912 = vpack.c.b16 %v735, %v734
    %v913 = vpack.c.b16 %v737, %v736
    %v914 = vpack.c.b16 %v739, %v738
    %v915 = vpack.c.b16 %v741, %v740
    %v916 = vpack.c.b16 %v743, %v742
    %v917 = vpack.c.b16 %v745, %v744
    %v918 = vpack.c.b16 %v747, %v746
    %v919 = vpack.c.b16 %v749, %v748
    %v920 = vpack.c.b16 %v751, %v750
    %v921 = vpack.c.b16 %v753, %v752
    %v922 = vpack.c.b16 %v755, %v754
    %v923 = vpack.c.b16 %v757, %v756
    %v924 = vpack.c.b16 %v759, %v758
    %v925 = vpack.c.b16 %v761, %v760
    %v926 = vpack.c.b16 %v763, %v762
    %v927 = vpack.c.b16 %v765, %v764
    %v928 = vpack.c.b16 %v767, %v766
    %v929 = vpack.c.b16 %v769, %v768
    %v930 = vpack.c.b16 %v771, %v770
    %v931 = vpack.c.b16 %v773, %v772
    %v932 = vpack.c.b16 %v775, %v774
    %v933 = vpack.c.b16 %v777, %v776
    %v934 = vpack.c.b16 %v779, %v778
    %v935 = vpack.c.b16 %v781, %v780
    %v936 = vpack.c.b16 %v783, %v782
    %v937 = vpack.c.b16 %v785, %v784
    %v938 = vpack.c.b16 %v787, %v786
    %v939 = vpack.c.b16 %v789, %v788
    %v940 = vpack.c.b16 %v791, %v790
    %v941 = vpack.c.b16 %v793, %v792
    %v942 = vpack.c.b16 %v795, %v794
    %v943 = vpack.c.b16 %v797, %v796
    %v944 = vpack.c.b16 %v799, %v798
    %v945 = vpack.c.b16 %v801, %v800
    %v946 = vpack.c.b16 %v803, %v802
    %v947 = vpack.c.b16 %v805, %v804
    %v948 = vpack.c.b16 %v807, %v806
    %v949 = vpack.c.b16 %v809, %v808
    %v950 = vpack.c.b16 %v811, %v810
    %v951 = vpack.c.b16 %v813, %v812
    %v952 = vpack.c.b16 %v815, %v814
    %v953 = vpack.c.b16 %v817, %v816
    %v954 = vpack.c.b16 %v819, %v818
    %v955 = vpack.c.b16 %v821, %v820
    %v956 = vpack.c.b16 %v823, %v822
    %v957 = vpack.c.b16 %v825, %v824
    %v958 = vpack.c.b16 %v827, %v826
    %v959 = vpack.c.b16 %v829, %v828
    %v960 = vpack.c.b16 %v831, %v830
    %v961 = vpack.c.b16 %v833, %v832
    %1090 = vmatpush.bf16.msra.mxu0 %v841
    %1091 = vmatpush.bf16.msra.mxu0 %v840
    %1092 = vmatpush.bf16.msra.mxu0 %v839
    %1093 = vmatpush.bf16.msra.mxu0 %v838
    %1094 = vmatpush.bf16.msra.mxu0 %v837
    %1095 = vmatpush.bf16.msra.mxu0 %v836
    %1096 = vmatpush.bf16.msra.mxu0 %v835
    %1097 = vmatpush.bf16.msra.mxu0 %v834
    %1098 = vmatmul.bf16.gmra.mxu0 %v288
    %v1099 = vpop.f32.mrf.mxu0
    %v1100 = vadd.f32 %v284, %v1099
    %v1101 = vpop.f32.mrf.mxu0
    %1102 = vdwg.mxu0
    %1103 = vmatpush.bf16.msra.mxu0 %v849
    %1104 = vmatpush.bf16.msra.mxu0 %v848
    %1105 = vmatpush.bf16.msra.mxu0 %v847
    %1106 = vmatpush.bf16.msra.mxu0 %v846
    %1107 = vmatpush.bf16.msra.mxu0 %v845
    %1108 = vmatpush.bf16.msra.mxu0 %v844
    %1109 = vmatpush.bf16.msra.mxu0 %v843
    %1110 = vmatpush.bf16.msra.mxu0 %v842
    %1111 = vmatmul.bf16.gmra.mxu0 %v289
    %v1112 = vpop.f32.mrf.mxu0
    %v1113 = vadd.f32 %v1100, %v1112
    %v1114 = vpop.f32.mrf.mxu0
    %1115 = vdwg.mxu0
    %1116 = vmatpush.bf16.msra.mxu0 %v857
    %1117 = vmatpush.bf16.msra.mxu0 %v856
    %1118 = vmatpush.bf16.msra.mxu0 %v855
    %1119 = vmatpush.bf16.msra.mxu0 %v854
    %1120 = vmatpush.bf16.msra.mxu0 %v853
    %1121 = vmatpush.bf16.msra.mxu0 %v852
    %1122 = vmatpush.bf16.msra.mxu0 %v851
    %1123 = vmatpush.bf16.msra.mxu0 %v850
    %1124 = vmatmul.bf16.gmra.mxu0 %v290
    %v1125 = vpop.f32.mrf.mxu0
    %v1126 = vadd.f32 %v1113, %v1125
    %v1127 = vpop.f32.mrf.mxu0
    %1128 = vdwg.mxu0
    %1129 = vmatpush.bf16.msra.mxu0 %v865
    %1130 = vmatpush.bf16.msra.mxu0 %v864
    %1131 = vmatpush.bf16.msra.mxu0 %v863
    %1132 = vmatpush.bf16.msra.mxu0 %v862
    %1133 = vmatpush.bf16.msra.mxu0 %v861
    %1134 = vmatpush.bf16.msra.mxu0 %v860
    %1135 = vmatpush.bf16.msra.mxu0 %v859
    %1136 = vmatpush.bf16.msra.mxu0 %v858
    %1137 = vmatmul.bf16.gmra.mxu0 %v291
    %v1138 = vpop.f32.mrf.mxu0
    %v1139 = vadd.f32 %v1126, %v1138
    %v1140 = vpop.f32.mrf.mxu0
    %1141 = vdwg.mxu0
    %1142 = vmatpush.bf16.msra.mxu0 %v873
    %1143 = vmatpush.bf16.msra.mxu0 %v872
    %1144 = vmatpush.bf16.msra.mxu0 %v871
    %1145 = vmatpush.bf16.msra.mxu0 %v870
    %1146 = vmatpush.bf16.msra.mxu0 %v869
    %1147 = vmatpush.bf16.msra.mxu0 %v868
    %1148 = vmatpush.bf16.msra.mxu0 %v867
    %1149 = vmatpush.bf16.msra.mxu0 %v866
    %1150 = vmatmul.bf16.gmra.mxu0 %v292
    %v1151 = vpop.f32.mrf.mxu0
    %v1152 = vadd.f32 %v1139, %v1151
    %v1153 = vpop.f32.mrf.mxu0
    %1154 = vdwg.mxu0
    %1155 = vmatpush.bf16.msra.mxu0 %v881
    %1156 = vmatpush.bf16.msra.mxu0 %v880
    %1157 = vmatpush.bf16.msra.mxu0 %v879
    %1158 = vmatpush.bf16.msra.mxu0 %v878
    %1159 = vmatpush.bf16.msra.mxu0 %v877
    %1160 = vmatpush.bf16.msra.mxu0 %v876
    %1161 = vmatpush.bf16.msra.mxu0 %v875
    %1162 = vmatpush.bf16.msra.mxu0 %v874
    %1163 = vmatmul.bf16.gmra.mxu0 %v293
    %v1164 = vpop.f32.mrf.mxu0
    %v1165 = vadd.f32 %v1152, %v1164
    %v1166 = vpop.f32.mrf.mxu0
    %1167 = vdwg.mxu0
    %1168 = vmatpush.bf16.msra.mxu0 %v889
    %1169 = vmatpush.bf16.msra.mxu0 %v888
    %1170 = vmatpush.bf16.msra.mxu0 %v887
    %1171 = vmatpush.bf16.msra.mxu0 %v886
    %1172 = vmatpush.bf16.msra.mxu0 %v885
    %1173 = vmatpush.bf16.msra.mxu0 %v884
    %1174 = vmatpush.bf16.msra.mxu0 %v883
    %1175 = vmatpush.bf16.msra.mxu0 %v882
    %1176 = vmatmul.bf16.gmra.mxu0 %v294
    %v1177 = vpop.f32.mrf.mxu0
    %v1178 = vadd.f32 %v1165, %v1177
    %v1179 = vpop.f32.mrf.mxu0
    %1180 = vdwg.mxu0
    %1181 = vmatpush.bf16.msra.mxu0 %v897
    %1182 = vmatpush.bf16.msra.mxu0 %v896
    %1183 = vmatpush.bf16.msra.mxu0 %v895
    %1184 = vmatpush.bf16.msra.mxu0 %v894
    %1185 = vmatpush.bf16.msra.mxu0 %v893
    %1186 = vmatpush.bf16.msra.mxu0 %v892
    %1187 = vmatpush.bf16.msra.mxu0 %v891
    %1188 = vmatpush.bf16.msra.mxu0 %v890
    %1189 = vmatmul.bf16.gmra.mxu0 %v295
    %v1190 = vpop.f32.mrf.mxu0
    %v1191 = vadd.f32 %v1178, %v1190
    %v1192 = vpop.f32.mrf.mxu0
    %1193 = vdwg.mxu0
    %1194 = vmatpush.bf16.msra.mxu0 %v905
    %1195 = vmatpush.bf16.msra.mxu0 %v904
    %1196 = vmatpush.bf16.msra.mxu0 %v903
    %1197 = vmatpush.bf16.msra.mxu0 %v902
    %1198 = vmatpush.bf16.msra.mxu0 %v901
    %1199 = vmatpush.bf16.msra.mxu0 %v900
    %1200 = vmatpush.bf16.msra.mxu0 %v899
    %1201 = vmatpush.bf16.msra.mxu0 %v898
    %1202 = vmatmul.bf16.gmra.mxu0 %v298
    %v1203 = vpop.f32.mrf.mxu0
    %v1204 = vadd.f32 %v1191, %v1203
    %v1205 = vpop.f32.mrf.mxu0
    %1206 = vdwg.mxu0
    %1207 = vmatpush.bf16.msra.mxu0 %v913
    %1208 = vmatpush.bf16.msra.mxu0 %v912
    %1209 = vmatpush.bf16.msra.mxu0 %v911
    %1210 = vmatpush.bf16.msra.mxu0 %v910
    %1211 = vmatpush.bf16.msra.mxu0 %v909
    %1212 = vmatpush.bf16.msra.mxu0 %v908
    %1213 = vmatpush.bf16.msra.mxu0 %v907
    %1214 = vmatpush.bf16.msra.mxu0 %v906
    %1215 = vmatmul.bf16.gmra.mxu0 %v299
    %v1216 = vpop.f32.mrf.mxu0
    %v1217 = vadd.f32 %v1204, %v1216
    %v1218 = vpop.f32.mrf.mxu0
    %1219 = vdwg.mxu0
    %1220 = vmatpush.bf16.msra.mxu0 %v921
    %1221 = vmatpush.bf16.msra.mxu0 %v920
    %1222 = vmatpush.bf16.msra.mxu0 %v919
    %1223 = vmatpush.bf16.msra.mxu0 %v918
    %1224 = vmatpush.bf16.msra.mxu0 %v917
    %1225 = vmatpush.bf16.msra.mxu0 %v916
    %1226 = vmatpush.bf16.msra.mxu0 %v915
    %1227 = vmatpush.bf16.msra.mxu0 %v914
    %1228 = vmatmul.bf16.gmra.mxu0 %v300
    %v1229 = vpop.f32.mrf.mxu0
    %v1230 = vadd.f32 %v1217, %v1229
    %v1231 = vpop.f32.mrf.mxu0
    %1232 = vdwg.mxu0
    %1233 = vmatpush.bf16.msra.mxu0 %v929
    %1234 = vmatpush.bf16.msra.mxu0 %v928
    %1235 = vmatpush.bf16.msra.mxu0 %v927
    %1236 = vmatpush.bf16.msra.mxu0 %v926
    %1237 = vmatpush.bf16.msra.mxu0 %v925
    %1238 = vmatpush.bf16.msra.mxu0 %v924
    %1239 = vmatpush.bf16.msra.mxu0 %v923
    %1240 = vmatpush.bf16.msra.mxu0 %v922
    %1241 = vmatmul.bf16.gmra.mxu0 %v301
    %v1242 = vpop.f32.mrf.mxu0
    %v1243 = vadd.f32 %v1230, %v1242
    %v1244 = vpop.f32.mrf.mxu0
    %1245 = vdwg.mxu0
    %1246 = vmatpush.bf16.msra.mxu0 %v937
    %1247 = vmatpush.bf16.msra.mxu0 %v936
    %1248 = vmatpush.bf16.msra.mxu0 %v935
    %1249 = vmatpush.bf16.msra.mxu0 %v934
    %1250 = vmatpush.bf16.msra.mxu0 %v933
    %1251 = vmatpush.bf16.msra.mxu0 %v932
    %1252 = vmatpush.bf16.msra.mxu0 %v931
    %1253 = vmatpush.bf16.msra.mxu0 %v930
    %1254 = vmatmul.bf16.gmra.mxu0 %v302
    %v1255 = vpop.f32.mrf.mxu0
    %v1256 = vadd.f32 %v1243, %v1255
    %v1257 = vpop.f32.mrf.mxu0
    %1258 = vdwg.mxu0
    %1259 = vmatpush.bf16.msra.mxu0 %v945
    %1260 = vmatpush.bf16.msra.mxu0 %v944
    %1261 = vmatpush.bf16.msra.mxu0 %v943
    %1262 = vmatpush.bf16.msra.mxu0 %v942
    %1263 = vmatpush.bf16.msra.mxu0 %v941
    %1264 = vmatpush.bf16.msra.mxu0 %v940
    %1265 = vmatpush.bf16.msra.mxu0 %v939
    %1266 = vmatpush.bf16.msra.mxu0 %v938
    %1267 = vmatmul.bf16.gmra.mxu0 %v303
    %v1268 = vpop.f32.mrf.mxu0
    %v1269 = vadd.f32 %v1256, %v1268
    %v1270 = vpop.f32.mrf.mxu0
    %1271 = vdwg.mxu0
    %1272 = vmatpush.bf16.msra.mxu0 %v953
    %1273 = vmatpush.bf16.msra.mxu0 %v952
    %1274 = vmatpush.bf16.msra.mxu0 %v951
    %1275 = vmatpush.bf16.msra.mxu0 %v950
    %1276 = vmatpush.bf16.msra.mxu0 %v949
    %1277 = vmatpush.bf16.msra.mxu0 %v948
    %1278 = vmatpush.bf16.msra.mxu0 %v947
    %1279 = vmatpush.bf16.msra.mxu0 %v946
    %1280 = vmatmul.bf16.gmra.mxu0 %v304
    %v1281 = vpop.f32.mrf.mxu0
    %v1282 = vadd.f32 %v1269, %v1281
    %v1283 = vpop.f32.mrf.mxu0
    %1284 = vdwg.mxu0
    %1285 = vmatpush.bf16.msra.mxu0 %v961
    %1286 = vmatpush.bf16.msra.mxu0 %v960
    %1287 = vmatpush.bf16.msra.mxu0 %v959
    %1288 = vmatpush.bf16.msra.mxu0 %v958
    %1289 = vmatpush.bf16.msra.mxu0 %v957
    %1290 = vmatpush.bf16.msra.mxu0 %v956
    %1291 = vmatpush.bf16.msra.mxu0 %v955
    %1292 = vmatpush.bf16.msra.mxu0 %v954
    %1293 = vmatmul.bf16.gmra.mxu0 %v305
    %v1294 = vpop.f32.mrf.mxu0
    %v1295 = vadd.f32 %v1282, %v1294
    %v1296 = vpop.f32.mrf.mxu0
    %1297 = vdwg.mxu0
    %v1298 = vld [vmem:[%s2] sm:$0xf]
    %v1299 = vld [vmem:[%s2 + $0x4] sm:$0xf]
    %v1300 = vld [vmem:[%s2 + $0x8] sm:$0xf]
    %v1301 = vld [vmem:[%s2 + $0xc] sm:$0xf]
    %v1302 = vld [vmem:[%s2 + $0x10] sm:$0xf]
    %v1303 = vld [vmem:[%s2 + $0x14] sm:$0xf]
    %v1304 = vld [vmem:[%s2 + $0x18] sm:$0xf]
    %v1305 = vld [vmem:[%s2 + $0x1c] sm:$0xf]
    %v1306 = vld [vmem:[%s2 + $0x20] sm:$0xf]
    %v1307 = vld [vmem:[%s2 + $0x24] sm:$0xf]
    %v1308 = vld [vmem:[%s2 + $0x28] sm:$0xf]
    %v1309 = vld [vmem:[%s2 + $0x2c] sm:$0xf]
    %v1310 = vld [vmem:[%s2 + $0x30] sm:$0xf]
    %v1311 = vld [vmem:[%s2 + $0x34] sm:$0xf]
    %v1312 = vld [vmem:[%s2 + $0x38] sm:$0xf]
    %v1313 = vld [vmem:[%s2 + $0x3c] sm:$0xf]
    %v1314 = vld [vmem:[%s2 + $0x40] sm:$0xf]
    %v1315 = vld [vmem:[%s2 + $0x44] sm:$0xf]
    %v1316 = vld [vmem:[%s2 + $0x48] sm:$0xf]
    %v1317 = vld [vmem:[%s2 + $0x4c] sm:$0xf]
    %v1318 = vld [vmem:[%s2 + $0x50] sm:$0xf]
    %v1319 = vld [vmem:[%s2 + $0x54] sm:$0xf]
    %v1320 = vld [vmem:[%s2 + $0x58] sm:$0xf]
    %v1321 = vld [vmem:[%s2 + $0x5c] sm:$0xf]
    %v1322 = vld [vmem:[%s2 + $0x60] sm:$0xf]
    %v1323 = vld [vmem:[%s2 + $0x64] sm:$0xf]
    %v1324 = vld [vmem:[%s2 + $0x68] sm:$0xf]
    %v1325 = vld [vmem:[%s2 + $0x6c] sm:$0xf]
    %v1326 = vld [vmem:[%s2 + $0x70] sm:$0xf]
    %v1327 = vld [vmem:[%s2 + $0x74] sm:$0xf]
    %v1328 = vld [vmem:[%s2 + $0x78] sm:$0xf]
    %v1329 = vld [vmem:[%s2 + $0x7c] sm:$0xf]
    %v1330 = vld [vmem:[%s2 + $0x80] sm:$0xf]
    %v1331 = vld [vmem:[%s2 + $0x84] sm:$0xf]
    %v1332 = vld [vmem:[%s2 + $0x88] sm:$0xf]
    %v1333 = vld [vmem:[%s2 + $0x8c] sm:$0xf]
    %v1334 = vld [vmem:[%s2 + $0x90] sm:$0xf]
    %v1335 = vld [vmem:[%s2 + $0x94] sm:$0xf]
    %v1336 = vld [vmem:[%s2 + $0x98] sm:$0xf]
    %v1337 = vld [vmem:[%s2 + $0x9c] sm:$0xf]
    %v1338 = vld [vmem:[%s2 + $0xa0] sm:$0xf]
    %v1339 = vld [vmem:[%s2 + $0xa4] sm:$0xf]
    %v1340 = vld [vmem:[%s2 + $0xa8] sm:$0xf]
    %v1341 = vld [vmem:[%s2 + $0xac] sm:$0xf]
    %v1342 = vld [vmem:[%s2 + $0xb0] sm:$0xf]
    %v1343 = vld [vmem:[%s2 + $0xb4] sm:$0xf]
    %v1344 = vld [vmem:[%s2 + $0xb8] sm:$0xf]
    %v1345 = vld [vmem:[%s2 + $0xbc] sm:$0xf]
    %v1346 = vld [vmem:[%s2 + $0xc0] sm:$0xf]
    %v1347 = vld [vmem:[%s2 + $0xc4] sm:$0xf]
    %v1348 = vld [vmem:[%s2 + $0xc8] sm:$0xf]
    %v1349 = vld [vmem:[%s2 + $0xcc] sm:$0xf]
    %v1350 = vld [vmem:[%s2 + $0xd0] sm:$0xf]
    %v1351 = vld [vmem:[%s2 + $0xd4] sm:$0xf]
    %v1352 = vld [vmem:[%s2 + $0xd8] sm:$0xf]
    %v1353 = vld [vmem:[%s2 + $0xdc] sm:$0xf]
    %v1354 = vld [vmem:[%s2 + $0xe0] sm:$0xf]
    %v1355 = vld [vmem:[%s2 + $0xe4] sm:$0xf]
    %v1356 = vld [vmem:[%s2 + $0xe8] sm:$0xf]
    %v1357 = vld [vmem:[%s2 + $0xec] sm:$0xf]
    %v1358 = vld [vmem:[%s2 + $0xf0] sm:$0xf]
    %v1359 = vld [vmem:[%s2 + $0xf4] sm:$0xf]
    %v1360 = vld [vmem:[%s2 + $0xf8] sm:$0xf]
    %v1361 = vld [vmem:[%s2 + $0xfc] sm:$0xf]
    %v1362 = vld [vmem:[%s2 + $0x100] sm:$0xf]
    %v1363 = vld [vmem:[%s2 + $0x104] sm:$0xf]
    %v1364 = vld [vmem:[%s2 + $0x108] sm:$0xf]
    %v1365 = vld [vmem:[%s2 + $0x10c] sm:$0xf]
    %v1366 = vld [vmem:[%s2 + $0x110] sm:$0xf]
    %v1367 = vld [vmem:[%s2 + $0x114] sm:$0xf]
    %v1368 = vld [vmem:[%s2 + $0x118] sm:$0xf]
    %v1369 = vld [vmem:[%s2 + $0x11c] sm:$0xf]
    %v1370 = vld [vmem:[%s2 + $0x120] sm:$0xf]
    %v1371 = vld [vmem:[%s2 + $0x124] sm:$0xf]
    %v1372 = vld [vmem:[%s2 + $0x128] sm:$0xf]
    %v1373 = vld [vmem:[%s2 + $0x12c] sm:$0xf]
    %v1374 = vld [vmem:[%s2 + $0x130] sm:$0xf]
    %v1375 = vld [vmem:[%s2 + $0x134] sm:$0xf]
    %v1376 = vld [vmem:[%s2 + $0x138] sm:$0xf]
    %v1377 = vld [vmem:[%s2 + $0x13c] sm:$0xf]
    %v1378 = vld [vmem:[%s2 + $0x140] sm:$0xf]
    %v1379 = vld [vmem:[%s2 + $0x144] sm:$0xf]
    %v1380 = vld [vmem:[%s2 + $0x148] sm:$0xf]
    %v1381 = vld [vmem:[%s2 + $0x14c] sm:$0xf]
    %v1382 = vld [vmem:[%s2 + $0x150] sm:$0xf]
    %v1383 = vld [vmem:[%s2 + $0x154] sm:$0xf]
    %v1384 = vld [vmem:[%s2 + $0x158] sm:$0xf]
    %v1385 = vld [vmem:[%s2 + $0x15c] sm:$0xf]
    %v1386 = vld [vmem:[%s2 + $0x160] sm:$0xf]
    %v1387 = vld [vmem:[%s2 + $0x164] sm:$0xf]
    %v1388 = vld [vmem:[%s2 + $0x168] sm:$0xf]
    %v1389 = vld [vmem:[%s2 + $0x16c] sm:$0xf]
    %v1390 = vld [vmem:[%s2 + $0x170] sm:$0xf]
    %v1391 = vld [vmem:[%s2 + $0x174] sm:$0xf]
    %v1392 = vld [vmem:[%s2 + $0x178] sm:$0xf]
    %v1393 = vld [vmem:[%s2 + $0x17c] sm:$0xf]
    %v1394 = vld [vmem:[%s2 + $0x180] sm:$0xf]
    %v1395 = vld [vmem:[%s2 + $0x184] sm:$0xf]
    %v1396 = vld [vmem:[%s2 + $0x188] sm:$0xf]
    %v1397 = vld [vmem:[%s2 + $0x18c] sm:$0xf]
    %v1398 = vld [vmem:[%s2 + $0x190] sm:$0xf]
    %v1399 = vld [vmem:[%s2 + $0x194] sm:$0xf]
    %v1400 = vld [vmem:[%s2 + $0x198] sm:$0xf]
    %v1401 = vld [vmem:[%s2 + $0x19c] sm:$0xf]
    %v1402 = vld [vmem:[%s2 + $0x1a0] sm:$0xf]
    %v1403 = vld [vmem:[%s2 + $0x1a4] sm:$0xf]
    %v1404 = vld [vmem:[%s2 + $0x1a8] sm:$0xf]
    %v1405 = vld [vmem:[%s2 + $0x1ac] sm:$0xf]
    %v1406 = vld [vmem:[%s2 + $0x1b0] sm:$0xf]
    %v1407 = vld [vmem:[%s2 + $0x1b4] sm:$0xf]
    %v1408 = vld [vmem:[%s2 + $0x1b8] sm:$0xf]
    %v1409 = vld [vmem:[%s2 + $0x1bc] sm:$0xf]
    %v1410 = vld [vmem:[%s2 + $0x1c0] sm:$0xf]
    %v1411 = vld [vmem:[%s2 + $0x1c4] sm:$0xf]
    %v1412 = vld [vmem:[%s2 + $0x1c8] sm:$0xf]
    %v1413 = vld [vmem:[%s2 + $0x1cc] sm:$0xf]
    %v1414 = vld [vmem:[%s2 + $0x1d0] sm:$0xf]
    %v1415 = vld [vmem:[%s2 + $0x1d4] sm:$0xf]
    %v1416 = vld [vmem:[%s2 + $0x1d8] sm:$0xf]
    %v1417 = vld [vmem:[%s2 + $0x1dc] sm:$0xf]
    %v1418 = vld [vmem:[%s2 + $0x1e0] sm:$0xf]
    %v1419 = vld [vmem:[%s2 + $0x1e4] sm:$0xf]
    %v1420 = vld [vmem:[%s2 + $0x1e8] sm:$0xf]
    %v1421 = vld [vmem:[%s2 + $0x1ec] sm:$0xf]
    %v1422 = vld [vmem:[%s2 + $0x1f0] sm:$0xf]
    %v1423 = vld [vmem:[%s2 + $0x1f4] sm:$0xf]
    %v1424 = vld [vmem:[%s2 + $0x1f8] sm:$0xf]
    %v1425 = vld [vmem:[%s2 + $0x1fc] sm:$0xf]
    %v1426 = vld [vmem:[%s2 + $0x200] sm:$0xf]
    %v1427 = vld [vmem:[%s2 + $0x204] sm:$0xf]
    %v1428 = vld [vmem:[%s2 + $0x208] sm:$0xf]
    %v1429 = vld [vmem:[%s2 + $0x20c] sm:$0xf]
    %v1430 = vld [vmem:[%s2 + $0x210] sm:$0xf]
    %v1431 = vld [vmem:[%s2 + $0x214] sm:$0xf]
    %v1432 = vld [vmem:[%s2 + $0x218] sm:$0xf]
    %v1433 = vld [vmem:[%s2 + $0x21c] sm:$0xf]
    %v1434 = vld [vmem:[%s2 + $0x220] sm:$0xf]
    %v1435 = vld [vmem:[%s2 + $0x224] sm:$0xf]
    %v1436 = vld [vmem:[%s2 + $0x228] sm:$0xf]
    %v1437 = vld [vmem:[%s2 + $0x22c] sm:$0xf]
    %v1438 = vld [vmem:[%s2 + $0x230] sm:$0xf]
    %v1439 = vld [vmem:[%s2 + $0x234] sm:$0xf]
    %v1440 = vld [vmem:[%s2 + $0x238] sm:$0xf]
    %v1441 = vld [vmem:[%s2 + $0x23c] sm:$0xf]
    %v1442 = vld [vmem:[%s2 + $0x240] sm:$0xf]
    %v1443 = vld [vmem:[%s2 + $0x244] sm:$0xf]
    %v1444 = vld [vmem:[%s2 + $0x248] sm:$0xf]
    %v1445 = vld [vmem:[%s2 + $0x24c] sm:$0xf]
    %v1446 = vld [vmem:[%s2 + $0x250] sm:$0xf]
    %v1447 = vld [vmem:[%s2 + $0x254] sm:$0xf]
    %v1448 = vld [vmem:[%s2 + $0x258] sm:$0xf]
    %v1449 = vld [vmem:[%s2 + $0x25c] sm:$0xf]
    %v1450 = vld [vmem:[%s2 + $0x260] sm:$0xf]
    %v1451 = vld [vmem:[%s2 + $0x264] sm:$0xf]
    %v1452 = vld [vmem:[%s2 + $0x268] sm:$0xf]
    %v1453 = vld [vmem:[%s2 + $0x26c] sm:$0xf]
    %v1454 = vld [vmem:[%s2 + $0x270] sm:$0xf]
    %v1455 = vld [vmem:[%s2 + $0x274] sm:$0xf]
    %v1456 = vld [vmem:[%s2 + $0x278] sm:$0xf]
    %v1457 = vld [vmem:[%s2 + $0x27c] sm:$0xf]
    %v1458 = vld [vmem:[%s2 + $0x280] sm:$0xf]
    %v1459 = vld [vmem:[%s2 + $0x284] sm:$0xf]
    %v1460 = vld [vmem:[%s2 + $0x288] sm:$0xf]
    %v1461 = vld [vmem:[%s2 + $0x28c] sm:$0xf]
    %v1462 = vld [vmem:[%s2 + $0x290] sm:$0xf]
    %v1463 = vld [vmem:[%s2 + $0x294] sm:$0xf]
    %v1464 = vld [vmem:[%s2 + $0x298] sm:$0xf]
    %v1465 = vld [vmem:[%s2 + $0x29c] sm:$0xf]
    %v1466 = vld [vmem:[%s2 + $0x2a0] sm:$0xf]
    %v1467 = vld [vmem:[%s2 + $0x2a4] sm:$0xf]
    %v1468 = vld [vmem:[%s2 + $0x2a8] sm:$0xf]
    %v1469 = vld [vmem:[%s2 + $0x2ac] sm:$0xf]
    %v1470 = vld [vmem:[%s2 + $0x2b0] sm:$0xf]
    %v1471 = vld [vmem:[%s2 + $0x2b4] sm:$0xf]
    %v1472 = vld [vmem:[%s2 + $0x2b8] sm:$0xf]
    %v1473 = vld [vmem:[%s2 + $0x2bc] sm:$0xf]
    %v1474 = vld [vmem:[%s2 + $0x2c0] sm:$0xf]
    %v1475 = vld [vmem:[%s2 + $0x2c4] sm:$0xf]
    %v1476 = vld [vmem:[%s2 + $0x2c8] sm:$0xf]
    %v1477 = vld [vmem:[%s2 + $0x2cc] sm:$0xf]
    %v1478 = vld [vmem:[%s2 + $0x2d0] sm:$0xf]
    %v1479 = vld [vmem:[%s2 + $0x2d4] sm:$0xf]
    %v1480 = vld [vmem:[%s2 + $0x2d8] sm:$0xf]
    %v1481 = vld [vmem:[%s2 + $0x2dc] sm:$0xf]
    %v1482 = vld [vmem:[%s2 + $0x2e0] sm:$0xf]
    %v1483 = vld [vmem:[%s2 + $0x2e4] sm:$0xf]
    %v1484 = vld [vmem:[%s2 + $0x2e8] sm:$0xf]
    %v1485 = vld [vmem:[%s2 + $0x2ec] sm:$0xf]
    %v1486 = vld [vmem:[%s2 + $0x2f0] sm:$0xf]
    %v1487 = vld [vmem:[%s2 + $0x2f4] sm:$0xf]
    %v1488 = vld [vmem:[%s2 + $0x2f8] sm:$0xf]
    %v1489 = vld [vmem:[%s2 + $0x2fc] sm:$0xf]
    %v1490 = vld [vmem:[%s2 + $0x300] sm:$0xf]
    %v1491 = vld [vmem:[%s2 + $0x304] sm:$0xf]
    %v1492 = vld [vmem:[%s2 + $0x308] sm:$0xf]
    %v1493 = vld [vmem:[%s2 + $0x30c] sm:$0xf]
    %v1494 = vld [vmem:[%s2 + $0x310] sm:$0xf]
    %v1495 = vld [vmem:[%s2 + $0x314] sm:$0xf]
    %v1496 = vld [vmem:[%s2 + $0x318] sm:$0xf]
    %v1497 = vld [vmem:[%s2 + $0x31c] sm:$0xf]
    %v1498 = vld [vmem:[%s2 + $0x320] sm:$0xf]
    %v1499 = vld [vmem:[%s2 + $0x324] sm:$0xf]
    %v1500 = vld [vmem:[%s2 + $0x328] sm:$0xf]
    %v1501 = vld [vmem:[%s2 + $0x32c] sm:$0xf]
    %v1502 = vld [vmem:[%s2 + $0x330] sm:$0xf]
    %v1503 = vld [vmem:[%s2 + $0x334] sm:$0xf]
    %v1504 = vld [vmem:[%s2 + $0x338] sm:$0xf]
    %v1505 = vld [vmem:[%s2 + $0x33c] sm:$0xf]
    %v1506 = vld [vmem:[%s2 + $0x340] sm:$0xf]
    %v1507 = vld [vmem:[%s2 + $0x344] sm:$0xf]
    %v1508 = vld [vmem:[%s2 + $0x348] sm:$0xf]
    %v1509 = vld [vmem:[%s2 + $0x34c] sm:$0xf]
    %v1510 = vld [vmem:[%s2 + $0x350] sm:$0xf]
    %v1511 = vld [vmem:[%s2 + $0x354] sm:$0xf]
    %v1512 = vld [vmem:[%s2 + $0x358] sm:$0xf]
    %v1513 = vld [vmem:[%s2 + $0x35c] sm:$0xf]
    %v1514 = vld [vmem:[%s2 + $0x360] sm:$0xf]
    %v1515 = vld [vmem:[%s2 + $0x364] sm:$0xf]
    %v1516 = vld [vmem:[%s2 + $0x368] sm:$0xf]
    %v1517 = vld [vmem:[%s2 + $0x36c] sm:$0xf]
    %v1518 = vld [vmem:[%s2 + $0x370] sm:$0xf]
    %v1519 = vld [vmem:[%s2 + $0x374] sm:$0xf]
    %v1520 = vld [vmem:[%s2 + $0x378] sm:$0xf]
    %v1521 = vld [vmem:[%s2 + $0x37c] sm:$0xf]
    %v1522 = vld [vmem:[%s2 + $0x380] sm:$0xf]
    %v1523 = vld [vmem:[%s2 + $0x384] sm:$0xf]
    %v1524 = vld [vmem:[%s2 + $0x388] sm:$0xf]
    %v1525 = vld [vmem:[%s2 + $0x38c] sm:$0xf]
    %v1526 = vld [vmem:[%s2 + $0x390] sm:$0xf]
    %v1527 = vld [vmem:[%s2 + $0x394] sm:$0xf]
    %v1528 = vld [vmem:[%s2 + $0x398] sm:$0xf]
    %v1529 = vld [vmem:[%s2 + $0x39c] sm:$0xf]
    %v1530 = vld [vmem:[%s2 + $0x3a0] sm:$0xf]
    %v1531 = vld [vmem:[%s2 + $0x3a4] sm:$0xf]
    %v1532 = vld [vmem:[%s2 + $0x3a8] sm:$0xf]
    %v1533 = vld [vmem:[%s2 + $0x3ac] sm:$0xf]
    %v1534 = vld [vmem:[%s2 + $0x3b0] sm:$0xf]
    %v1535 = vld [vmem:[%s2 + $0x3b4] sm:$0xf]
    %v1536 = vld [vmem:[%s2 + $0x3b8] sm:$0xf]
    %v1537 = vld [vmem:[%s2 + $0x3bc] sm:$0xf]
    %v1538 = vld [vmem:[%s2 + $0x3c0] sm:$0xf]
    %v1539 = vld [vmem:[%s2 + $0x3c4] sm:$0xf]
    %v1540 = vld [vmem:[%s2 + $0x3c8] sm:$0xf]
    %v1541 = vld [vmem:[%s2 + $0x3cc] sm:$0xf]
    %v1542 = vld [vmem:[%s2 + $0x3d0] sm:$0xf]
    %v1543 = vld [vmem:[%s2 + $0x3d4] sm:$0xf]
    %v1544 = vld [vmem:[%s2 + $0x3d8] sm:$0xf]
    %v1545 = vld [vmem:[%s2 + $0x3dc] sm:$0xf]
    %v1546 = vld [vmem:[%s2 + $0x3e0] sm:$0xf]
    %v1547 = vld [vmem:[%s2 + $0x3e4] sm:$0xf]
    %v1548 = vld [vmem:[%s2 + $0x3e8] sm:$0xf]
    %v1549 = vld [vmem:[%s2 + $0x3ec] sm:$0xf]
    %v1550 = vld [vmem:[%s2 + $0x3f0] sm:$0xf]
    %v1551 = vld [vmem:[%s2 + $0x3f4] sm:$0xf]
    %v1552 = vld [vmem:[%s2 + $0x3f8] sm:$0xf]
    %v1553 = vld [vmem:[%s2 + $0x3fc] sm:$0xf]
    %v1554 = vld [vmem:[%s4] sm:$0x1]
    %v1556 = vperm.slane %v1554, 0
    %1558 = vst [vmem:[#allocation1] ss:$9 sm:$0xff] %v24
    %v1559 = vld [vmem:[#allocation1] sm:$0xff]
    %v1560 = vld [vmem:[#allocation1 + $0x9] sm:$0xff]
    %v1561 = vld [vmem:[#allocation1 + $0x12] sm:$0xff]
    %v1562 = vld [vmem:[#allocation1 + $0x1b] sm:$0xff]
    %v1563 = vld [vmem:[#allocation1 + $0x24] sm:$0xff]
    %v1564 = vld [vmem:[#allocation1 + $0x2d] sm:$0xff]
    %v1565 = vld [vmem:[#allocation1 + $0x36] sm:$0xff]
    %v1566 = vld [vmem:[#allocation1 + $0x3f] sm:$0xff]
    %1567 = vst [vmem:[#allocation1] ss:$9 sm:$0xff] %v25
    %v1568 = vld [vmem:[#allocation1] sm:$0xff]
    %v1569 = vld [vmem:[#allocation1 + $0x9] sm:$0xff]
    %v1570 = vld [vmem:[#allocation1 + $0x12] sm:$0xff]
    %v1571 = vld [vmem:[#allocation1 + $0x1b] sm:$0xff]
    %v1572 = vld [vmem:[#allocation1 + $0x24] sm:$0xff]
    %v1573 = vld [vmem:[#allocation1 + $0x2d] sm:$0xff]
    %v1574 = vld [vmem:[#allocation1 + $0x36] sm:$0xff]
    %v1575 = vld [vmem:[#allocation1 + $0x3f] sm:$0xff]
    %v1848 = vunpack.c.l.b16 %v1298
    %v1849 = vunpack.c.l.b16 %v1299
    %v1850 = vunpack.c.l.b16 %v1300
    %v1851 = vunpack.c.l.b16 %v1301
    %v1852 = vunpack.c.l.b16 %v1302
    %v1853 = vunpack.c.l.b16 %v1303
    %v1854 = vunpack.c.l.b16 %v1304
    %v1855 = vunpack.c.l.b16 %v1305
    %v1856 = vunpack.c.l.b16 %v1306
    %v1857 = vunpack.c.l.b16 %v1307
    %v1858 = vunpack.c.l.b16 %v1308
    %v1859 = vunpack.c.l.b16 %v1309
    %v1860 = vunpack.c.l.b16 %v1310
    %v1861 = vunpack.c.l.b16 %v1311
    %v1862 = vunpack.c.l.b16 %v1312
    %v1863 = vunpack.c.l.b16 %v1313
    %v1864 = vunpack.c.l.b16 %v1314
    %v1865 = vunpack.c.l.b16 %v1315
    %v1866 = vunpack.c.l.b16 %v1316
    %v1867 = vunpack.c.l.b16 %v1317
    %v1868 = vunpack.c.l.b16 %v1318
    %v1869 = vunpack.c.l.b16 %v1319
    %v1870 = vunpack.c.l.b16 %v1320
    %v1871 = vunpack.c.l.b16 %v1321
    %v1872 = vunpack.c.l.b16 %v1322
    %v1873 = vunpack.c.l.b16 %v1323
    %v1874 = vunpack.c.l.b16 %v1324
    %v1875 = vunpack.c.l.b16 %v1325
    %v1876 = vunpack.c.l.b16 %v1326
    %v1877 = vunpack.c.l.b16 %v1327
    %v1878 = vunpack.c.l.b16 %v1328
    %v1879 = vunpack.c.l.b16 %v1329
    %v1880 = vunpack.c.l.b16 %v1330
    %v1881 = vunpack.c.l.b16 %v1331
    %v1882 = vunpack.c.l.b16 %v1332
    %v1883 = vunpack.c.l.b16 %v1333
    %v1884 = vunpack.c.l.b16 %v1334
    %v1885 = vunpack.c.l.b16 %v1335
    %v1886 = vunpack.c.l.b16 %v1336
    %v1887 = vunpack.c.l.b16 %v1337
    %v1888 = vunpack.c.l.b16 %v1338
    %v1889 = vunpack.c.l.b16 %v1339
    %v1890 = vunpack.c.l.b16 %v1340
    %v1891 = vunpack.c.l.b16 %v1341
    %v1892 = vunpack.c.l.b16 %v1342
    %v1893 = vunpack.c.l.b16 %v1343
    %v1894 = vunpack.c.l.b16 %v1344
    %v1895 = vunpack.c.l.b16 %v1345
    %v1896 = vunpack.c.l.b16 %v1346
    %v1897 = vunpack.c.l.b16 %v1347
    %v1898 = vunpack.c.l.b16 %v1348
    %v1899 = vunpack.c.l.b16 %v1349
    %v1900 = vunpack.c.l.b16 %v1350
    %v1901 = vunpack.c.l.b16 %v1351
    %v1902 = vunpack.c.l.b16 %v1352
    %v1903 = vunpack.c.l.b16 %v1353
    %v1904 = vunpack.c.l.b16 %v1354
    %v1905 = vunpack.c.l.b16 %v1355
    %v1906 = vunpack.c.l.b16 %v1356
    %v1907 = vunpack.c.l.b16 %v1357
    %v1908 = vunpack.c.l.b16 %v1358
    %v1909 = vunpack.c.l.b16 %v1359
    %v1910 = vunpack.c.l.b16 %v1360
    %v1911 = vunpack.c.l.b16 %v1361
    %v1912 = vunpack.c.l.b16 %v1362
    %v1913 = vunpack.c.l.b16 %v1363
    %v1914 = vunpack.c.l.b16 %v1364
    %v1915 = vunpack.c.l.b16 %v1365
    %v1916 = vunpack.c.l.b16 %v1366
    %v1917 = vunpack.c.l.b16 %v1367
    %v1918 = vunpack.c.l.b16 %v1368
    %v1919 = vunpack.c.l.b16 %v1369
    %v1920 = vunpack.c.l.b16 %v1370
    %v1921 = vunpack.c.l.b16 %v1371
    %v1922 = vunpack.c.l.b16 %v1372
    %v1923 = vunpack.c.l.b16 %v1373
    %v1924 = vunpack.c.l.b16 %v1374
    %v1925 = vunpack.c.l.b16 %v1375
    %v1926 = vunpack.c.l.b16 %v1376
    %v1927 = vunpack.c.l.b16 %v1377
    %v1928 = vunpack.c.l.b16 %v1378
    %v1929 = vunpack.c.l.b16 %v1379
    %v1930 = vunpack.c.l.b16 %v1380
    %v1931 = vunpack.c.l.b16 %v1381
    %v1932 = vunpack.c.l.b16 %v1382
    %v1933 = vunpack.c.l.b16 %v1383
    %v1934 = vunpack.c.l.b16 %v1384
    %v1935 = vunpack.c.l.b16 %v1385
    %v1936 = vunpack.c.l.b16 %v1386
    %v1937 = vunpack.c.l.b16 %v1387
    %v1938 = vunpack.c.l.b16 %v1388
    %v1939 = vunpack.c.l.b16 %v1389
    %v1940 = vunpack.c.l.b16 %v1390
    %v1941 = vunpack.c.l.b16 %v1391
    %v1942 = vunpack.c.l.b16 %v1392
    %v1943 = vunpack.c.l.b16 %v1393
    %v1944 = vunpack.c.l.b16 %v1394
    %v1945 = vunpack.c.l.b16 %v1395
    %v1946 = vunpack.c.l.b16 %v1396
    %v1947 = vunpack.c.l.b16 %v1397
    %v1948 = vunpack.c.l.b16 %v1398
    %v1949 = vunpack.c.l.b16 %v1399
    %v1950 = vunpack.c.l.b16 %v1400
    %v1951 = vunpack.c.l.b16 %v1401
    %v1952 = vunpack.c.l.b16 %v1402
    %v1953 = vunpack.c.l.b16 %v1403
    %v1954 = vunpack.c.l.b16 %v1404
    %v1955 = vunpack.c.l.b16 %v1405
    %v1956 = vunpack.c.l.b16 %v1406
    %v1957 = vunpack.c.l.b16 %v1407
    %v1958 = vunpack.c.l.b16 %v1408
    %v1959 = vunpack.c.l.b16 %v1409
    %v1960 = vunpack.c.l.b16 %v1410
    %v1961 = vunpack.c.l.b16 %v1411
    %v1962 = vunpack.c.l.b16 %v1412
    %v1963 = vunpack.c.l.b16 %v1413
    %v1964 = vunpack.c.l.b16 %v1414
    %v1965 = vunpack.c.l.b16 %v1415
    %v1966 = vunpack.c.l.b16 %v1416
    %v1967 = vunpack.c.l.b16 %v1417
    %v1968 = vunpack.c.l.b16 %v1418
    %v1969 = vunpack.c.l.b16 %v1419
    %v1970 = vunpack.c.l.b16 %v1420
    %v1971 = vunpack.c.l.b16 %v1421
    %v1972 = vunpack.c.l.b16 %v1422
    %v1973 = vunpack.c.l.b16 %v1423
    %v1974 = vunpack.c.l.b16 %v1424
    %v1975 = vunpack.c.l.b16 %v1425
    %v1976 = vunpack.c.l.b16 %v1426
    %v1977 = vunpack.c.l.b16 %v1427
    %v1978 = vunpack.c.l.b16 %v1428
    %v1979 = vunpack.c.l.b16 %v1429
    %v1980 = vunpack.c.l.b16 %v1430
    %v1981 = vunpack.c.l.b16 %v1431
    %v1982 = vunpack.c.l.b16 %v1432
    %v1983 = vunpack.c.l.b16 %v1433
    %v1984 = vunpack.c.l.b16 %v1434
    %v1985 = vunpack.c.l.b16 %v1435
    %v1986 = vunpack.c.l.b16 %v1436
    %v1987 = vunpack.c.l.b16 %v1437
    %v1988 = vunpack.c.l.b16 %v1438
    %v1989 = vunpack.c.l.b16 %v1439
    %v1990 = vunpack.c.l.b16 %v1440
    %v1991 = vunpack.c.l.b16 %v1441
    %v1992 = vunpack.c.l.b16 %v1442
    %v1993 = vunpack.c.l.b16 %v1443
    %v1994 = vunpack.c.l.b16 %v1444
    %v1995 = vunpack.c.l.b16 %v1445
    %v1996 = vunpack.c.l.b16 %v1446
    %v1997 = vunpack.c.l.b16 %v1447
    %v1998 = vunpack.c.l.b16 %v1448
    %v1999 = vunpack.c.l.b16 %v1449
    %v2000 = vunpack.c.l.b16 %v1450
    %v2001 = vunpack.c.l.b16 %v1451
    %v2002 = vunpack.c.l.b16 %v1452
    %v2003 = vunpack.c.l.b16 %v1453
    %v2004 = vunpack.c.l.b16 %v1454
    %v2005 = vunpack.c.l.b16 %v1455
    %v2006 = vunpack.c.l.b16 %v1456
    %v2007 = vunpack.c.l.b16 %v1457
    %v2008 = vunpack.c.l.b16 %v1458
    %v2009 = vunpack.c.l.b16 %v1459
    %v2010 = vunpack.c.l.b16 %v1460
    %v2011 = vunpack.c.l.b16 %v1461
    %v2012 = vunpack.c.l.b16 %v1462
    %v2013 = vunpack.c.l.b16 %v1463
    %v2014 = vunpack.c.l.b16 %v1464
    %v2015 = vunpack.c.l.b16 %v1465
    %v2016 = vunpack.c.l.b16 %v1466
    %v2017 = vunpack.c.l.b16 %v1467
    %v2018 = vunpack.c.l.b16 %v1468
    %v2019 = vunpack.c.l.b16 %v1469
    %v2020 = vunpack.c.l.b16 %v1470
    %v2021 = vunpack.c.l.b16 %v1471
    %v2022 = vunpack.c.l.b16 %v1472
    %v2023 = vunpack.c.l.b16 %v1473
    %v2024 = vunpack.c.l.b16 %v1474
    %v2025 = vunpack.c.l.b16 %v1475
    %v2026 = vunpack.c.l.b16 %v1476
    %v2027 = vunpack.c.l.b16 %v1477
    %v2028 = vunpack.c.l.b16 %v1478
    %v2029 = vunpack.c.l.b16 %v1479
    %v2030 = vunpack.c.l.b16 %v1480
    %v2031 = vunpack.c.l.b16 %v1481
    %v2032 = vunpack.c.l.b16 %v1482
    %v2033 = vunpack.c.l.b16 %v1483
    %v2034 = vunpack.c.l.b16 %v1484
    %v2035 = vunpack.c.l.b16 %v1485
    %v2036 = vunpack.c.l.b16 %v1486
    %v2037 = vunpack.c.l.b16 %v1487
    %v2038 = vunpack.c.l.b16 %v1488
    %v2039 = vunpack.c.l.b16 %v1489
    %v2040 = vunpack.c.l.b16 %v1490
    %v2041 = vunpack.c.l.b16 %v1491
    %v2042 = vunpack.c.l.b16 %v1492
    %v2043 = vunpack.c.l.b16 %v1493
    %v2044 = vunpack.c.l.b16 %v1494
    %v2045 = vunpack.c.l.b16 %v1495
    %v2046 = vunpack.c.l.b16 %v1496
    %v2047 = vunpack.c.l.b16 %v1497
    %v2048 = vunpack.c.l.b16 %v1498
    %v2049 = vunpack.c.l.b16 %v1499
    %v2050 = vunpack.c.l.b16 %v1500
    %v2051 = vunpack.c.l.b16 %v1501
    %v2052 = vunpack.c.l.b16 %v1502
    %v2053 = vunpack.c.l.b16 %v1503
    %v2054 = vunpack.c.l.b16 %v1504
    %v2055 = vunpack.c.l.b16 %v1505
    %v2056 = vunpack.c.l.b16 %v1506
    %v2057 = vunpack.c.l.b16 %v1507
    %v2058 = vunpack.c.l.b16 %v1508
    %v2059 = vunpack.c.l.b16 %v1509
    %v2060 = vunpack.c.l.b16 %v1510
    %v2061 = vunpack.c.l.b16 %v1511
    %v2062 = vunpack.c.l.b16 %v1512
    %v2063 = vunpack.c.l.b16 %v1513
    %v2064 = vunpack.c.l.b16 %v1514
    %v2065 = vunpack.c.l.b16 %v1515
    %v2066 = vunpack.c.l.b16 %v1516
    %v2067 = vunpack.c.l.b16 %v1517
    %v2068 = vunpack.c.l.b16 %v1518
    %v2069 = vunpack.c.l.b16 %v1519
    %v2070 = vunpack.c.l.b16 %v1520
    %v2071 = vunpack.c.l.b16 %v1521
    %v2072 = vunpack.c.l.b16 %v1522
    %v2073 = vunpack.c.l.b16 %v1523
    %v2074 = vunpack.c.l.b16 %v1524
    %v2075 = vunpack.c.l.b16 %v1525
    %v2076 = vunpack.c.l.b16 %v1526
    %v2077 = vunpack.c.l.b16 %v1527
    %v2078 = vunpack.c.l.b16 %v1528
    %v2079 = vunpack.c.l.b16 %v1529
    %v2080 = vunpack.c.l.b16 %v1530
    %v2081 = vunpack.c.l.b16 %v1531
    %v2082 = vunpack.c.l.b16 %v1532
    %v2083 = vunpack.c.l.b16 %v1533
    %v2084 = vunpack.c.l.b16 %v1534
    %v2085 = vunpack.c.l.b16 %v1535
    %v2086 = vunpack.c.l.b16 %v1536
    %v2087 = vunpack.c.l.b16 %v1537
    %v2088 = vunpack.c.l.b16 %v1538
    %v2089 = vunpack.c.l.b16 %v1539
    %v2090 = vunpack.c.l.b16 %v1540
    %v2091 = vunpack.c.l.b16 %v1541
    %v2092 = vunpack.c.l.b16 %v1542
    %v2093 = vunpack.c.l.b16 %v1543
    %v2094 = vunpack.c.l.b16 %v1544
    %v2095 = vunpack.c.l.b16 %v1545
    %v2096 = vunpack.c.l.b16 %v1546
    %v2097 = vunpack.c.l.b16 %v1547
    %v2098 = vunpack.c.l.b16 %v1548
    %v2099 = vunpack.c.l.b16 %v1549
    %v2100 = vunpack.c.l.b16 %v1550
    %v2101 = vunpack.c.l.b16 %v1551
    %v2102 = vunpack.c.l.b16 %v1552
    %v2103 = vunpack.c.l.b16 %v1553
    %v2104 = vpack.c.b16 %v1849, %v1848
    %v2105 = vpack.c.b16 %v1851, %v1850
    %v2106 = vpack.c.b16 %v1853, %v1852
    %v2107 = vpack.c.b16 %v1855, %v1854
    %v2108 = vpack.c.b16 %v1857, %v1856
    %v2109 = vpack.c.b16 %v1859, %v1858
    %v2110 = vpack.c.b16 %v1861, %v1860
    %v2111 = vpack.c.b16 %v1863, %v1862
    %v2112 = vpack.c.b16 %v1865, %v1864
    %v2113 = vpack.c.b16 %v1867, %v1866
    %v2114 = vpack.c.b16 %v1869, %v1868
    %v2115 = vpack.c.b16 %v1871, %v1870
    %v2116 = vpack.c.b16 %v1873, %v1872
    %v2117 = vpack.c.b16 %v1875, %v1874
    %v2118 = vpack.c.b16 %v1877, %v1876
    %v2119 = vpack.c.b16 %v1879, %v1878
    %v2120 = vpack.c.b16 %v1881, %v1880
    %v2121 = vpack.c.b16 %v1883, %v1882
    %v2122 = vpack.c.b16 %v1885, %v1884
    %v2123 = vpack.c.b16 %v1887, %v1886
    %v2124 = vpack.c.b16 %v1889, %v1888
    %v2125 = vpack.c.b16 %v1891, %v1890
    %v2126 = vpack.c.b16 %v1893, %v1892
    %v2127 = vpack.c.b16 %v1895, %v1894
    %v2128 = vpack.c.b16 %v1897, %v1896
    %v2129 = vpack.c.b16 %v1899, %v1898
    %v2130 = vpack.c.b16 %v1901, %v1900
    %v2131 = vpack.c.b16 %v1903, %v1902
    %v2132 = vpack.c.b16 %v1905, %v1904
    %v2133 = vpack.c.b16 %v1907, %v1906
    %v2134 = vpack.c.b16 %v1909, %v1908
    %v2135 = vpack.c.b16 %v1911, %v1910
    %v2136 = vpack.c.b16 %v1913, %v1912
    %v2137 = vpack.c.b16 %v1915, %v1914
    %v2138 = vpack.c.b16 %v1917, %v1916
    %v2139 = vpack.c.b16 %v1919, %v1918
    %v2140 = vpack.c.b16 %v1921, %v1920
    %v2141 = vpack.c.b16 %v1923, %v1922
    %v2142 = vpack.c.b16 %v1925, %v1924
    %v2143 = vpack.c.b16 %v1927, %v1926
    %v2144 = vpack.c.b16 %v1929, %v1928
    %v2145 = vpack.c.b16 %v1931, %v1930
    %v2146 = vpack.c.b16 %v1933, %v1932
    %v2147 = vpack.c.b16 %v1935, %v1934
    %v2148 = vpack.c.b16 %v1937, %v1936
    %v2149 = vpack.c.b16 %v1939, %v1938
    %v2150 = vpack.c.b16 %v1941, %v1940
    %v2151 = vpack.c.b16 %v1943, %v1942
    %v2152 = vpack.c.b16 %v1945, %v1944
    %v2153 = vpack.c.b16 %v1947, %v1946
    %v2154 = vpack.c.b16 %v1949, %v1948
    %v2155 = vpack.c.b16 %v1951, %v1950
    %v2156 = vpack.c.b16 %v1953, %v1952
    %v2157 = vpack.c.b16 %v1955, %v1954
    %v2158 = vpack.c.b16 %v1957, %v1956
    %v2159 = vpack.c.b16 %v1959, %v1958
    %v2160 = vpack.c.b16 %v1961, %v1960
    %v2161 = vpack.c.b16 %v1963, %v1962
    %v2162 = vpack.c.b16 %v1965, %v1964
    %v2163 = vpack.c.b16 %v1967, %v1966
    %v2164 = vpack.c.b16 %v1969, %v1968
    %v2165 = vpack.c.b16 %v1971, %v1970
    %v2166 = vpack.c.b16 %v1973, %v1972
    %v2167 = vpack.c.b16 %v1975, %v1974
    %v2168 = vpack.c.b16 %v1977, %v1976
    %v2169 = vpack.c.b16 %v1979, %v1978
    %v2170 = vpack.c.b16 %v1981, %v1980
    %v2171 = vpack.c.b16 %v1983, %v1982
    %v2172 = vpack.c.b16 %v1985, %v1984
    %v2173 = vpack.c.b16 %v1987, %v1986
    %v2174 = vpack.c.b16 %v1989, %v1988
    %v2175 = vpack.c.b16 %v1991, %v1990
    %v2176 = vpack.c.b16 %v1993, %v1992
    %v2177 = vpack.c.b16 %v1995, %v1994
    %v2178 = vpack.c.b16 %v1997, %v1996
    %v2179 = vpack.c.b16 %v1999, %v1998
    %v2180 = vpack.c.b16 %v2001, %v2000
    %v2181 = vpack.c.b16 %v2003, %v2002
    %v2182 = vpack.c.b16 %v2005, %v2004
    %v2183 = vpack.c.b16 %v2007, %v2006
    %v2184 = vpack.c.b16 %v2009, %v2008
    %v2185 = vpack.c.b16 %v2011, %v2010
    %v2186 = vpack.c.b16 %v2013, %v2012
    %v2187 = vpack.c.b16 %v2015, %v2014
    %v2188 = vpack.c.b16 %v2017, %v2016
    %v2189 = vpack.c.b16 %v2019, %v2018
    %v2190 = vpack.c.b16 %v2021, %v2020
    %v2191 = vpack.c.b16 %v2023, %v2022
    %v2192 = vpack.c.b16 %v2025, %v2024
    %v2193 = vpack.c.b16 %v2027, %v2026
    %v2194 = vpack.c.b16 %v2029, %v2028
    %v2195 = vpack.c.b16 %v2031, %v2030
    %v2196 = vpack.c.b16 %v2033, %v2032
    %v2197 = vpack.c.b16 %v2035, %v2034
    %v2198 = vpack.c.b16 %v2037, %v2036
    %v2199 = vpack.c.b16 %v2039, %v2038
    %v2200 = vpack.c.b16 %v2041, %v2040
    %v2201 = vpack.c.b16 %v2043, %v2042
    %v2202 = vpack.c.b16 %v2045, %v2044
    %v2203 = vpack.c.b16 %v2047, %v2046
    %v2204 = vpack.c.b16 %v2049, %v2048
    %v2205 = vpack.c.b16 %v2051, %v2050
    %v2206 = vpack.c.b16 %v2053, %v2052
    %v2207 = vpack.c.b16 %v2055, %v2054
    %v2208 = vpack.c.b16 %v2057, %v2056
    %v2209 = vpack.c.b16 %v2059, %v2058
    %v2210 = vpack.c.b16 %v2061, %v2060
    %v2211 = vpack.c.b16 %v2063, %v2062
    %v2212 = vpack.c.b16 %v2065, %v2064
    %v2213 = vpack.c.b16 %v2067, %v2066
    %v2214 = vpack.c.b16 %v2069, %v2068
    %v2215 = vpack.c.b16 %v2071, %v2070
    %v2216 = vpack.c.b16 %v2073, %v2072
    %v2217 = vpack.c.b16 %v2075, %v2074
    %v2218 = vpack.c.b16 %v2077, %v2076
    %v2219 = vpack.c.b16 %v2079, %v2078
    %v2220 = vpack.c.b16 %v2081, %v2080
    %v2221 = vpack.c.b16 %v2083, %v2082
    %v2222 = vpack.c.b16 %v2085, %v2084
    %v2223 = vpack.c.b16 %v2087, %v2086
    %v2224 = vpack.c.b16 %v2089, %v2088
    %v2225 = vpack.c.b16 %v2091, %v2090
    %v2226 = vpack.c.b16 %v2093, %v2092
    %v2227 = vpack.c.b16 %v2095, %v2094
    %v2228 = vpack.c.b16 %v2097, %v2096
    %v2229 = vpack.c.b16 %v2099, %v2098
    %v2230 = vpack.c.b16 %v2101, %v2100
    %v2231 = vpack.c.b16 %v2103, %v2102
    %2360 = vmatpush.bf16.msra.mxu0 %v2111
    %2361 = vmatpush.bf16.msra.mxu0 %v2110
    %2362 = vmatpush.bf16.msra.mxu0 %v2109
    %2363 = vmatpush.bf16.msra.mxu0 %v2108
    %2364 = vmatpush.bf16.msra.mxu0 %v2107
    %2365 = vmatpush.bf16.msra.mxu0 %v2106
    %2366 = vmatpush.bf16.msra.mxu0 %v2105
    %2367 = vmatpush.bf16.msra.mxu0 %v2104
    %2368 = vmatmul.bf16.gmra.mxu0 %v1559
    %v2369 = vpop.f32.mrf.mxu0
    %v2370 = vadd.f32 %v1556, %v2369
    %v2371 = vpop.f32.mrf.mxu0
    %2372 = vdwg.mxu0
    %2373 = vmatpush.bf16.msra.mxu0 %v2119
    %2374 = vmatpush.bf16.msra.mxu0 %v2118
    %2375 = vmatpush.bf16.msra.mxu0 %v2117
    %2376 = vmatpush.bf16.msra.mxu0 %v2116
    %2377 = vmatpush.bf16.msra.mxu0 %v2115
    %2378 = vmatpush.bf16.msra.mxu0 %v2114
    %2379 = vmatpush.bf16.msra.mxu0 %v2113
    %2380 = vmatpush.bf16.msra.mxu0 %v2112
    %2381 = vmatmul.bf16.gmra.mxu0 %v1560
    %v2382 = vpop.f32.mrf.mxu0
    %v2383 = vadd.f32 %v2370, %v2382
    %v2384 = vpop.f32.mrf.mxu0
    %2385 = vdwg.mxu0
    %2386 = vmatpush.bf16.msra.mxu0 %v2127
    %2387 = vmatpush.bf16.msra.mxu0 %v2126
    %2388 = vmatpush.bf16.msra.mxu0 %v2125
    %2389 = vmatpush.bf16.msra.mxu0 %v2124
    %2390 = vmatpush.bf16.msra.mxu0 %v2123
    %2391 = vmatpush.bf16.msra.mxu0 %v2122
    %2392 = vmatpush.bf16.msra.mxu0 %v2121
    %2393 = vmatpush.bf16.msra.mxu0 %v2120
    %2394 = vmatmul.bf16.gmra.mxu0 %v1561
    %v2395 = vpop.f32.mrf.mxu0
    %v2396 = vadd.f32 %v2383, %v2395
    %v2397 = vpop.f32.mrf.mxu0
    %2398 = vdwg.mxu0
    %2399 = vmatpush.bf16.msra.mxu0 %v2135
    %2400 = vmatpush.bf16.msra.mxu0 %v2134
    %2401 = vmatpush.bf16.msra.mxu0 %v2133
    %2402 = vmatpush.bf16.msra.mxu0 %v2132
    %2403 = vmatpush.bf16.msra.mxu0 %v2131
    %2404 = vmatpush.bf16.msra.mxu0 %v2130
    %2405 = vmatpush.bf16.msra.mxu0 %v2129
    %2406 = vmatpush.bf16.msra.mxu0 %v2128
    %2407 = vmatmul.bf16.gmra.mxu0 %v1562
    %v2408 = vpop.f32.mrf.mxu0
    %v2409 = vadd.f32 %v2396, %v2408
    %v2410 = vpop.f32.mrf.mxu0
    %2411 = vdwg.mxu0
    %2412 = vmatpush.bf16.msra.mxu0 %v2143
    %2413 = vmatpush.bf16.msra.mxu0 %v2142
    %2414 = vmatpush.bf16.msra.mxu0 %v2141
    %2415 = vmatpush.bf16.msra.mxu0 %v2140
    %2416 = vmatpush.bf16.msra.mxu0 %v2139
    %2417 = vmatpush.bf16.msra.mxu0 %v2138
    %2418 = vmatpush.bf16.msra.mxu0 %v2137
    %2419 = vmatpush.bf16.msra.mxu0 %v2136
    %2420 = vmatmul.bf16.gmra.mxu0 %v1563
    %v2421 = vpop.f32.mrf.mxu0
    %v2422 = vadd.f32 %v2409, %v2421
    %v2423 = vpop.f32.mrf.mxu0
    %2424 = vdwg.mxu0
    %2425 = vmatpush.bf16.msra.mxu0 %v2151
    %2426 = vmatpush.bf16.msra.mxu0 %v2150
    %2427 = vmatpush.bf16.msra.mxu0 %v2149
    %2428 = vmatpush.bf16.msra.mxu0 %v2148
    %2429 = vmatpush.bf16.msra.mxu0 %v2147
    %2430 = vmatpush.bf16.msra.mxu0 %v2146
    %2431 = vmatpush.bf16.msra.mxu0 %v2145
    %2432 = vmatpush.bf16.msra.mxu0 %v2144
    %2433 = vmatmul.bf16.gmra.mxu0 %v1564
    %v2434 = vpop.f32.mrf.mxu0
    %v2435 = vadd.f32 %v2422, %v2434
    %v2436 = vpop.f32.mrf.mxu0
    %2437 = vdwg.mxu0
    %2438 = vmatpush.bf16.msra.mxu0 %v2159
    %2439 = vmatpush.bf16.msra.mxu0 %v2158
    %2440 = vmatpush.bf16.msra.mxu0 %v2157
    %2441 = vmatpush.bf16.msra.mxu0 %v2156
    %2442 = vmatpush.bf16.msra.mxu0 %v2155
    %2443 = vmatpush.bf16.msra.mxu0 %v2154
    %2444 = vmatpush.bf16.msra.mxu0 %v2153
    %2445 = vmatpush.bf16.msra.mxu0 %v2152
    %2446 = vmatmul.bf16.gmra.mxu0 %v1565
    %v2447 = vpop.f32.mrf.mxu0
    %v2448 = vadd.f32 %v2435, %v2447
    %v2449 = vpop.f32.mrf.mxu0
    %2450 = vdwg.mxu0
    %2451 = vmatpush.bf16.msra.mxu0 %v2167
    %2452 = vmatpush.bf16.msra.mxu0 %v2166
    %2453 = vmatpush.bf16.msra.mxu0 %v2165
    %2454 = vmatpush.bf16.msra.mxu0 %v2164
    %2455 = vmatpush.bf16.msra.mxu0 %v2163
    %2456 = vmatpush.bf16.msra.mxu0 %v2162
    %2457 = vmatpush.bf16.msra.mxu0 %v2161
    %2458 = vmatpush.bf16.msra.mxu0 %v2160
    %2459 = vmatmul.bf16.gmra.mxu0 %v1566
    %v2460 = vpop.f32.mrf.mxu0
    %v2461 = vadd.f32 %v2448, %v2460
    %v2462 = vpop.f32.mrf.mxu0
    %2463 = vdwg.mxu0
    %2464 = vmatpush.bf16.msra.mxu0 %v2175
    %2465 = vmatpush.bf16.msra.mxu0 %v2174
    %2466 = vmatpush.bf16.msra.mxu0 %v2173
    %2467 = vmatpush.bf16.msra.mxu0 %v2172
    %2468 = vmatpush.bf16.msra.mxu0 %v2171
    %2469 = vmatpush.bf16.msra.mxu0 %v2170
    %2470 = vmatpush.bf16.msra.mxu0 %v2169
    %2471 = vmatpush.bf16.msra.mxu0 %v2168
    %2472 = vmatmul.bf16.gmra.mxu0 %v1568
    %v2473 = vpop.f32.mrf.mxu0
    %v2474 = vadd.f32 %v2461, %v2473
    %v2475 = vpop.f32.mrf.mxu0
    %2476 = vdwg.mxu0
    %2477 = vmatpush.bf16.msra.mxu0 %v2183
    %2478 = vmatpush.bf16.msra.mxu0 %v2182
    %2479 = vmatpush.bf16.msra.mxu0 %v2181
    %2480 = vmatpush.bf16.msra.mxu0 %v2180
    %2481 = vmatpush.bf16.msra.mxu0 %v2179
    %2482 = vmatpush.bf16.msra.mxu0 %v2178
    %2483 = vmatpush.bf16.msra.mxu0 %v2177
    %2484 = vmatpush.bf16.msra.mxu0 %v2176
    %2485 = vmatmul.bf16.gmra.mxu0 %v1569
    %v2486 = vpop.f32.mrf.mxu0
    %v2487 = vadd.f32 %v2474, %v2486
    %v2488 = vpop.f32.mrf.mxu0
    %2489 = vdwg.mxu0
    %2490 = vmatpush.bf16.msra.mxu0 %v2191
    %2491 = vmatpush.bf16.msra.mxu0 %v2190
    %2492 = vmatpush.bf16.msra.mxu0 %v2189
    %2493 = vmatpush.bf16.msra.mxu0 %v2188
    %2494 = vmatpush.bf16.msra.mxu0 %v2187
    %2495 = vmatpush.bf16.msra.mxu0 %v2186
    %2496 = vmatpush.bf16.msra.mxu0 %v2185
    %2497 = vmatpush.bf16.msra.mxu0 %v2184
    %2498 = vmatmul.bf16.gmra.mxu0 %v1570
    %v2499 = vpop.f32.mrf.mxu0
    %v2500 = vadd.f32 %v2487, %v2499
    %v2501 = vpop.f32.mrf.mxu0
    %2502 = vdwg.mxu0
    %2503 = vmatpush.bf16.msra.mxu0 %v2199
    %2504 = vmatpush.bf16.msra.mxu0 %v2198
    %2505 = vmatpush.bf16.msra.mxu0 %v2197
    %2506 = vmatpush.bf16.msra.mxu0 %v2196
    %2507 = vmatpush.bf16.msra.mxu0 %v2195
    %2508 = vmatpush.bf16.msra.mxu0 %v2194
    %2509 = vmatpush.bf16.msra.mxu0 %v2193
    %2510 = vmatpush.bf16.msra.mxu0 %v2192
    %2511 = vmatmul.bf16.gmra.mxu0 %v1571
    %v2512 = vpop.f32.mrf.mxu0
    %v2513 = vadd.f32 %v2500, %v2512
    %v2514 = vpop.f32.mrf.mxu0
    %2515 = vdwg.mxu0
    %2516 = vmatpush.bf16.msra.mxu0 %v2207
    %2517 = vmatpush.bf16.msra.mxu0 %v2206
    %2518 = vmatpush.bf16.msra.mxu0 %v2205
    %2519 = vmatpush.bf16.msra.mxu0 %v2204
    %2520 = vmatpush.bf16.msra.mxu0 %v2203
    %2521 = vmatpush.bf16.msra.mxu0 %v2202
    %2522 = vmatpush.bf16.msra.mxu0 %v2201
    %2523 = vmatpush.bf16.msra.mxu0 %v2200
    %2524 = vmatmul.bf16.gmra.mxu0 %v1572
    %v2525 = vpop.f32.mrf.mxu0
    %v2526 = vadd.f32 %v2513, %v2525
    %v2527 = vpop.f32.mrf.mxu0
    %2528 = vdwg.mxu0
    %2529 = vmatpush.bf16.msra.mxu0 %v2215
    %2530 = vmatpush.bf16.msra.mxu0 %v2214
    %2531 = vmatpush.bf16.msra.mxu0 %v2213
    %2532 = vmatpush.bf16.msra.mxu0 %v2212
    %2533 = vmatpush.bf16.msra.mxu0 %v2211
    %2534 = vmatpush.bf16.msra.mxu0 %v2210
    %2535 = vmatpush.bf16.msra.mxu0 %v2209
    %2536 = vmatpush.bf16.msra.mxu0 %v2208
    %2537 = vmatmul.bf16.gmra.mxu0 %v1573
    %v2538 = vpop.f32.mrf.mxu0
    %v2539 = vadd.f32 %v2526, %v2538
    %v2540 = vpop.f32.mrf.mxu0
    %2541 = vdwg.mxu0
    %2542 = vmatpush.bf16.msra.mxu0 %v2223
    %2543 = vmatpush.bf16.msra.mxu0 %v2222
    %2544 = vmatpush.bf16.msra.mxu0 %v2221
    %2545 = vmatpush.bf16.msra.mxu0 %v2220
    %2546 = vmatpush.bf16.msra.mxu0 %v2219
    %2547 = vmatpush.bf16.msra.mxu0 %v2218
    %2548 = vmatpush.bf16.msra.mxu0 %v2217
    %2549 = vmatpush.bf16.msra.mxu0 %v2216
    %2550 = vmatmul.bf16.gmra.mxu0 %v1574
    %v2551 = vpop.f32.mrf.mxu0
    %v2552 = vadd.f32 %v2539, %v2551
    %v2553 = vpop.f32.mrf.mxu0
    %2554 = vdwg.mxu0
    %2555 = vmatpush.bf16.msra.mxu0 %v2231
    %2556 = vmatpush.bf16.msra.mxu0 %v2230
    %2557 = vmatpush.bf16.msra.mxu0 %v2229
    %2558 = vmatpush.bf16.msra.mxu0 %v2228
    %2559 = vmatpush.bf16.msra.mxu0 %v2227
    %2560 = vmatpush.bf16.msra.mxu0 %v2226
    %2561 = vmatpush.bf16.msra.mxu0 %v2225
    %2562 = vmatpush.bf16.msra.mxu0 %v2224
    %2563 = vmatmul.bf16.gmra.mxu0 %v1575
    %v2564 = vpop.f32.mrf.mxu0
    %v2565 = vadd.f32 %v2552, %v2564
    %v2566 = vpop.f32.mrf.mxu0
    %2567 = vdwg.mxu0
    %vm2568 = vcmask 123904
    %v2569 = vsel %vm2568, %v2565, -inf
    %2570 = vmax.xlane.f32.xlu0 %v2569
    %v2571 = vpop.xlane.xlu0 %2570
    %v2572 = vsub.f32 %v2565, %v2571
    %v2573 = vmul.f32 %v2572, 1.442695
    %v2574 = vpow.pop %v2573
    %v2575 = vsel %vm2568, %v2574, 0.0
    %2576 = vadd.xlane.f32.xlu0 %v2575
    %v2577 = vpop.xlane.xlu0 %2576
    %2578 = vst.msk [vmem:[#allocation2] sm:$0x3] %vm2568, %v1295
    %v2579 = vrcp.pop %v2577
    %v2580 = vmul.f32 %v2577, %v2579
    %v2581 = vsub.f32 1.0, %v2580
    %v2582 = vmul.f32 %v2579, %v2581
    %v2583 = vadd.f32 %v2579, %v2582
    %vm2584 = vweird.f32 %v2577
    %vm2585 = vweird.f32 %v2579
    %vm2586 = vmor %vm2584, %vm2585
    %v2587 = vsel %vm2586, %v2579, %v2583
    %v2588 = vand.u32 2147483647, %v2577
    %vm2589 = vcmp.eq.f32.partialorder %v2588, 8.507059e+37
    %v2590 = vand.u32 %v2577, 2147483648
    %v2591 = vor.u32 1.1754944e-38, %v2590
    %v2592 = vsel %vm2589, %v2591, %v2587
    %v2593 = vmul.f32 16.0, %v2592
    %v2594 = vmul.f32 %v2574, %v2593
    %v2595 = vadd.f32 %v2594, 1e-06
    %2596 = vst.msk [vmem:[#allocation4] sm:$0x3] %vm2568, %v2595
    // Predicated region
    $region22: #{svhn_encoder_forward.7} parent=1 // pred_check
      _
    $region23: #{svhn_encoder_forward.7} parent=1 // pred_check_branch
      %2598 = sbr.rel (0) target = $region25
    $region24: #{svhn_encoder_forward.7} parent=1 // pred_region
      %2600 = vsyncadd [#allocation3], 0
      %s2602 = sshll.u32 [#allocation2], 4
      %s2603 = int_to_ptr.vmem [resolvable:$true] %s2602
      %s2604 = sshll.u32 %s5, 4
      %s2605 = int_to_ptr.hbm [resolvable:$true] %s2604
      %2607 = dma.vmem_to_hbm [thread:$0]  %s2603, 32, %s2605, [#allocation3]
    $region25: #{svhn_encoder_forward.7} parent=1 // pred_fallthru
      _
    // Predicated region
    $region26: #{svhn_encoder_forward.7} parent=1 // pred_check
      _
    $region27: #{svhn_encoder_forward.7} parent=1 // pred_check_branch
      %2609 = sbr.rel (0) target = $region29
    $region28: #{svhn_encoder_forward.7} parent=1 // pred_region
      %2611 = vsyncadd [#allocation5], 0
      %s2613 = sshll.u32 [#allocation4], 4
      %s2614 = int_to_ptr.vmem [resolvable:$true] %s2613
      %s2615 = sshll.u32 %s6, 4
      %s2616 = int_to_ptr.hbm [resolvable:$true] %s2615
      %2618 = dma.vmem_to_hbm [thread:$0]  %s2614, 32, %s2616, [#allocation5]
    $region29: #{svhn_encoder_forward.7} parent=1 // pred_fallthru
      _
    // Predicated region
    $region30: #{svhn_encoder_forward.7} parent=1 // pred_check
      _
    $region31: #{svhn_encoder_forward.7} parent=1 // pred_check_branch
      %2620 = sbr.rel (0) target = $region33
    $region32: #{svhn_encoder_forward.7} parent=1 // pred_region
      %2622 = dma.done [#allocation3], 32
    $region33: #{svhn_encoder_forward.7} parent=1 // pred_fallthru
      _
    // Predicated region
    $region34: #{svhn_encoder_forward.7} parent=1 // pred_check
      _
    $region35: #{svhn_encoder_forward.7} parent=1 // pred_check_branch
      %2624 = sbr.rel (0) target = $region37
    $region36: #{svhn_encoder_forward.7} parent=1 // pred_region
      %2626 = dma.done [#allocation5], 32
    $region37: #{svhn_encoder_forward.7} parent=1 // pred_fallthru
      _
    %2627 = vsyncpa [#allocation3], 1
    %2628 = vsyncpa [#allocation5], 1

</llo_original>
